<compile_context>
chip_gen: v7x
topology: tpu7x:2x2x1
jax: 0.10.0
libtpu: 0.0.40
codegen_flags: <defaults>
</compile_context>

<pallas_src>
import jax
import jax.numpy as jnp
from jax import lax
from jax.experimental import pallas as pl
from jax.experimental.pallas import tpu as pltpu

# ----------------- small config consistent with the module -----------------
BATCH = 2
N_FEATS = 16
TIME = 16
HIDDEN = 32          # hidden_size
NUM_CLASSES = 10
NUM_LAYERS = 2
DENSE = 128
KSIZE = 10
STRIDE = 2
PAD = KSIZE // 2
LN_EPS = 1e-5

L_OUT = (TIME + 2 * PAD - KSIZE) // STRIDE + 1      # 9
ROWS = L_OUT * BATCH                                # 18 (time-major rows: t*B + b)
ROWS_PAD = ((ROWS + 7) // 8) * 8                    # 24 (sublane-aligned)
NCLS_PAD = 128                                      # lane-dense head output width


# ----------------- in-kernel math helpers (pure jnp, trace-time) -----------
def _erf(x):
    # Abramowitz & Stegun 7.1.26 rational approximation (|err| < 1.5e-7).
    a1, a2, a3, a4, a5 = (0.254829592, -0.284496736, 1.421413741,
                          -1.453152027, 1.061405429)
    p = 0.3275911
    s = jnp.where(x >= 0.0, 1.0, -1.0)
    ax = jnp.abs(x)
    t = 1.0 / (1.0 + p * ax)
    poly = ((((a5 * t + a4) * t + a3) * t + a2) * t + a1) * t
    return s * (1.0 - poly * jnp.exp(-ax * ax))


def _gelu(x):
    # exact (erf-based) GELU, matching torch.nn.functional.gelu default
    return 0.5 * x * (1.0 + _erf(x * 0.7071067811865476))


def _layernorm(x, gamma, beta):
    m = jnp.mean(x, axis=-1, keepdims=True)
    v = jnp.mean(jnp.square(x - m), axis=-1, keepdims=True)
    return (x - m) * lax.rsqrt(v + LN_EPS) * gamma + beta


def _sigmoid(x):
    return 1.0 / (1.0 + jnp.exp(-x))


# ----------------- single fused Pallas kernel -----------------
def fused_forward_kernel(
    # inputs
    cols_ref,                                         # (ROWS_PAD, C*K)
    conv_w_ref, conv_b_ref, cnn_g_ref, cnn_beta_ref,  # conv mat + CNN LayerNorm
    d1_w_ref, d1_b_ref, ln1_g_ref, ln1_b_ref,         # dense 1
    d2_w_ref, d2_b_ref, ln2_g_ref, ln2_b_ref,         # dense 2
    wih0_ref, whh0_ref, b0_ref,                       # LSTM layer 0
    wih1_ref, whh1_ref, b1_ref,                       # LSTM layer 1
    h0_ref, c0_ref,                                   # (NUM_LAYERS, B, H)
    ln3_g_ref, ln3_b_ref, fc_w_ref, fc_b_ref,         # head (fc padded to 128)
    # outputs
    logits_ref,                                       # (ROWS_PAD, NCLS_PAD)
    hT_ref, cT_ref,                                   # (NUM_LAYERS, B, H)
    # scratch
    hseq_ref,                                         # (ROWS_PAD, H)
):
    f32 = jnp.float32
    B, H, T = BATCH, HIDDEN, L_OUT

    # --- cnn: Conv1d (im2col matmul) + LayerNorm(n_feats) + GELU -------------
    y = jnp.dot(cols_ref[...], conv_w_ref[...],
                preferred_element_type=f32) + conv_b_ref[...]
    y = _gelu(_layernorm(y, cnn_g_ref[...], cnn_beta_ref[...]))      # (RP, 16)

    # --- dense stack ---------------------------------------------------------
    y = jnp.dot(y, d1_w_ref[...], preferred_element_type=f32) + d1_b_ref[...]
    y = _gelu(_layernorm(y, ln1_g_ref[...], ln1_b_ref[...]))
    y = jnp.dot(y, d2_w_ref[...], preferred_element_type=f32) + d2_b_ref[...]
    y = _gelu(_layernorm(y, ln2_g_ref[...], ln2_b_ref[...]))         # (RP, 128)

    # --- LSTM stack (time-major rows: t*B + b) -------------------------------
    hseq_ref[...] = jnp.zeros_like(hseq_ref)   # keep pad rows deterministic

    def run_layer(gx, whh_ref_l, h, c):
        # gx: (ROWS_PAD, 4H) hoisted input projection (+ combined bias).
        # Only h @ W_hh stays on the serial critical path; loop is unrolled.
        for t in range(T):
            gates = gx[t * B:(t + 1) * B, :] + jnp.dot(
                h, whh_ref_l[...], preferred_element_type=f32)       # (B, 4H)
            sg = _sigmoid(gates)          # full 128-lane width
            tg = jnp.tanh(gates)          # full 128-lane width
            i = sg[:, 0:H]
            f = sg[:, H:2 * H]
            g = tg[:, 2 * H:3 * H]
            o = sg[:, 3 * H:4 * H]
            c = f * c + i * g
            h = o * jnp.tanh(c)
            hseq_ref[t * B:(t + 1) * B, :] = h
        return h, c

    # layer 0 (input_size = 128)
    gx0 = jnp.dot(y, wih0_ref[...], preferred_element_type=f32) + b0_ref[...]
    h_f, c_f = run_layer(gx0, whh0_ref, h0_ref[0], c0_ref[0])
    hT_ref[0] = h_f
    cT_ref[0] = c_f

    # layer 1 (input_size = HIDDEN)
    seq0 = hseq_ref[...]                                             # (RP, H)
    gx1 = jnp.dot(seq0, wih1_ref[...], preferred_element_type=f32) + b1_ref[...]
    h_f, c_f = run_layer(gx1, whh1_ref, h0_ref[1], c0_ref[1])
    hT_ref[1] = h_f
    cT_ref[1] = c_f

    # --- head: layer_norm2 + GELU + final Linear (lane-padded to 128) --------
    out_seq = hseq_ref[...]                                          # (RP, H)
    z = _gelu(_layernorm(out_seq, ln3_g_ref[...], ln3_b_ref[...]))
    logits_ref[...] = jnp.dot(z, fc_w_ref[...],
                              preferred_element_type=f32) + fc_b_ref[...]


# ----------------- pallas_call wrapper -----------------
def _vmem():
    return pl.BlockSpec(memory_space=pltpu.MemorySpace.VMEM)


def fused_forward(cols, p, h0_all, c0_all):
    out_shape = (
        jax.ShapeDtypeStruct((ROWS_PAD, NCLS_PAD), jnp.float32),
        jax.ShapeDtypeStruct((NUM_LAYERS, BATCH, HIDDEN), jnp.float32),
        jax.ShapeDtypeStruct((NUM_LAYERS, BATCH, HIDDEN), jnp.float32),
    )
    return pl.pallas_call(
        fused_forward_kernel,
        out_shape=out_shape,
        in_specs=[_vmem() for _ in range(25)],
        out_specs=(_vmem(), _vmem(), _vmem()),
        scratch_shapes=[pltpu.VMEM((ROWS_PAD, HIDDEN), jnp.float32)],
    )(
        cols,
        p['conv_w_mat'], p['conv_b'], p['cnn_ln_g'], p['cnn_ln_b'],
        p['d1_w'], p['d1_b'], p['ln1_g'], p['ln1_b'],
        p['d2_w'], p['d2_b'], p['ln2_g'], p['ln2_b'],
        p['lstm'][0]['wih_t'], p['lstm'][0]['whh_t'], p['lstm'][0]['b'],
        p['lstm'][1]['wih_t'], p['lstm'][1]['whh_t'], p['lstm'][1]['b'],
        h0_all, c0_all,
        p['ln3_g'], p['ln3_b'], p['fc_w_pad'], p['fc_b_pad'],
    )


# ----------------- parameter init (deterministic, synthetic) -----------------
def init_params(key):
    keys = jax.random.split(key, 16)

    def nrm(k, shape, scale=0.1):
        return scale * jax.random.normal(k, shape, jnp.float32)

    params = {}
    # Conv1d(n_feats, n_feats, k=10): weight (C_out, C_in, K) -> matmul (C_in*K, C_out)
    conv_w = nrm(keys[0], (N_FEATS, N_FEATS, KSIZE))
    params['conv_w_mat'] = conv_w.reshape(N_FEATS, N_FEATS * KSIZE).T
    params['conv_b'] = nrm(keys[1], (1, N_FEATS))
    params['cnn_ln_g'] = jnp.ones((1, N_FEATS), jnp.float32)
    params['cnn_ln_b'] = jnp.zeros((1, N_FEATS), jnp.float32)
    # dense
    params['d1_w'] = nrm(keys[2], (N_FEATS, DENSE))
    params['d1_b'] = nrm(keys[3], (1, DENSE))
    params['ln1_g'] = jnp.ones((1, DENSE), jnp.float32)
    params['ln1_b'] = jnp.zeros((1, DENSE), jnp.float32)
    params['d2_w'] = nrm(keys[4], (DENSE, DENSE))
    params['d2_b'] = nrm(keys[5], (1, DENSE))
    params['ln2_g'] = jnp.ones((1, DENSE), jnp.float32)
    params['ln2_b'] = jnp.zeros((1, DENSE), jnp.float32)
    # LSTM layers (PyTorch weight shapes: W_ih (4H, in), W_hh (4H, H), biases (4H,))
    lstm = []
    for l in range(NUM_LAYERS):
        kin = DENSE if l == 0 else HIDDEN
        k1, k2, k3, k4 = jax.random.split(keys[6 + l], 4)
        wih = nrm(k1, (4 * HIDDEN, kin))
        whh = nrm(k2, (4 * HIDDEN, HIDDEN))
        bih = nrm(k3, (4 * HIDDEN,))
        bhh = nrm(k4, (4 * HIDDEN,))
        lstm.append({'wih_t': wih.T, 'whh_t': whh.T,
                     'b': (bih + bhh).reshape(1, 4 * HIDDEN)})
    params['lstm'] = lstm
    # head (classifier weights padded to 128 lanes; pad columns are zero)
    params['ln3_g'] = jnp.ones((1, HIDDEN), jnp.float32)
    params['ln3_b'] = jnp.zeros((1, HIDDEN), jnp.float32)
    fc_w = nrm(keys[10], (HIDDEN, NUM_CLASSES))
    fc_b = nrm(keys[11], (1, NUM_CLASSES))
    params['fc_w_pad'] = jnp.pad(fc_w, ((0, 0), (0, NCLS_PAD - NUM_CLASSES)))
    params['fc_b_pad'] = jnp.pad(fc_b, ((0, 0), (0, NCLS_PAD - NUM_CLASSES)))
    return params


# ----------------- forward pass (layout prep in JAX, all compute in Pallas) ---
def speech_recognition_forward(params, x, hidden):
    h0_all, c0_all = hidden
    B = x.shape[0]

    # x.squeeze(1): (B, 1, n_feats, T) -> (B, n_feats, T)
    x = x[:, 0]

    # im2col in TIME-MAJOR order (row = t*B + b, col = c*K + k), rows padded to
    # a sublane multiple; this single fused XLA gather replaces the old
    # stack + reshape + later transpose.
    x_pad = jnp.pad(x, ((0, 0), (0, 0), (PAD, PAD)))
    windows = jnp.stack(
        [x_pad[:, :, t * STRIDE:t * STRIDE + KSIZE] for t in range(L_OUT)],
        axis=0)                                        # (T, B, C, K)
    cols = windows.reshape(L_OUT * B, N_FEATS * KSIZE)
    cols = jnp.pad(cols, ((0, ROWS_PAD - L_OUT * B), (0, 0)))

    logits_pad, hT, cT = fused_forward(cols, params, h0_all, c0_all)

    logits = logits_pad[:L_OUT * B, :NUM_CLASSES].reshape(L_OUT, B, NUM_CLASSES)
    return logits, (hT, cT)


def init_hidden(batch_size):
    return (jnp.zeros((NUM_LAYERS, batch_size, HIDDEN), jnp.float32),
            jnp.zeros((NUM_LAYERS, batch_size, HIDDEN), jnp.float32))


if __name__ == "__main__":
    key = jax.random.PRNGKey(0)
    pkey, xkey = jax.random.split(key)
    params = init_params(pkey)

    x = jax.random.normal(xkey, (BATCH, 1, N_FEATS, TIME), jnp.float32)
    hidden = init_hidden(BATCH)

    fwd = jax.jit(speech_recognition_forward)
    logits, (hT, cT) = fwd(params, x, hidden)
    jax.block_until_ready((logits, hT, cT))

    assert logits.shape == (L_OUT, BATCH, NUM_CLASSES), logits.shape
    assert hT.shape == (NUM_LAYERS, BATCH, HIDDEN), hT.shape
    assert cT.shape == (NUM_LAYERS, BATCH, HIDDEN), cT.shape
    assert bool(jnp.all(jnp.isfinite(logits)))
    assert bool(jnp.all(jnp.isfinite(hT))) and bool(jnp.all(jnp.isfinite(cT)))
    print("KERNEL_OK")
</pallas_src>

<mosaic_0001>
module attributes {stable_mosaic.version = 11 : i64} {
  func.func @fused_forward_kernel(%arg0: memref<24x160xf32, #tpu.memory_space<vmem>>, %arg1: memref<160x16xf32, #tpu.memory_space<vmem>>, %arg2: memref<1x16xf32, #tpu.memory_space<vmem>>, %arg3: memref<1x16xf32, #tpu.memory_space<vmem>>, %arg4: memref<1x16xf32, #tpu.memory_space<vmem>>, %arg5: memref<16x128xf32, #tpu.memory_space<vmem>>, %arg6: memref<1x128xf32, #tpu.memory_space<vmem>>, %arg7: memref<1x128xf32, #tpu.memory_space<vmem>>, %arg8: memref<1x128xf32, #tpu.memory_space<vmem>>, %arg9: memref<128x128xf32, #tpu.memory_space<vmem>>, %arg10: memref<1x128xf32, #tpu.memory_space<vmem>>, %arg11: memref<1x128xf32, #tpu.memory_space<vmem>>, %arg12: memref<1x128xf32, #tpu.memory_space<vmem>>, %arg13: memref<128x128xf32, #tpu.memory_space<vmem>>, %arg14: memref<32x128xf32, #tpu.memory_space<vmem>>, %arg15: memref<1x128xf32, #tpu.memory_space<vmem>>, %arg16: memref<32x128xf32, #tpu.memory_space<vmem>>, %arg17: memref<32x128xf32, #tpu.memory_space<vmem>>, %arg18: memref<1x128xf32, #tpu.memory_space<vmem>>, %arg19: memref<2x2x32xf32, #tpu.memory_space<vmem>>, %arg20: memref<2x2x32xf32, #tpu.memory_space<vmem>>, %arg21: memref<1x32xf32, #tpu.memory_space<vmem>>, %arg22: memref<1x32xf32, #tpu.memory_space<vmem>>, %arg23: memref<32x128xf32, #tpu.memory_space<vmem>>, %arg24: memref<1x128xf32, #tpu.memory_space<vmem>>, %arg25: memref<24x128xf32, #tpu.memory_space<vmem>>, %arg26: memref<2x2x32xf32, #tpu.memory_space<vmem>>, %arg27: memref<2x2x32xf32, #tpu.memory_space<vmem>>, %arg28: memref<24x32xf32, #tpu.memory_space<vmem>>) attributes {dimension_semantics = [], scalar_prefetch = 0 : i64, scratch_operands = 1 : i64, tpu.core_type = #tpu.core_type<tc>} {
    %c0 = arith.constant 0 : index
    %c0_0 = arith.constant 0 : index
    %0 = vector.load %arg0[%c0, %c0_0] : memref<24x160xf32, #tpu.memory_space<vmem>>, vector<24x160xf32>
    %c0_1 = arith.constant 0 : index
    %c0_2 = arith.constant 0 : index
    %1 = vector.load %arg1[%c0_1, %c0_2] : memref<160x16xf32, #tpu.memory_space<vmem>>, vector<160x16xf32>
    %cst = arith.constant dense<0.000000e+00> : vector<24x16xf32>
    %2 = tpu.matmul %0, %1, %cst {dimension_numbers = #tpu.dot_dimension_numbers<[1], [0], [0], [1], [0, 0, 1, 1], [], []>} : vector<24x160xf32>, vector<160x16xf32>, vector<24x16xf32> -> vector<24x16xf32>
    %c0_3 = arith.constant 0 : index
    %c0_4 = arith.constant 0 : index
    %3 = vector.load %arg2[%c0_3, %c0_4] : memref<1x16xf32, #tpu.memory_space<vmem>>, vector<1x16xf32>
    %4 = vector.broadcast %3 : vector<1x16xf32> to vector<24x16xf32>
    %5 = arith.addf %2, %4 : vector<24x16xf32>
    %c0_5 = arith.constant 0 : index
    %c0_6 = arith.constant 0 : index
    %6 = vector.load %arg3[%c0_5, %c0_6] : memref<1x16xf32, #tpu.memory_space<vmem>>, vector<1x16xf32>
    %c0_7 = arith.constant 0 : index
    %c0_8 = arith.constant 0 : index
    %7 = vector.load %arg4[%c0_7, %c0_8] : memref<1x16xf32, #tpu.memory_space<vmem>>, vector<1x16xf32>
    %cst_9 = arith.constant dense<0.000000e+00> : vector<24xf32>
    %8 = vector.multi_reduction <add>, %5, %cst_9 [1] : vector<24x16xf32> to vector<24xf32>
    %9 = vector.shape_cast %8 : vector<24xf32> to vector<24x1xf32>
    %cst_10 = arith.constant 1.600000e+01 : f32
    %10 = vector.broadcast %cst_10 : f32 to vector<24x1xf32>
    %11 = arith.divf %9, %10 : vector<24x1xf32>
    %12 = vector.broadcast %11 : vector<24x1xf32> to vector<24x16xf32>
    %13 = arith.subf %5, %12 : vector<24x16xf32>
    %14 = arith.mulf %13, %13 : vector<24x16xf32>
    %cst_11 = arith.constant dense<0.000000e+00> : vector<24xf32>
    %15 = vector.multi_reduction <add>, %14, %cst_11 [1] : vector<24x16xf32> to vector<24xf32>
    %16 = vector.shape_cast %15 : vector<24xf32> to vector<24x1xf32>
    %cst_12 = arith.constant 1.600000e+01 : f32
    %17 = vector.broadcast %cst_12 : f32 to vector<24x1xf32>
    %18 = arith.divf %16, %17 : vector<24x1xf32>
    %19 = vector.broadcast %11 : vector<24x1xf32> to vector<24x16xf32>
    %20 = arith.subf %5, %19 : vector<24x16xf32>
    %cst_13 = arith.constant 9.99999974E-6 : f32
    %21 = vector.broadcast %cst_13 : f32 to vector<24x1xf32>
    %22 = arith.addf %18, %21 : vector<24x1xf32>
    %23 = math.rsqrt %22 : vector<24x1xf32>
    %24 = vector.broadcast %23 : vector<24x1xf32> to vector<24x16xf32>
    %25 = arith.mulf %20, %24 : vector<24x16xf32>
    %26 = vector.broadcast %6 : vector<1x16xf32> to vector<24x16xf32>
    %27 = arith.mulf %25, %26 : vector<24x16xf32>
    %28 = vector.broadcast %7 : vector<1x16xf32> to vector<24x16xf32>
    %29 = arith.addf %27, %28 : vector<24x16xf32>
    %cst_14 = arith.constant 5.000000e-01 : f32
    %30 = vector.broadcast %cst_14 : f32 to vector<24x16xf32>
    %31 = arith.mulf %30, %29 : vector<24x16xf32>
    %cst_15 = arith.constant 0.707106769 : f32
    %32 = vector.broadcast %cst_15 : f32 to vector<24x16xf32>
    %33 = arith.mulf %29, %32 : vector<24x16xf32>
    %cst_16 = arith.constant 0.000000e+00 : f32
    %34 = vector.broadcast %cst_16 : f32 to vector<24x16xf32>
    %35 = arith.cmpf oge, %33, %34 : vector<24x16xf32>
    %cst_17 = arith.constant 1.000000e+00 : f32
    %cst_18 = arith.constant -1.000000e+00 : f32
    %36 = vector.broadcast %cst_17 : f32 to vector<24x16xf32>
    %37 = vector.broadcast %cst_18 : f32 to vector<24x16xf32>
    %38 = arith.select %35, %36, %37 : vector<24x16xi1>, vector<24x16xf32>
    %39 = math.absf %33 : vector<24x16xf32>
    %cst_19 = arith.constant 0.327591091 : f32
    %40 = vector.broadcast %cst_19 : f32 to vector<24x16xf32>
    %41 = arith.mulf %40, %39 : vector<24x16xf32>
    %cst_20 = arith.constant 1.000000e+00 : f32
    %42 = vector.broadcast %cst_20 : f32 to vector<24x16xf32>
    %43 = arith.addf %42, %41 : vector<24x16xf32>
    %cst_21 = arith.constant 1.000000e+00 : f32
    %44 = vector.broadcast %cst_21 : f32 to vector<24x16xf32>
    %45 = arith.divf %44, %43 : vector<24x16xf32>
    %cst_22 = arith.constant 1.06140542 : f32
    %46 = vector.broadcast %cst_22 : f32 to vector<24x16xf32>
    %47 = arith.mulf %46, %45 : vector<24x16xf32>
    %cst_23 = arith.constant -1.45315206 : f32
    %48 = vector.broadcast %cst_23 : f32 to vector<24x16xf32>
    %49 = arith.addf %47, %48 : vector<24x16xf32>
    %50 = arith.mulf %49, %45 : vector<24x16xf32>
    %cst_24 = arith.constant 1.42141378 : f32
    %51 = vector.broadcast %cst_24 : f32 to vector<24x16xf32>
    %52 = arith.addf %50, %51 : vector<24x16xf32>
    %53 = arith.mulf %52, %45 : vector<24x16xf32>
    %cst_25 = arith.constant -0.284496725 : f32
    %54 = vector.broadcast %cst_25 : f32 to vector<24x16xf32>
    %55 = arith.addf %53, %54 : vector<24x16xf32>
    %56 = arith.mulf %55, %45 : vector<24x16xf32>
    %cst_26 = arith.constant 0.254829586 : f32
    %57 = vector.broadcast %cst_26 : f32 to vector<24x16xf32>
    %58 = arith.addf %56, %57 : vector<24x16xf32>
    %59 = arith.mulf %58, %45 : vector<24x16xf32>
    %cst_27 = arith.constant 0.000000e+00 : f32
    %60 = vector.broadcast %cst_27 : f32 to vector<24x16xf32>
    %61 = arith.subf %60, %39 : vector<24x16xf32>
    %62 = arith.mulf %61, %39 : vector<24x16xf32>
    %63 = math.exp %62 : vector<24x16xf32>
    %64 = arith.mulf %59, %63 : vector<24x16xf32>
    %cst_28 = arith.constant 1.000000e+00 : f32
    %65 = vector.broadcast %cst_28 : f32 to vector<24x16xf32>
    %66 = arith.subf %65, %64 : vector<24x16xf32>
    %67 = arith.mulf %38, %66 : vector<24x16xf32>
    %cst_29 = arith.constant 1.000000e+00 : f32
    %68 = vector.broadcast %cst_29 : f32 to vector<24x16xf32>
    %69 = arith.addf %68, %67 : vector<24x16xf32>
    %70 = arith.mulf %31, %69 : vector<24x16xf32>
    %c0_30 = arith.constant 0 : index
    %c0_31 = arith.constant 0 : index
    %71 = vector.load %arg5[%c0_30, %c0_31] : memref<16x128xf32, #tpu.memory_space<vmem>>, vector<16x128xf32>
    %cst_32 = arith.constant dense<0.000000e+00> : vector<24x128xf32>
    %72 = tpu.matmul %70, %71, %cst_32 {dimension_numbers = #tpu.dot_dimension_numbers<[1], [0], [0], [1], [0, 0, 1, 1], [], []>} : vector<24x16xf32>, vector<16x128xf32>, vector<24x128xf32> -> vector<24x128xf32>
    %c0_33 = arith.constant 0 : index
    %c0_34 = arith.constant 0 : index
    %73 = vector.load %arg6[%c0_33, %c0_34] : memref<1x128xf32, #tpu.memory_space<vmem>>, vector<1x128xf32>
    %74 = vector.broadcast %73 : vector<1x128xf32> to vector<24x128xf32>
    %75 = arith.addf %72, %74 : vector<24x128xf32>
    %c0_35 = arith.constant 0 : index
    %c0_36 = arith.constant 0 : index
    %76 = vector.load %arg7[%c0_35, %c0_36] : memref<1x128xf32, #tpu.memory_space<vmem>>, vector<1x128xf32>
    %c0_37 = arith.constant 0 : index
    %c0_38 = arith.constant 0 : index
    %77 = vector.load %arg8[%c0_37, %c0_38] : memref<1x128xf32, #tpu.memory_space<vmem>>, vector<1x128xf32>
    %cst_39 = arith.constant dense<0.000000e+00> : vector<24xf32>
    %78 = vector.multi_reduction <add>, %75, %cst_39 [1] : vector<24x128xf32> to vector<24xf32>
    %79 = vector.shape_cast %78 : vector<24xf32> to vector<24x1xf32>
    %cst_40 = arith.constant 1.280000e+02 : f32
    %80 = vector.broadcast %cst_40 : f32 to vector<24x1xf32>
    %81 = arith.divf %79, %80 : vector<24x1xf32>
    %82 = vector.broadcast %81 : vector<24x1xf32> to vector<24x128xf32>
    %83 = arith.subf %75, %82 : vector<24x128xf32>
    %84 = arith.mulf %83, %83 : vector<24x128xf32>
    %cst_41 = arith.constant dense<0.000000e+00> : vector<24xf32>
    %85 = vector.multi_reduction <add>, %84, %cst_41 [1] : vector<24x128xf32> to vector<24xf32>
    %86 = vector.shape_cast %85 : vector<24xf32> to vector<24x1xf32>
    %cst_42 = arith.constant 1.280000e+02 : f32
    %87 = vector.broadcast %cst_42 : f32 to vector<24x1xf32>
    %88 = arith.divf %86, %87 : vector<24x1xf32>
    %89 = vector.broadcast %81 : vector<24x1xf32> to vector<24x128xf32>
    %90 = arith.subf %75, %89 : vector<24x128xf32>
    %cst_43 = arith.constant 9.99999974E-6 : f32
    %91 = vector.broadcast %cst_43 : f32 to vector<24x1xf32>
    %92 = arith.addf %88, %91 : vector<24x1xf32>
    %93 = math.rsqrt %92 : vector<24x1xf32>
    %94 = vector.broadcast %93 : vector<24x1xf32> to vector<24x128xf32>
    %95 = arith.mulf %90, %94 : vector<24x128xf32>
    %96 = vector.broadcast %76 : vector<1x128xf32> to vector<24x128xf32>
    %97 = arith.mulf %95, %96 : vector<24x128xf32>
    %98 = vector.broadcast %77 : vector<1x128xf32> to vector<24x128xf32>
    %99 = arith.addf %97, %98 : vector<24x128xf32>
    %cst_44 = arith.constant 5.000000e-01 : f32
    %100 = vector.broadcast %cst_44 : f32 to vector<24x128xf32>
    %101 = arith.mulf %100, %99 : vector<24x128xf32>
    %cst_45 = arith.constant 0.707106769 : f32
    %102 = vector.broadcast %cst_45 : f32 to vector<24x128xf32>
    %103 = arith.mulf %99, %102 : vector<24x128xf32>
    %cst_46 = arith.constant 0.000000e+00 : f32
    %104 = vector.broadcast %cst_46 : f32 to vector<24x128xf32>
    %105 = arith.cmpf oge, %103, %104 : vector<24x128xf32>
    %cst_47 = arith.constant 1.000000e+00 : f32
    %cst_48 = arith.constant -1.000000e+00 : f32
    %106 = vector.broadcast %cst_47 : f32 to vector<24x128xf32>
    %107 = vector.broadcast %cst_48 : f32 to vector<24x128xf32>
    %108 = arith.select %105, %106, %107 : vector<24x128xi1>, vector<24x128xf32>
    %109 = math.absf %103 : vector<24x128xf32>
    %cst_49 = arith.constant 0.327591091 : f32
    %110 = vector.broadcast %cst_49 : f32 to vector<24x128xf32>
    %111 = arith.mulf %110, %109 : vector<24x128xf32>
    %cst_50 = arith.constant 1.000000e+00 : f32
    %112 = vector.broadcast %cst_50 : f32 to vector<24x128xf32>
    %113 = arith.addf %112, %111 : vector<24x128xf32>
    %cst_51 = arith.constant 1.000000e+00 : f32
    %114 = vector.broadcast %cst_51 : f32 to vector<24x128xf32>
    %115 = arith.divf %114, %113 : vector<24x128xf32>
    %cst_52 = arith.constant 1.06140542 : f32
    %116 = vector.broadcast %cst_52 : f32 to vector<24x128xf32>
    %117 = arith.mulf %116, %115 : vector<24x128xf32>
    %cst_53 = arith.constant -1.45315206 : f32
    %118 = vector.broadcast %cst_53 : f32 to vector<24x128xf32>
    %119 = arith.addf %117, %118 : vector<24x128xf32>
    %120 = arith.mulf %119, %115 : vector<24x128xf32>
    %cst_54 = arith.constant 1.42141378 : f32
    %121 = vector.broadcast %cst_54 : f32 to vector<24x128xf32>
    %122 = arith.addf %120, %121 : vector<24x128xf32>
    %123 = arith.mulf %122, %115 : vector<24x128xf32>
    %cst_55 = arith.constant -0.284496725 : f32
    %124 = vector.broadcast %cst_55 : f32 to vector<24x128xf32>
    %125 = arith.addf %123, %124 : vector<24x128xf32>
    %126 = arith.mulf %125, %115 : vector<24x128xf32>
    %cst_56 = arith.constant 0.254829586 : f32
    %127 = vector.broadcast %cst_56 : f32 to vector<24x128xf32>
    %128 = arith.addf %126, %127 : vector<24x128xf32>
    %129 = arith.mulf %128, %115 : vector<24x128xf32>
    %cst_57 = arith.constant 0.000000e+00 : f32
    %130 = vector.broadcast %cst_57 : f32 to vector<24x128xf32>
    %131 = arith.subf %130, %109 : vector<24x128xf32>
    %132 = arith.mulf %131, %109 : vector<24x128xf32>
    %133 = math.exp %132 : vector<24x128xf32>
    %134 = arith.mulf %129, %133 : vector<24x128xf32>
    %cst_58 = arith.constant 1.000000e+00 : f32
    %135 = vector.broadcast %cst_58 : f32 to vector<24x128xf32>
    %136 = arith.subf %135, %134 : vector<24x128xf32>
    %137 = arith.mulf %108, %136 : vector<24x128xf32>
    %cst_59 = arith.constant 1.000000e+00 : f32
    %138 = vector.broadcast %cst_59 : f32 to vector<24x128xf32>
    %139 = arith.addf %138, %137 : vector<24x128xf32>
    %140 = arith.mulf %101, %139 : vector<24x128xf32>
    %c0_60 = arith.constant 0 : index
    %c0_61 = arith.constant 0 : index
    %141 = vector.load %arg9[%c0_60, %c0_61] : memref<128x128xf32, #tpu.memory_space<vmem>>, vector<128x128xf32>
    %cst_62 = arith.constant dense<0.000000e+00> : vector<24x128xf32>
    %142 = tpu.matmul %140, %141, %cst_62 {dimension_numbers = #tpu.dot_dimension_numbers<[1], [0], [0], [1], [0, 0, 1, 1], [], []>} : vector<24x128xf32>, vector<128x128xf32>, vector<24x128xf32> -> vector<24x128xf32>
    %c0_63 = arith.constant 0 : index
    %c0_64 = arith.constant 0 : index
    %143 = vector.load %arg10[%c0_63, %c0_64] : memref<1x128xf32, #tpu.memory_space<vmem>>, vector<1x128xf32>
    %144 = vector.broadcast %143 : vector<1x128xf32> to vector<24x128xf32>
    %145 = arith.addf %142, %144 : vector<24x128xf32>
    %c0_65 = arith.constant 0 : index
    %c0_66 = arith.constant 0 : index
    %146 = vector.load %arg11[%c0_65, %c0_66] : memref<1x128xf32, #tpu.memory_space<vmem>>, vector<1x128xf32>
    %c0_67 = arith.constant 0 : index
    %c0_68 = arith.constant 0 : index
    %147 = vector.load %arg12[%c0_67, %c0_68] : memref<1x128xf32, #tpu.memory_space<vmem>>, vector<1x128xf32>
    %cst_69 = arith.constant dense<0.000000e+00> : vector<24xf32>
    %148 = vector.multi_reduction <add>, %145, %cst_69 [1] : vector<24x128xf32> to vector<24xf32>
    %149 = vector.shape_cast %148 : vector<24xf32> to vector<24x1xf32>
    %cst_70 = arith.constant 1.280000e+02 : f32
    %150 = vector.broadcast %cst_70 : f32 to vector<24x1xf32>
    %151 = arith.divf %149, %150 : vector<24x1xf32>
    %152 = vector.broadcast %151 : vector<24x1xf32> to vector<24x128xf32>
    %153 = arith.subf %145, %152 : vector<24x128xf32>
    %154 = arith.mulf %153, %153 : vector<24x128xf32>
    %cst_71 = arith.constant dense<0.000000e+00> : vector<24xf32>
    %155 = vector.multi_reduction <add>, %154, %cst_71 [1] : vector<24x128xf32> to vector<24xf32>
    %156 = vector.shape_cast %155 : vector<24xf32> to vector<24x1xf32>
    %cst_72 = arith.constant 1.280000e+02 : f32
    %157 = vector.broadcast %cst_72 : f32 to vector<24x1xf32>
    %158 = arith.divf %156, %157 : vector<24x1xf32>
    %159 = vector.broadcast %151 : vector<24x1xf32> to vector<24x128xf32>
    %160 = arith.subf %145, %159 : vector<24x128xf32>
    %cst_73 = arith.constant 9.99999974E-6 : f32
    %161 = vector.broadcast %cst_73 : f32 to vector<24x1xf32>
    %162 = arith.addf %158, %161 : vector<24x1xf32>
    %163 = math.rsqrt %162 : vector<24x1xf32>
    %164 = vector.broadcast %163 : vector<24x1xf32> to vector<24x128xf32>
    %165 = arith.mulf %160, %164 : vector<24x128xf32>
    %166 = vector.broadcast %146 : vector<1x128xf32> to vector<24x128xf32>
    %167 = arith.mulf %165, %166 : vector<24x128xf32>
    %168 = vector.broadcast %147 : vector<1x128xf32> to vector<24x128xf32>
    %169 = arith.addf %167, %168 : vector<24x128xf32>
    %cst_74 = arith.constant 5.000000e-01 : f32
    %170 = vector.broadcast %cst_74 : f32 to vector<24x128xf32>
    %171 = arith.mulf %170, %169 : vector<24x128xf32>
    %cst_75 = arith.constant 0.707106769 : f32
    %172 = vector.broadcast %cst_75 : f32 to vector<24x128xf32>
    %173 = arith.mulf %169, %172 : vector<24x128xf32>
    %cst_76 = arith.constant 0.000000e+00 : f32
    %174 = vector.broadcast %cst_76 : f32 to vector<24x128xf32>
    %175 = arith.cmpf oge, %173, %174 : vector<24x128xf32>
    %cst_77 = arith.constant 1.000000e+00 : f32
    %cst_78 = arith.constant -1.000000e+00 : f32
    %176 = vector.broadcast %cst_77 : f32 to vector<24x128xf32>
    %177 = vector.broadcast %cst_78 : f32 to vector<24x128xf32>
    %178 = arith.select %175, %176, %177 : vector<24x128xi1>, vector<24x128xf32>
    %179 = math.absf %173 : vector<24x128xf32>
    %cst_79 = arith.constant 0.327591091 : f32
    %180 = vector.broadcast %cst_79 : f32 to vector<24x128xf32>
    %181 = arith.mulf %180, %179 : vector<24x128xf32>
    %cst_80 = arith.constant 1.000000e+00 : f32
    %182 = vector.broadcast %cst_80 : f32 to vector<24x128xf32>
    %183 = arith.addf %182, %181 : vector<24x128xf32>
    %cst_81 = arith.constant 1.000000e+00 : f32
    %184 = vector.broadcast %cst_81 : f32 to vector<24x128xf32>
    %185 = arith.divf %184, %183 : vector<24x128xf32>
    %cst_82 = arith.constant 1.06140542 : f32
    %186 = vector.broadcast %cst_82 : f32 to vector<24x128xf32>
    %187 = arith.mulf %186, %185 : vector<24x128xf32>
    %cst_83 = arith.constant -1.45315206 : f32
    %188 = vector.broadcast %cst_83 : f32 to vector<24x128xf32>
    %189 = arith.addf %187, %188 : vector<24x128xf32>
    %190 = arith.mulf %189, %185 : vector<24x128xf32>
    %cst_84 = arith.constant 1.42141378 : f32
    %191 = vector.broadcast %cst_84 : f32 to vector<24x128xf32>
    %192 = arith.addf %190, %191 : vector<24x128xf32>
    %193 = arith.mulf %192, %185 : vector<24x128xf32>
    %cst_85 = arith.constant -0.284496725 : f32
    %194 = vector.broadcast %cst_85 : f32 to vector<24x128xf32>
    %195 = arith.addf %193, %194 : vector<24x128xf32>
    %196 = arith.mulf %195, %185 : vector<24x128xf32>
    %cst_86 = arith.constant 0.254829586 : f32
    %197 = vector.broadcast %cst_86 : f32 to vector<24x128xf32>
    %198 = arith.addf %196, %197 : vector<24x128xf32>
    %199 = arith.mulf %198, %185 : vector<24x128xf32>
    %cst_87 = arith.constant 0.000000e+00 : f32
    %200 = vector.broadcast %cst_87 : f32 to vector<24x128xf32>
    %201 = arith.subf %200, %179 : vector<24x128xf32>
    %202 = arith.mulf %201, %179 : vector<24x128xf32>
    %203 = math.exp %202 : vector<24x128xf32>
    %204 = arith.mulf %199, %203 : vector<24x128xf32>
    %cst_88 = arith.constant 1.000000e+00 : f32
    %205 = vector.broadcast %cst_88 : f32 to vector<24x128xf32>
    %206 = arith.subf %205, %204 : vector<24x128xf32>
    %207 = arith.mulf %178, %206 : vector<24x128xf32>
    %cst_89 = arith.constant 1.000000e+00 : f32
    %208 = vector.broadcast %cst_89 : f32 to vector<24x128xf32>
    %209 = arith.addf %208, %207 : vector<24x128xf32>
    %210 = arith.mulf %171, %209 : vector<24x128xf32>
    %cst_90 = arith.constant 0.000000e+00 : f32
    %211 = vector.broadcast %cst_90 : f32 to vector<24x32xf32>
    %c0_91 = arith.constant 0 : index
    %c0_92 = arith.constant 0 : index
    %212 = vector.load %arg28[%c0_91, %c0_92] : memref<24x32xf32, #tpu.memory_space<vmem>>, vector<24x32xf32>
    tpu.vector_store %arg28[%c0_91, %c0_92], %211 {strides = array<i32>} : memref<24x32xf32, #tpu.memory_space<vmem>>, vector<24x32xf32>,
    %c0_93 = arith.constant 0 : index
    %c0_94 = arith.constant 0 : index
    %213 = vector.load %arg13[%c0_93, %c0_94] : memref<128x128xf32, #tpu.memory_space<vmem>>, vector<128x128xf32>
    %cst_95 = arith.constant dense<0.000000e+00> : vector<24x128xf32>
    %214 = tpu.matmul %210, %213, %cst_95 {dimension_numbers = #tpu.dot_dimension_numbers<[1], [0], [0], [1], [0, 0, 1, 1], [], []>} : vector<24x128xf32>, vector<128x128xf32>, vector<24x128xf32> -> vector<24x128xf32>
    %c0_96 = arith.constant 0 : index
    %c0_97 = arith.constant 0 : index
    %215 = vector.load %arg15[%c0_96, %c0_97] : memref<1x128xf32, #tpu.memory_space<vmem>>, vector<1x128xf32>
    %216 = vector.broadcast %215 : vector<1x128xf32> to vector<24x128xf32>
    %217 = arith.addf %214, %216 : vector<24x128xf32>
    %c0_98 = arith.constant 0 : index
    %c0_99 = arith.constant 0 : index
    %c0_100 = arith.constant 0 : index
    %218 = vector.load %arg19[%c0_98, %c0_99, %c0_100] : memref<2x2x32xf32, #tpu.memory_space<vmem>>, vector<1x2x32xf32>
    %219 = vector.shape_cast %218 : vector<1x2x32xf32> to vector<2x32xf32>
    %c0_101 = arith.constant 0 : index
    %c0_102 = arith.constant 0 : index
    %c0_103 = arith.constant 0 : index
    %220 = vector.load %arg20[%c0_101, %c0_102, %c0_103] : memref<2x2x32xf32, #tpu.memory_space<vmem>>, vector<1x2x32xf32>
    %221 = vector.shape_cast %220 : vector<1x2x32xf32> to vector<2x32xf32>
    %222 = vector.extract_strided_slice %217 {offsets = [0, 0], sizes = [2, 128], strides = [1, 1]} : vector<24x128xf32> to vector<2x128xf32>
    %c0_104 = arith.constant 0 : index
    %c0_105 = arith.constant 0 : index
    %223 = vector.load %arg14[%c0_104, %c0_105] : memref<32x128xf32, #tpu.memory_space<vmem>>, vector<32x128xf32>
    %cst_106 = arith.constant dense<0.000000e+00> : vector<2x128xf32>
    %224 = tpu.matmul %219, %223, %cst_106 {dimension_numbers = #tpu.dot_dimension_numbers<[1], [0], [0], [1], [0, 0, 1, 1], [], []>} : vector<2x32xf32>, vector<32x128xf32>, vector<2x128xf32> -> vector<2x128xf32>
    %225 = arith.addf %222, %224 : vector<2x128xf32>
    %cst_107 = arith.constant 0.000000e+00 : f32
    %226 = vector.broadcast %cst_107 : f32 to vector<2x128xf32>
    %227 = arith.subf %226, %225 : vector<2x128xf32>
    %228 = math.exp %227 : vector<2x128xf32>
    %cst_108 = arith.constant 1.000000e+00 : f32
    %229 = vector.broadcast %cst_108 : f32 to vector<2x128xf32>
    %230 = arith.addf %229, %228 : vector<2x128xf32>
    %cst_109 = arith.constant 1.000000e+00 : f32
    %231 = vector.broadcast %cst_109 : f32 to vector<2x128xf32>
    %232 = arith.divf %231, %230 : vector<2x128xf32>
    %233 = math.tanh %225 : vector<2x128xf32>
    %234 = vector.extract_strided_slice %232 {offsets = [0, 0], sizes = [2, 32], strides = [1, 1]} : vector<2x128xf32> to vector<2x32xf32>
    %235 = vector.extract_strided_slice %232 {offsets = [0, 32], sizes = [2, 32], strides = [1, 1]} : vector<2x128xf32> to vector<2x32xf32>
    %236 = vector.extract_strided_slice %233 {offsets = [0, 64], sizes = [2, 32], strides = [1, 1]} : vector<2x128xf32> to vector<2x32xf32>
    %237 = vector.extract_strided_slice %232 {offsets = [0, 96], sizes = [2, 32], strides = [1, 1]} : vector<2x128xf32> to vector<2x32xf32>
    %238 = arith.mulf %235, %221 : vector<2x32xf32>
    %239 = arith.mulf %234, %236 : vector<2x32xf32>
    %240 = arith.addf %238, %239 : vector<2x32xf32>
    %241 = math.tanh %240 : vector<2x32xf32>
    %242 = arith.mulf %237, %241 : vector<2x32xf32>
    %c0_110 = arith.constant 0 : index
    %c0_111 = arith.constant 0 : index
    %243 = vector.load %arg28[%c0_110, %c0_111] : memref<24x32xf32, #tpu.memory_space<vmem>>, vector<2x32xf32>
    tpu.vector_store %arg28[%c0_110, %c0_111], %242 {strides = array<i32>} : memref<24x32xf32, #tpu.memory_space<vmem>>, vector<2x32xf32>,
    %244 = vector.extract_strided_slice %217 {offsets = [2, 0], sizes = [2, 128], strides = [1, 1]} : vector<24x128xf32> to vector<2x128xf32>
    %c0_112 = arith.constant 0 : index
    %c0_113 = arith.constant 0 : index
    %245 = vector.load %arg14[%c0_112, %c0_113] : memref<32x128xf32, #tpu.memory_space<vmem>>, vector<32x128xf32>
    %cst_114 = arith.constant dense<0.000000e+00> : vector<2x128xf32>
    %246 = tpu.matmul %242, %245, %cst_114 {dimension_numbers = #tpu.dot_dimension_numbers<[1], [0], [0], [1], [0, 0, 1, 1], [], []>} : vector<2x32xf32>, vector<32x128xf32>, vector<2x128xf32> -> vector<2x128xf32>
    %247 = arith.addf %244, %246 : vector<2x128xf32>
    %cst_115 = arith.constant 0.000000e+00 : f32
    %248 = vector.broadcast %cst_115 : f32 to vector<2x128xf32>
    %249 = arith.subf %248, %247 : vector<2x128xf32>
    %250 = math.exp %249 : vector<2x128xf32>
    %cst_116 = arith.constant 1.000000e+00 : f32
    %251 = vector.broadcast %cst_116 : f32 to vector<2x128xf32>
    %252 = arith.addf %251, %250 : vector<2x128xf32>
    %cst_117 = arith.constant 1.000000e+00 : f32
    %253 = vector.broadcast %cst_117 : f32 to vector<2x128xf32>
    %254 = arith.divf %253, %252 : vector<2x128xf32>
    %255 = math.tanh %247 : vector<2x128xf32>
    %256 = vector.extract_strided_slice %254 {offsets = [0, 0], sizes = [2, 32], strides = [1, 1]} : vector<2x128xf32> to vector<2x32xf32>
    %257 = vector.extract_strided_slice %254 {offsets = [0, 32], sizes = [2, 32], strides = [1, 1]} : vector<2x128xf32> to vector<2x32xf32>
    %258 = vector.extract_strided_slice %255 {offsets = [0, 64], sizes = [2, 32], strides = [1, 1]} : vector<2x128xf32> to vector<2x32xf32>
    %259 = vector.extract_strided_slice %254 {offsets = [0, 96], sizes = [2, 32], strides = [1, 1]} : vector<2x128xf32> to vector<2x32xf32>
    %260 = arith.mulf %257, %240 : vector<2x32xf32>
    %261 = arith.mulf %256, %258 : vector<2x32xf32>
    %262 = arith.addf %260, %261 : vector<2x32xf32>
    %263 = math.tanh %262 : vector<2x32xf32>
    %264 = arith.mulf %259, %263 : vector<2x32xf32>
    %c2 = arith.constant 2 : index
    %c0_118 = arith.constant 0 : index
    %265 = vector.load %arg28[%c2, %c0_118] : memref<24x32xf32, #tpu.memory_space<vmem>>, vector<2x32xf32>
    tpu.vector_store %arg28[%c2, %c0_118], %264 {strides = array<i32>} : memref<24x32xf32, #tpu.memory_space<vmem>>, vector<2x32xf32>,
    %266 = vector.extract_strided_slice %217 {offsets = [4, 0], sizes = [2, 128], strides = [1, 1]} : vector<24x128xf32> to vector<2x128xf32>
    %c0_119 = arith.constant 0 : index
    %c0_120 = arith.constant 0 : index
    %267 = vector.load %arg14[%c0_119, %c0_120] : memref<32x128xf32, #tpu.memory_space<vmem>>, vector<32x128xf32>
    %cst_121 = arith.constant dense<0.000000e+00> : vector<2x128xf32>
    %268 = tpu.matmul %264, %267, %cst_121 {dimension_numbers = #tpu.dot_dimension_numbers<[1], [0], [0], [1], [0, 0, 1, 1], [], []>} : vector<2x32xf32>, vector<32x128xf32>, vector<2x128xf32> -> vector<2x128xf32>
    %269 = arith.addf %266, %268 : vector<2x128xf32>
    %cst_122 = arith.constant 0.000000e+00 : f32
    %270 = vector.broadcast %cst_122 : f32 to vector<2x128xf32>
    %271 = arith.subf %270, %269 : vector<2x128xf32>
    %272 = math.exp %271 : vector<2x128xf32>
    %cst_123 = arith.constant 1.000000e+00 : f32
    %273 = vector.broadcast %cst_123 : f32 to vector<2x128xf32>
    %274 = arith.addf %273, %272 : vector<2x128xf32>
    %cst_124 = arith.constant 1.000000e+00 : f32
    %275 = vector.broadcast %cst_124 : f32 to vector<2x128xf32>
    %276 = arith.divf %275, %274 : vector<2x128xf32>
    %277 = math.tanh %269 : vector<2x128xf32>
    %278 = vector.extract_strided_slice %276 {offsets = [0, 0], sizes = [2, 32], strides = [1, 1]} : vector<2x128xf32> to vector<2x32xf32>
    %279 = vector.extract_strided_slice %276 {offsets = [0, 32], sizes = [2, 32], strides = [1, 1]} : vector<2x128xf32> to vector<2x32xf32>
    %280 = vector.extract_strided_slice %277 {offsets = [0, 64], sizes = [2, 32], strides = [1, 1]} : vector<2x128xf32> to vector<2x32xf32>
    %281 = vector.extract_strided_slice %276 {offsets = [0, 96], sizes = [2, 32], strides = [1, 1]} : vector<2x128xf32> to vector<2x32xf32>
    %282 = arith.mulf %279, %262 : vector<2x32xf32>
    %283 = arith.mulf %278, %280 : vector<2x32xf32>
    %284 = arith.addf %282, %283 : vector<2x32xf32>
    %285 = math.tanh %284 : vector<2x32xf32>
    %286 = arith.mulf %281, %285 : vector<2x32xf32>
    %c4 = arith.constant 4 : index
    %c0_125 = arith.constant 0 : index
    %287 = vector.load %arg28[%c4, %c0_125] : memref<24x32xf32, #tpu.memory_space<vmem>>, vector<2x32xf32>
    tpu.vector_store %arg28[%c4, %c0_125], %286 {strides = array<i32>} : memref<24x32xf32, #tpu.memory_space<vmem>>, vector<2x32xf32>,
    %288 = vector.extract_strided_slice %217 {offsets = [6, 0], sizes = [2, 128], strides = [1, 1]} : vector<24x128xf32> to vector<2x128xf32>
    %c0_126 = arith.constant 0 : index
    %c0_127 = arith.constant 0 : index
    %289 = vector.load %arg14[%c0_126, %c0_127] : memref<32x128xf32, #tpu.memory_space<vmem>>, vector<32x128xf32>
    %cst_128 = arith.constant dense<0.000000e+00> : vector<2x128xf32>
    %290 = tpu.matmul %286, %289, %cst_128 {dimension_numbers = #tpu.dot_dimension_numbers<[1], [0], [0], [1], [0, 0, 1, 1], [], []>} : vector<2x32xf32>, vector<32x128xf32>, vector<2x128xf32> -> vector<2x128xf32>
    %291 = arith.addf %288, %290 : vector<2x128xf32>
    %cst_129 = arith.constant 0.000000e+00 : f32
    %292 = vector.broadcast %cst_129 : f32 to vector<2x128xf32>
    %293 = arith.subf %292, %291 : vector<2x128xf32>
    %294 = math.exp %293 : vector<2x128xf32>
    %cst_130 = arith.constant 1.000000e+00 : f32
    %295 = vector.broadcast %cst_130 : f32 to vector<2x128xf32>
    %296 = arith.addf %295, %294 : vector<2x128xf32>
    %cst_131 = arith.constant 1.000000e+00 : f32
    %297 = vector.broadcast %cst_131 : f32 to vector<2x128xf32>
    %298 = arith.divf %297, %296 : vector<2x128xf32>
    %299 = math.tanh %291 : vector<2x128xf32>
    %300 = vector.extract_strided_slice %298 {offsets = [0, 0], sizes = [2, 32], strides = [1, 1]} : vector<2x128xf32> to vector<2x32xf32>
    %301 = vector.extract_strided_slice %298 {offsets = [0, 32], sizes = [2, 32], strides = [1, 1]} : vector<2x128xf32> to vector<2x32xf32>
    %302 = vector.extract_strided_slice %299 {offsets = [0, 64], sizes = [2, 32], strides = [1, 1]} : vector<2x128xf32> to vector<2x32xf32>
    %303 = vector.extract_strided_slice %298 {offsets = [0, 96], sizes = [2, 32], strides = [1, 1]} : vector<2x128xf32> to vector<2x32xf32>
    %304 = arith.mulf %301, %284 : vector<2x32xf32>
    %305 = arith.mulf %300, %302 : vector<2x32xf32>
    %306 = arith.addf %304, %305 : vector<2x32xf32>
    %307 = math.tanh %306 : vector<2x32xf32>
    %308 = arith.mulf %303, %307 : vector<2x32xf32>
    %c6 = arith.constant 6 : index
    %c0_132 = arith.constant 0 : index
    %309 = vector.load %arg28[%c6, %c0_132] : memref<24x32xf32, #tpu.memory_space<vmem>>, vector<2x32xf32>
    tpu.vector_store %arg28[%c6, %c0_132], %308 {strides = array<i32>} : memref<24x32xf32, #tpu.memory_space<vmem>>, vector<2x32xf32>,
    %310 = vector.extract_strided_slice %217 {offsets = [8, 0], sizes = [2, 128], strides = [1, 1]} : vector<24x128xf32> to vector<2x128xf32>
    %c0_133 = arith.constant 0 : index
    %c0_134 = arith.constant 0 : index
    %311 = vector.load %arg14[%c0_133, %c0_134] : memref<32x128xf32, #tpu.memory_space<vmem>>, vector<32x128xf32>
    %cst_135 = arith.constant dense<0.000000e+00> : vector<2x128xf32>
    %312 = tpu.matmul %308, %311, %cst_135 {dimension_numbers = #tpu.dot_dimension_numbers<[1], [0], [0], [1], [0, 0, 1, 1], [], []>} : vector<2x32xf32>, vector<32x128xf32>, vector<2x128xf32> -> vector<2x128xf32>
    %313 = arith.addf %310, %312 : vector<2x128xf32>
    %cst_136 = arith.constant 0.000000e+00 : f32
    %314 = vector.broadcast %cst_136 : f32 to vector<2x128xf32>
    %315 = arith.subf %314, %313 : vector<2x128xf32>
    %316 = math.exp %315 : vector<2x128xf32>
    %cst_137 = arith.constant 1.000000e+00 : f32
    %317 = vector.broadcast %cst_137 : f32 to vector<2x128xf32>
    %318 = arith.addf %317, %316 : vector<2x128xf32>
    %cst_138 = arith.constant 1.000000e+00 : f32
    %319 = vector.broadcast %cst_138 : f32 to vector<2x128xf32>
    %320 = arith.divf %319, %318 : vector<2x128xf32>
    %321 = math.tanh %313 : vector<2x128xf32>
    %322 = vector.extract_strided_slice %320 {offsets = [0, 0], sizes = [2, 32], strides = [1, 1]} : vector<2x128xf32> to vector<2x32xf32>
    %323 = vector.extract_strided_slice %320 {offsets = [0, 32], sizes = [2, 32], strides = [1, 1]} : vector<2x128xf32> to vector<2x32xf32>
    %324 = vector.extract_strided_slice %321 {offsets = [0, 64], sizes = [2, 32], strides = [1, 1]} : vector<2x128xf32> to vector<2x32xf32>
    %325 = vector.extract_strided_slice %320 {offsets = [0, 96], sizes = [2, 32], strides = [1, 1]} : vector<2x128xf32> to vector<2x32xf32>
    %326 = arith.mulf %323, %306 : vector<2x32xf32>
    %327 = arith.mulf %322, %324 : vector<2x32xf32>
    %328 = arith.addf %326, %327 : vector<2x32xf32>
    %329 = math.tanh %328 : vector<2x32xf32>
    %330 = arith.mulf %325, %329 : vector<2x32xf32>
    %c8 = arith.constant 8 : index
    %c0_139 = arith.constant 0 : index
    %331 = vector.load %arg28[%c8, %c0_139] : memref<24x32xf32, #tpu.memory_space<vmem>>, vector<2x32xf32>
    tpu.vector_store %arg28[%c8, %c0_139], %330 {strides = array<i32>} : memref<24x32xf32, #tpu.memory_space<vmem>>, vector<2x32xf32>,
    %332 = vector.extract_strided_slice %217 {offsets = [10, 0], sizes = [2, 128], strides = [1, 1]} : vector<24x128xf32> to vector<2x128xf32>
    %c0_140 = arith.constant 0 : index
    %c0_141 = arith.constant 0 : index
    %333 = vector.load %arg14[%c0_140, %c0_141] : memref<32x128xf32, #tpu.memory_space<vmem>>, vector<32x128xf32>
    %cst_142 = arith.constant dense<0.000000e+00> : vector<2x128xf32>
    %334 = tpu.matmul %330, %333, %cst_142 {dimension_numbers = #tpu.dot_dimension_numbers<[1], [0], [0], [1], [0, 0, 1, 1], [], []>} : vector<2x32xf32>, vector<32x128xf32>, vector<2x128xf32> -> vector<2x128xf32>
    %335 = arith.addf %332, %334 : vector<2x128xf32>
    %cst_143 = arith.constant 0.000000e+00 : f32
    %336 = vector.broadcast %cst_143 : f32 to vector<2x128xf32>
    %337 = arith.subf %336, %335 : vector<2x128xf32>
    %338 = math.exp %337 : vector<2x128xf32>
    %cst_144 = arith.constant 1.000000e+00 : f32
    %339 = vector.broadcast %cst_144 : f32 to vector<2x128xf32>
    %340 = arith.addf %339, %338 : vector<2x128xf32>
    %cst_145 = arith.constant 1.000000e+00 : f32
    %341 = vector.broadcast %cst_145 : f32 to vector<2x128xf32>
    %342 = arith.divf %341, %340 : vector<2x128xf32>
    %343 = math.tanh %335 : vector<2x128xf32>
    %344 = vector.extract_strided_slice %342 {offsets = [0, 0], sizes = [2, 32], strides = [1, 1]} : vector<2x128xf32> to vector<2x32xf32>
    %345 = vector.extract_strided_slice %342 {offsets = [0, 32], sizes = [2, 32], strides = [1, 1]} : vector<2x128xf32> to vector<2x32xf32>
    %346 = vector.extract_strided_slice %343 {offsets = [0, 64], sizes = [2, 32], strides = [1, 1]} : vector<2x128xf32> to vector<2x32xf32>
    %347 = vector.extract_strided_slice %342 {offsets = [0, 96], sizes = [2, 32], strides = [1, 1]} : vector<2x128xf32> to vector<2x32xf32>
    %348 = arith.mulf %345, %328 : vector<2x32xf32>
    %349 = arith.mulf %344, %346 : vector<2x32xf32>
    %350 = arith.addf %348, %349 : vector<2x32xf32>
    %351 = math.tanh %350 : vector<2x32xf32>
    %352 = arith.mulf %347, %351 : vector<2x32xf32>
    %c10 = arith.constant 10 : index
    %c0_146 = arith.constant 0 : index
    %353 = vector.load %arg28[%c10, %c0_146] : memref<24x32xf32, #tpu.memory_space<vmem>>, vector<2x32xf32>
    tpu.vector_store %arg28[%c10, %c0_146], %352 {strides = array<i32>} : memref<24x32xf32, #tpu.memory_space<vmem>>, vector<2x32xf32>,
    %354 = vector.extract_strided_slice %217 {offsets = [12, 0], sizes = [2, 128], strides = [1, 1]} : vector<24x128xf32> to vector<2x128xf32>
    %c0_147 = arith.constant 0 : index
    %c0_148 = arith.constant 0 : index
    %355 = vector.load %arg14[%c0_147, %c0_148] : memref<32x128xf32, #tpu.memory_space<vmem>>, vector<32x128xf32>
    %cst_149 = arith.constant dense<0.000000e+00> : vector<2x128xf32>
    %356 = tpu.matmul %352, %355, %cst_149 {dimension_numbers = #tpu.dot_dimension_numbers<[1], [0], [0], [1], [0, 0, 1, 1], [], []>} : vector<2x32xf32>, vector<32x128xf32>, vector<2x128xf32> -> vector<2x128xf32>
    %357 = arith.addf %354, %356 : vector<2x128xf32>
    %cst_150 = arith.constant 0.000000e+00 : f32
    %358 = vector.broadcast %cst_150 : f32 to vector<2x128xf32>
    %359 = arith.subf %358, %357 : vector<2x128xf32>
    %360 = math.exp %359 : vector<2x128xf32>
    %cst_151 = arith.constant 1.000000e+00 : f32
    %361 = vector.broadcast %cst_151 : f32 to vector<2x128xf32>
    %362 = arith.addf %361, %360 : vector<2x128xf32>
    %cst_152 = arith.constant 1.000000e+00 : f32
    %363 = vector.broadcast %cst_152 : f32 to vector<2x128xf32>
    %364 = arith.divf %363, %362 : vector<2x128xf32>
    %365 = math.tanh %357 : vector<2x128xf32>
    %366 = vector.extract_strided_slice %364 {offsets = [0, 0], sizes = [2, 32], strides = [1, 1]} : vector<2x128xf32> to vector<2x32xf32>
    %367 = vector.extract_strided_slice %364 {offsets = [0, 32], sizes = [2, 32], strides = [1, 1]} : vector<2x128xf32> to vector<2x32xf32>
    %368 = vector.extract_strided_slice %365 {offsets = [0, 64], sizes = [2, 32], strides = [1, 1]} : vector<2x128xf32> to vector<2x32xf32>
    %369 = vector.extract_strided_slice %364 {offsets = [0, 96], sizes = [2, 32], strides = [1, 1]} : vector<2x128xf32> to vector<2x32xf32>
    %370 = arith.mulf %367, %350 : vector<2x32xf32>
    %371 = arith.mulf %366, %368 : vector<2x32xf32>
    %372 = arith.addf %370, %371 : vector<2x32xf32>
    %373 = math.tanh %372 : vector<2x32xf32>
    %374 = arith.mulf %369, %373 : vector<2x32xf32>
    %c12 = arith.constant 12 : index
    %c0_153 = arith.constant 0 : index
    %375 = vector.load %arg28[%c12, %c0_153] : memref<24x32xf32, #tpu.memory_space<vmem>>, vector<2x32xf32>
    tpu.vector_store %arg28[%c12, %c0_153], %374 {strides = array<i32>} : memref<24x32xf32, #tpu.memory_space<vmem>>, vector<2x32xf32>,
    %376 = vector.extract_strided_slice %217 {offsets = [14, 0], sizes = [2, 128], strides = [1, 1]} : vector<24x128xf32> to vector<2x128xf32>
    %c0_154 = arith.constant 0 : index
    %c0_155 = arith.constant 0 : index
    %377 = vector.load %arg14[%c0_154, %c0_155] : memref<32x128xf32, #tpu.memory_space<vmem>>, vector<32x128xf32>
    %cst_156 = arith.constant dense<0.000000e+00> : vector<2x128xf32>
    %378 = tpu.matmul %374, %377, %cst_156 {dimension_numbers = #tpu.dot_dimension_numbers<[1], [0], [0], [1], [0, 0, 1, 1], [], []>} : vector<2x32xf32>, vector<32x128xf32>, vector<2x128xf32> -> vector<2x128xf32>
    %379 = arith.addf %376, %378 : vector<2x128xf32>
    %cst_157 = arith.constant 0.000000e+00 : f32
    %380 = vector.broadcast %cst_157 : f32 to vector<2x128xf32>
    %381 = arith.subf %380, %379 : vector<2x128xf32>
    %382 = math.exp %381 : vector<2x128xf32>
    %cst_158 = arith.constant 1.000000e+00 : f32
    %383 = vector.broadcast %cst_158 : f32 to vector<2x128xf32>
    %384 = arith.addf %383, %382 : vector<2x128xf32>
    %cst_159 = arith.constant 1.000000e+00 : f32
    %385 = vector.broadcast %cst_159 : f32 to vector<2x128xf32>
    %386 = arith.divf %385, %384 : vector<2x128xf32>
    %387 = math.tanh %379 : vector<2x128xf32>
    %388 = vector.extract_strided_slice %386 {offsets = [0, 0], sizes = [2, 32], strides = [1, 1]} : vector<2x128xf32> to vector<2x32xf32>
    %389 = vector.extract_strided_slice %386 {offsets = [0, 32], sizes = [2, 32], strides = [1, 1]} : vector<2x128xf32> to vector<2x32xf32>
    %390 = vector.extract_strided_slice %387 {offsets = [0, 64], sizes = [2, 32], strides = [1, 1]} : vector<2x128xf32> to vector<2x32xf32>
    %391 = vector.extract_strided_slice %386 {offsets = [0, 96], sizes = [2, 32], strides = [1, 1]} : vector<2x128xf32> to vector<2x32xf32>
    %392 = arith.mulf %389, %372 : vector<2x32xf32>
    %393 = arith.mulf %388, %390 : vector<2x32xf32>
    %394 = arith.addf %392, %393 : vector<2x32xf32>
    %395 = math.tanh %394 : vector<2x32xf32>
    %396 = arith.mulf %391, %395 : vector<2x32xf32>
    %c14 = arith.constant 14 : index
    %c0_160 = arith.constant 0 : index
    %397 = vector.load %arg28[%c14, %c0_160] : memref<24x32xf32, #tpu.memory_space<vmem>>, vector<2x32xf32>
    tpu.vector_store %arg28[%c14, %c0_160], %396 {strides = array<i32>} : memref<24x32xf32, #tpu.memory_space<vmem>>, vector<2x32xf32>,
    %398 = vector.extract_strided_slice %217 {offsets = [16, 0], sizes = [2, 128], strides = [1, 1]} : vector<24x128xf32> to vector<2x128xf32>
    %c0_161 = arith.constant 0 : index
    %c0_162 = arith.constant 0 : index
    %399 = vector.load %arg14[%c0_161, %c0_162] : memref<32x128xf32, #tpu.memory_space<vmem>>, vector<32x128xf32>
    %cst_163 = arith.constant dense<0.000000e+00> : vector<2x128xf32>
    %400 = tpu.matmul %396, %399, %cst_163 {dimension_numbers = #tpu.dot_dimension_numbers<[1], [0], [0], [1], [0, 0, 1, 1], [], []>} : vector<2x32xf32>, vector<32x128xf32>, vector<2x128xf32> -> vector<2x128xf32>
    %401 = arith.addf %398, %400 : vector<2x128xf32>
    %cst_164 = arith.constant 0.000000e+00 : f32
    %402 = vector.broadcast %cst_164 : f32 to vector<2x128xf32>
    %403 = arith.subf %402, %401 : vector<2x128xf32>
    %404 = math.exp %403 : vector<2x128xf32>
    %cst_165 = arith.constant 1.000000e+00 : f32
    %405 = vector.broadcast %cst_165 : f32 to vector<2x128xf32>
    %406 = arith.addf %405, %404 : vector<2x128xf32>
    %cst_166 = arith.constant 1.000000e+00 : f32
    %407 = vector.broadcast %cst_166 : f32 to vector<2x128xf32>
    %408 = arith.divf %407, %406 : vector<2x128xf32>
    %409 = math.tanh %401 : vector<2x128xf32>
    %410 = vector.extract_strided_slice %408 {offsets = [0, 0], sizes = [2, 32], strides = [1, 1]} : vector<2x128xf32> to vector<2x32xf32>
    %411 = vector.extract_strided_slice %408 {offsets = [0, 32], sizes = [2, 32], strides = [1, 1]} : vector<2x128xf32> to vector<2x32xf32>
    %412 = vector.extract_strided_slice %409 {offsets = [0, 64], sizes = [2, 32], strides = [1, 1]} : vector<2x128xf32> to vector<2x32xf32>
    %413 = vector.extract_strided_slice %408 {offsets = [0, 96], sizes = [2, 32], strides = [1, 1]} : vector<2x128xf32> to vector<2x32xf32>
    %414 = arith.mulf %411, %394 : vector<2x32xf32>
    %415 = arith.mulf %410, %412 : vector<2x32xf32>
    %416 = arith.addf %414, %415 : vector<2x32xf32>
    %417 = math.tanh %416 : vector<2x32xf32>
    %418 = arith.mulf %413, %417 : vector<2x32xf32>
    %c16 = arith.constant 16 : index
    %c0_167 = arith.constant 0 : index
    %419 = vector.load %arg28[%c16, %c0_167] : memref<24x32xf32, #tpu.memory_space<vmem>>, vector<2x32xf32>
    tpu.vector_store %arg28[%c16, %c0_167], %418 {strides = array<i32>} : memref<24x32xf32, #tpu.memory_space<vmem>>, vector<2x32xf32>,
    %c0_168 = arith.constant 0 : index
    %c0_169 = arith.constant 0 : index
    %c0_170 = arith.constant 0 : index
    %420 = vector.load %arg26[%c0_168, %c0_169, %c0_170] : memref<2x2x32xf32, #tpu.memory_space<vmem>>, vector<1x2x32xf32>
    %421 = vector.shape_cast %420 : vector<1x2x32xf32> to vector<2x32xf32>
    %422 = vector.shape_cast %418 : vector<2x32xf32> to vector<1x2x32xf32>
    tpu.vector_store %arg26[%c0_168, %c0_169, %c0_170], %422 {strides = array<i32>} : memref<2x2x32xf32, #tpu.memory_space<vmem>>, vector<1x2x32xf32>,
    %c0_171 = arith.constant 0 : index
    %c0_172 = arith.constant 0 : index
    %c0_173 = arith.constant 0 : index
    %423 = vector.load %arg27[%c0_171, %c0_172, %c0_173] : memref<2x2x32xf32, #tpu.memory_space<vmem>>, vector<1x2x32xf32>
    %424 = vector.shape_cast %423 : vector<1x2x32xf32> to vector<2x32xf32>
    %425 = vector.shape_cast %416 : vector<2x32xf32> to vector<1x2x32xf32>
    tpu.vector_store %arg27[%c0_171, %c0_172, %c0_173], %425 {strides = array<i32>} : memref<2x2x32xf32, #tpu.memory_space<vmem>>, vector<1x2x32xf32>,
    %c0_174 = arith.constant 0 : index
    %c0_175 = arith.constant 0 : index
    %426 = vector.load %arg28[%c0_174, %c0_175] : memref<24x32xf32, #tpu.memory_space<vmem>>, vector<24x32xf32>
    %c0_176 = arith.constant 0 : index
    %c0_177 = arith.constant 0 : index
    %427 = vector.load %arg16[%c0_176, %c0_177] : memref<32x128xf32, #tpu.memory_space<vmem>>, vector<32x128xf32>
    %cst_178 = arith.constant dense<0.000000e+00> : vector<24x128xf32>
    %428 = tpu.matmul %426, %427, %cst_178 {dimension_numbers = #tpu.dot_dimension_numbers<[1], [0], [0], [1], [0, 0, 1, 1], [], []>} : vector<24x32xf32>, vector<32x128xf32>, vector<24x128xf32> -> vector<24x128xf32>
    %c0_179 = arith.constant 0 : index
    %c0_180 = arith.constant 0 : index
    %429 = vector.load %arg18[%c0_179, %c0_180] : memref<1x128xf32, #tpu.memory_space<vmem>>, vector<1x128xf32>
    %430 = vector.broadcast %429 : vector<1x128xf32> to vector<24x128xf32>
    %431 = arith.addf %428, %430 : vector<24x128xf32>
    %c1 = arith.constant 1 : index
    %c0_181 = arith.constant 0 : index
    %c0_182 = arith.constant 0 : index
    %432 = vector.load %arg19[%c1, %c0_181, %c0_182] : memref<2x2x32xf32, #tpu.memory_space<vmem>>, vector<1x2x32xf32>
    %433 = vector.shape_cast %432 : vector<1x2x32xf32> to vector<2x32xf32>
    %c1_183 = arith.constant 1 : index
    %c0_184 = arith.constant 0 : index
    %c0_185 = arith.constant 0 : index
    %434 = vector.load %arg20[%c1_183, %c0_184, %c0_185] : memref<2x2x32xf32, #tpu.memory_space<vmem>>, vector<1x2x32xf32>
    %435 = vector.shape_cast %434 : vector<1x2x32xf32> to vector<2x32xf32>
    %436 = vector.extract_strided_slice %431 {offsets = [0, 0], sizes = [2, 128], strides = [1, 1]} : vector<24x128xf32> to vector<2x128xf32>
    %c0_186 = arith.constant 0 : index
    %c0_187 = arith.constant 0 : index
    %437 = vector.load %arg17[%c0_186, %c0_187] : memref<32x128xf32, #tpu.memory_space<vmem>>, vector<32x128xf32>
    %cst_188 = arith.constant dense<0.000000e+00> : vector<2x128xf32>
    %438 = tpu.matmul %433, %437, %cst_188 {dimension_numbers = #tpu.dot_dimension_numbers<[1], [0], [0], [1], [0, 0, 1, 1], [], []>} : vector<2x32xf32>, vector<32x128xf32>, vector<2x128xf32> -> vector<2x128xf32>
    %439 = arith.addf %436, %438 : vector<2x128xf32>
    %cst_189 = arith.constant 0.000000e+00 : f32
    %440 = vector.broadcast %cst_189 : f32 to vector<2x128xf32>
    %441 = arith.subf %440, %439 : vector<2x128xf32>
    %442 = math.exp %441 : vector<2x128xf32>
    %cst_190 = arith.constant 1.000000e+00 : f32
    %443 = vector.broadcast %cst_190 : f32 to vector<2x128xf32>
    %444 = arith.addf %443, %442 : vector<2x128xf32>
    %cst_191 = arith.constant 1.000000e+00 : f32
    %445 = vector.broadcast %cst_191 : f32 to vector<2x128xf32>
    %446 = arith.divf %445, %444 : vector<2x128xf32>
    %447 = math.tanh %439 : vector<2x128xf32>
    %448 = vector.extract_strided_slice %446 {offsets = [0, 0], sizes = [2, 32], strides = [1, 1]} : vector<2x128xf32> to vector<2x32xf32>
    %449 = vector.extract_strided_slice %446 {offsets = [0, 32], sizes = [2, 32], strides = [1, 1]} : vector<2x128xf32> to vector<2x32xf32>
    %450 = vector.extract_strided_slice %447 {offsets = [0, 64], sizes = [2, 32], strides = [1, 1]} : vector<2x128xf32> to vector<2x32xf32>
    %451 = vector.extract_strided_slice %446 {offsets = [0, 96], sizes = [2, 32], strides = [1, 1]} : vector<2x128xf32> to vector<2x32xf32>
    %452 = arith.mulf %449, %435 : vector<2x32xf32>
    %453 = arith.mulf %448, %450 : vector<2x32xf32>
    %454 = arith.addf %452, %453 : vector<2x32xf32>
    %455 = math.tanh %454 : vector<2x32xf32>
    %456 = arith.mulf %451, %455 : vector<2x32xf32>
    %c0_192 = arith.constant 0 : index
    %c0_193 = arith.constant 0 : index
    %457 = vector.load %arg28[%c0_192, %c0_193] : memref<24x32xf32, #tpu.memory_space<vmem>>, vector<2x32xf32>
    tpu.vector_store %arg28[%c0_192, %c0_193], %456 {strides = array<i32>} : memref<24x32xf32, #tpu.memory_space<vmem>>, vector<2x32xf32>,
    %458 = vector.extract_strided_slice %431 {offsets = [2, 0], sizes = [2, 128], strides = [1, 1]} : vector<24x128xf32> to vector<2x128xf32>
    %c0_194 = arith.constant 0 : index
    %c0_195 = arith.constant 0 : index
    %459 = vector.load %arg17[%c0_194, %c0_195] : memref<32x128xf32, #tpu.memory_space<vmem>>, vector<32x128xf32>
    %cst_196 = arith.constant dense<0.000000e+00> : vector<2x128xf32>
    %460 = tpu.matmul %456, %459, %cst_196 {dimension_numbers = #tpu.dot_dimension_numbers<[1], [0], [0], [1], [0, 0, 1, 1], [], []>} : vector<2x32xf32>, vector<32x128xf32>, vector<2x128xf32> -> vector<2x128xf32>
    %461 = arith.addf %458, %460 : vector<2x128xf32>
    %cst_197 = arith.constant 0.000000e+00 : f32
    %462 = vector.broadcast %cst_197 : f32 to vector<2x128xf32>
    %463 = arith.subf %462, %461 : vector<2x128xf32>
    %464 = math.exp %463 : vector<2x128xf32>
    %cst_198 = arith.constant 1.000000e+00 : f32
    %465 = vector.broadcast %cst_198 : f32 to vector<2x128xf32>
    %466 = arith.addf %465, %464 : vector<2x128xf32>
    %cst_199 = arith.constant 1.000000e+00 : f32
    %467 = vector.broadcast %cst_199 : f32 to vector<2x128xf32>
    %468 = arith.divf %467, %466 : vector<2x128xf32>
    %469 = math.tanh %461 : vector<2x128xf32>
    %470 = vector.extract_strided_slice %468 {offsets = [0, 0], sizes = [2, 32], strides = [1, 1]} : vector<2x128xf32> to vector<2x32xf32>
    %471 = vector.extract_strided_slice %468 {offsets = [0, 32], sizes = [2, 32], strides = [1, 1]} : vector<2x128xf32> to vector<2x32xf32>
    %472 = vector.extract_strided_slice %469 {offsets = [0, 64], sizes = [2, 32], strides = [1, 1]} : vector<2x128xf32> to vector<2x32xf32>
    %473 = vector.extract_strided_slice %468 {offsets = [0, 96], sizes = [2, 32], strides = [1, 1]} : vector<2x128xf32> to vector<2x32xf32>
    %474 = arith.mulf %471, %454 : vector<2x32xf32>
    %475 = arith.mulf %470, %472 : vector<2x32xf32>
    %476 = arith.addf %474, %475 : vector<2x32xf32>
    %477 = math.tanh %476 : vector<2x32xf32>
    %478 = arith.mulf %473, %477 : vector<2x32xf32>
    %c2_200 = arith.constant 2 : index
    %c0_201 = arith.constant 0 : index
    %479 = vector.load %arg28[%c2_200, %c0_201] : memref<24x32xf32, #tpu.memory_space<vmem>>, vector<2x32xf32>
    tpu.vector_store %arg28[%c2_200, %c0_201], %478 {strides = array<i32>} : memref<24x32xf32, #tpu.memory_space<vmem>>, vector<2x32xf32>,
    %480 = vector.extract_strided_slice %431 {offsets = [4, 0], sizes = [2, 128], strides = [1, 1]} : vector<24x128xf32> to vector<2x128xf32>
    %c0_202 = arith.constant 0 : index
    %c0_203 = arith.constant 0 : index
    %481 = vector.load %arg17[%c0_202, %c0_203] : memref<32x128xf32, #tpu.memory_space<vmem>>, vector<32x128xf32>
    %cst_204 = arith.constant dense<0.000000e+00> : vector<2x128xf32>
    %482 = tpu.matmul %478, %481, %cst_204 {dimension_numbers = #tpu.dot_dimension_numbers<[1], [0], [0], [1], [0, 0, 1, 1], [], []>} : vector<2x32xf32>, vector<32x128xf32>, vector<2x128xf32> -> vector<2x128xf32>
    %483 = arith.addf %480, %482 : vector<2x128xf32>
    %cst_205 = arith.constant 0.000000e+00 : f32
    %484 = vector.broadcast %cst_205 : f32 to vector<2x128xf32>
    %485 = arith.subf %484, %483 : vector<2x128xf32>
    %486 = math.exp %485 : vector<2x128xf32>
    %cst_206 = arith.constant 1.000000e+00 : f32
    %487 = vector.broadcast %cst_206 : f32 to vector<2x128xf32>
    %488 = arith.addf %487, %486 : vector<2x128xf32>
    %cst_207 = arith.constant 1.000000e+00 : f32
    %489 = vector.broadcast %cst_207 : f32 to vector<2x128xf32>
    %490 = arith.divf %489, %488 : vector<2x128xf32>
    %491 = math.tanh %483 : vector<2x128xf32>
    %492 = vector.extract_strided_slice %490 {offsets = [0, 0], sizes = [2, 32], strides = [1, 1]} : vector<2x128xf32> to vector<2x32xf32>
    %493 = vector.extract_strided_slice %490 {offsets = [0, 32], sizes = [2, 32], strides = [1, 1]} : vector<2x128xf32> to vector<2x32xf32>
    %494 = vector.extract_strided_slice %491 {offsets = [0, 64], sizes = [2, 32], strides = [1, 1]} : vector<2x128xf32> to vector<2x32xf32>
    %495 = vector.extract_strided_slice %490 {offsets = [0, 96], sizes = [2, 32], strides = [1, 1]} : vector<2x128xf32> to vector<2x32xf32>
    %496 = arith.mulf %493, %476 : vector<2x32xf32>
    %497 = arith.mulf %492, %494 : vector<2x32xf32>
    %498 = arith.addf %496, %497 : vector<2x32xf32>
    %499 = math.tanh %498 : vector<2x32xf32>
    %500 = arith.mulf %495, %499 : vector<2x32xf32>
    %c4_208 = arith.constant 4 : index
    %c0_209 = arith.constant 0 : index
    %501 = vector.load %arg28[%c4_208, %c0_209] : memref<24x32xf32, #tpu.memory_space<vmem>>, vector<2x32xf32>
    tpu.vector_store %arg28[%c4_208, %c0_209], %500 {strides = array<i32>} : memref<24x32xf32, #tpu.memory_space<vmem>>, vector<2x32xf32>,
    %502 = vector.extract_strided_slice %431 {offsets = [6, 0], sizes = [2, 128], strides = [1, 1]} : vector<24x128xf32> to vector<2x128xf32>
    %c0_210 = arith.constant 0 : index
    %c0_211 = arith.constant 0 : index
    %503 = vector.load %arg17[%c0_210, %c0_211] : memref<32x128xf32, #tpu.memory_space<vmem>>, vector<32x128xf32>
    %cst_212 = arith.constant dense<0.000000e+00> : vector<2x128xf32>
    %504 = tpu.matmul %500, %503, %cst_212 {dimension_numbers = #tpu.dot_dimension_numbers<[1], [0], [0], [1], [0, 0, 1, 1], [], []>} : vector<2x32xf32>, vector<32x128xf32>, vector<2x128xf32> -> vector<2x128xf32>
    %505 = arith.addf %502, %504 : vector<2x128xf32>
    %cst_213 = arith.constant 0.000000e+00 : f32
    %506 = vector.broadcast %cst_213 : f32 to vector<2x128xf32>
    %507 = arith.subf %506, %505 : vector<2x128xf32>
    %508 = math.exp %507 : vector<2x128xf32>
    %cst_214 = arith.constant 1.000000e+00 : f32
    %509 = vector.broadcast %cst_214 : f32 to vector<2x128xf32>
    %510 = arith.addf %509, %508 : vector<2x128xf32>
    %cst_215 = arith.constant 1.000000e+00 : f32
    %511 = vector.broadcast %cst_215 : f32 to vector<2x128xf32>
    %512 = arith.divf %511, %510 : vector<2x128xf32>
    %513 = math.tanh %505 : vector<2x128xf32>
    %514 = vector.extract_strided_slice %512 {offsets = [0, 0], sizes = [2, 32], strides = [1, 1]} : vector<2x128xf32> to vector<2x32xf32>
    %515 = vector.extract_strided_slice %512 {offsets = [0, 32], sizes = [2, 32], strides = [1, 1]} : vector<2x128xf32> to vector<2x32xf32>
    %516 = vector.extract_strided_slice %513 {offsets = [0, 64], sizes = [2, 32], strides = [1, 1]} : vector<2x128xf32> to vector<2x32xf32>
    %517 = vector.extract_strided_slice %512 {offsets = [0, 96], sizes = [2, 32], strides = [1, 1]} : vector<2x128xf32> to vector<2x32xf32>
    %518 = arith.mulf %515, %498 : vector<2x32xf32>
    %519 = arith.mulf %514, %516 : vector<2x32xf32>
    %520 = arith.addf %518, %519 : vector<2x32xf32>
    %521 = math.tanh %520 : vector<2x32xf32>
    %522 = arith.mulf %517, %521 : vector<2x32xf32>
    %c6_216 = arith.constant 6 : index
    %c0_217 = arith.constant 0 : index
    %523 = vector.load %arg28[%c6_216, %c0_217] : memref<24x32xf32, #tpu.memory_space<vmem>>, vector<2x32xf32>
    tpu.vector_store %arg28[%c6_216, %c0_217], %522 {strides = array<i32>} : memref<24x32xf32, #tpu.memory_space<vmem>>, vector<2x32xf32>,
    %524 = vector.extract_strided_slice %431 {offsets = [8, 0], sizes = [2, 128], strides = [1, 1]} : vector<24x128xf32> to vector<2x128xf32>
    %c0_218 = arith.constant 0 : index
    %c0_219 = arith.constant 0 : index
    %525 = vector.load %arg17[%c0_218, %c0_219] : memref<32x128xf32, #tpu.memory_space<vmem>>, vector<32x128xf32>
    %cst_220 = arith.constant dense<0.000000e+00> : vector<2x128xf32>
    %526 = tpu.matmul %522, %525, %cst_220 {dimension_numbers = #tpu.dot_dimension_numbers<[1], [0], [0], [1], [0, 0, 1, 1], [], []>} : vector<2x32xf32>, vector<32x128xf32>, vector<2x128xf32> -> vector<2x128xf32>
    %527 = arith.addf %524, %526 : vector<2x128xf32>
    %cst_221 = arith.constant 0.000000e+00 : f32
    %528 = vector.broadcast %cst_221 : f32 to vector<2x128xf32>
    %529 = arith.subf %528, %527 : vector<2x128xf32>
    %530 = math.exp %529 : vector<2x128xf32>
    %cst_222 = arith.constant 1.000000e+00 : f32
    %531 = vector.broadcast %cst_222 : f32 to vector<2x128xf32>
    %532 = arith.addf %531, %530 : vector<2x128xf32>
    %cst_223 = arith.constant 1.000000e+00 : f32
    %533 = vector.broadcast %cst_223 : f32 to vector<2x128xf32>
    %534 = arith.divf %533, %532 : vector<2x128xf32>
    %535 = math.tanh %527 : vector<2x128xf32>
    %536 = vector.extract_strided_slice %534 {offsets = [0, 0], sizes = [2, 32], strides = [1, 1]} : vector<2x128xf32> to vector<2x32xf32>
    %537 = vector.extract_strided_slice %534 {offsets = [0, 32], sizes = [2, 32], strides = [1, 1]} : vector<2x128xf32> to vector<2x32xf32>
    %538 = vector.extract_strided_slice %535 {offsets = [0, 64], sizes = [2, 32], strides = [1, 1]} : vector<2x128xf32> to vector<2x32xf32>
    %539 = vector.extract_strided_slice %534 {offsets = [0, 96], sizes = [2, 32], strides = [1, 1]} : vector<2x128xf32> to vector<2x32xf32>
    %540 = arith.mulf %537, %520 : vector<2x32xf32>
    %541 = arith.mulf %536, %538 : vector<2x32xf32>
    %542 = arith.addf %540, %541 : vector<2x32xf32>
    %543 = math.tanh %542 : vector<2x32xf32>
    %544 = arith.mulf %539, %543 : vector<2x32xf32>
    %c8_224 = arith.constant 8 : index
    %c0_225 = arith.constant 0 : index
    %545 = vector.load %arg28[%c8_224, %c0_225] : memref<24x32xf32, #tpu.memory_space<vmem>>, vector<2x32xf32>
    tpu.vector_store %arg28[%c8_224, %c0_225], %544 {strides = array<i32>} : memref<24x32xf32, #tpu.memory_space<vmem>>, vector<2x32xf32>,
    %546 = vector.extract_strided_slice %431 {offsets = [10, 0], sizes = [2, 128], strides = [1, 1]} : vector<24x128xf32> to vector<2x128xf32>
    %c0_226 = arith.constant 0 : index
    %c0_227 = arith.constant 0 : index
    %547 = vector.load %arg17[%c0_226, %c0_227] : memref<32x128xf32, #tpu.memory_space<vmem>>, vector<32x128xf32>
    %cst_228 = arith.constant dense<0.000000e+00> : vector<2x128xf32>
    %548 = tpu.matmul %544, %547, %cst_228 {dimension_numbers = #tpu.dot_dimension_numbers<[1], [0], [0], [1], [0, 0, 1, 1], [], []>} : vector<2x32xf32>, vector<32x128xf32>, vector<2x128xf32> -> vector<2x128xf32>
    %549 = arith.addf %546, %548 : vector<2x128xf32>
    %cst_229 = arith.constant 0.000000e+00 : f32
    %550 = vector.broadcast %cst_229 : f32 to vector<2x128xf32>
    %551 = arith.subf %550, %549 : vector<2x128xf32>
    %552 = math.exp %551 : vector<2x128xf32>
    %cst_230 = arith.constant 1.000000e+00 : f32
    %553 = vector.broadcast %cst_230 : f32 to vector<2x128xf32>
    %554 = arith.addf %553, %552 : vector<2x128xf32>
    %cst_231 = arith.constant 1.000000e+00 : f32
    %555 = vector.broadcast %cst_231 : f32 to vector<2x128xf32>
    %556 = arith.divf %555, %554 : vector<2x128xf32>
    %557 = math.tanh %549 : vector<2x128xf32>
    %558 = vector.extract_strided_slice %556 {offsets = [0, 0], sizes = [2, 32], strides = [1, 1]} : vector<2x128xf32> to vector<2x32xf32>
    %559 = vector.extract_strided_slice %556 {offsets = [0, 32], sizes = [2, 32], strides = [1, 1]} : vector<2x128xf32> to vector<2x32xf32>
    %560 = vector.extract_strided_slice %557 {offsets = [0, 64], sizes = [2, 32], strides = [1, 1]} : vector<2x128xf32> to vector<2x32xf32>
    %561 = vector.extract_strided_slice %556 {offsets = [0, 96], sizes = [2, 32], strides = [1, 1]} : vector<2x128xf32> to vector<2x32xf32>
    %562 = arith.mulf %559, %542 : vector<2x32xf32>
    %563 = arith.mulf %558, %560 : vector<2x32xf32>
    %564 = arith.addf %562, %563 : vector<2x32xf32>
    %565 = math.tanh %564 : vector<2x32xf32>
    %566 = arith.mulf %561, %565 : vector<2x32xf32>
    %c10_232 = arith.constant 10 : index
    %c0_233 = arith.constant 0 : index
    %567 = vector.load %arg28[%c10_232, %c0_233] : memref<24x32xf32, #tpu.memory_space<vmem>>, vector<2x32xf32>
    tpu.vector_store %arg28[%c10_232, %c0_233], %566 {strides = array<i32>} : memref<24x32xf32, #tpu.memory_space<vmem>>, vector<2x32xf32>,
    %568 = vector.extract_strided_slice %431 {offsets = [12, 0], sizes = [2, 128], strides = [1, 1]} : vector<24x128xf32> to vector<2x128xf32>
    %c0_234 = arith.constant 0 : index
    %c0_235 = arith.constant 0 : index
    %569 = vector.load %arg17[%c0_234, %c0_235] : memref<32x128xf32, #tpu.memory_space<vmem>>, vector<32x128xf32>
    %cst_236 = arith.constant dense<0.000000e+00> : vector<2x128xf32>
    %570 = tpu.matmul %566, %569, %cst_236 {dimension_numbers = #tpu.dot_dimension_numbers<[1], [0], [0], [1], [0, 0, 1, 1], [], []>} : vector<2x32xf32>, vector<32x128xf32>, vector<2x128xf32> -> vector<2x128xf32>
    %571 = arith.addf %568, %570 : vector<2x128xf32>
    %cst_237 = arith.constant 0.000000e+00 : f32
    %572 = vector.broadcast %cst_237 : f32 to vector<2x128xf32>
    %573 = arith.subf %572, %571 : vector<2x128xf32>
    %574 = math.exp %573 : vector<2x128xf32>
    %cst_238 = arith.constant 1.000000e+00 : f32
    %575 = vector.broadcast %cst_238 : f32 to vector<2x128xf32>
    %576 = arith.addf %575, %574 : vector<2x128xf32>
    %cst_239 = arith.constant 1.000000e+00 : f32
    %577 = vector.broadcast %cst_239 : f32 to vector<2x128xf32>
    %578 = arith.divf %577, %576 : vector<2x128xf32>
    %579 = math.tanh %571 : vector<2x128xf32>
    %580 = vector.extract_strided_slice %578 {offsets = [0, 0], sizes = [2, 32], strides = [1, 1]} : vector<2x128xf32> to vector<2x32xf32>
    %581 = vector.extract_strided_slice %578 {offsets = [0, 32], sizes = [2, 32], strides = [1, 1]} : vector<2x128xf32> to vector<2x32xf32>
    %582 = vector.extract_strided_slice %579 {offsets = [0, 64], sizes = [2, 32], strides = [1, 1]} : vector<2x128xf32> to vector<2x32xf32>
    %583 = vector.extract_strided_slice %578 {offsets = [0, 96], sizes = [2, 32], strides = [1, 1]} : vector<2x128xf32> to vector<2x32xf32>
    %584 = arith.mulf %581, %564 : vector<2x32xf32>
    %585 = arith.mulf %580, %582 : vector<2x32xf32>
    %586 = arith.addf %584, %585 : vector<2x32xf32>
    %587 = math.tanh %586 : vector<2x32xf32>
    %588 = arith.mulf %583, %587 : vector<2x32xf32>
    %c12_240 = arith.constant 12 : index
    %c0_241 = arith.constant 0 : index
    %589 = vector.load %arg28[%c12_240, %c0_241] : memref<24x32xf32, #tpu.memory_space<vmem>>, vector<2x32xf32>
    tpu.vector_store %arg28[%c12_240, %c0_241], %588 {strides = array<i32>} : memref<24x32xf32, #tpu.memory_space<vmem>>, vector<2x32xf32>,
    %590 = vector.extract_strided_slice %431 {offsets = [14, 0], sizes = [2, 128], strides = [1, 1]} : vector<24x128xf32> to vector<2x128xf32>
    %c0_242 = arith.constant 0 : index
    %c0_243 = arith.constant 0 : index
    %591 = vector.load %arg17[%c0_242, %c0_243] : memref<32x128xf32, #tpu.memory_space<vmem>>, vector<32x128xf32>
    %cst_244 = arith.constant dense<0.000000e+00> : vector<2x128xf32>
    %592 = tpu.matmul %588, %591, %cst_244 {dimension_numbers = #tpu.dot_dimension_numbers<[1], [0], [0], [1], [0, 0, 1, 1], [], []>} : vector<2x32xf32>, vector<32x128xf32>, vector<2x128xf32> -> vector<2x128xf32>
    %593 = arith.addf %590, %592 : vector<2x128xf32>
    %cst_245 = arith.constant 0.000000e+00 : f32
    %594 = vector.broadcast %cst_245 : f32 to vector<2x128xf32>
    %595 = arith.subf %594, %593 : vector<2x128xf32>
    %596 = math.exp %595 : vector<2x128xf32>
    %cst_246 = arith.constant 1.000000e+00 : f32
    %597 = vector.broadcast %cst_246 : f32 to vector<2x128xf32>
    %598 = arith.addf %597, %596 : vector<2x128xf32>
    %cst_247 = arith.constant 1.000000e+00 : f32
    %599 = vector.broadcast %cst_247 : f32 to vector<2x128xf32>
    %600 = arith.divf %599, %598 : vector<2x128xf32>
    %601 = math.tanh %593 : vector<2x128xf32>
    %602 = vector.extract_strided_slice %600 {offsets = [0, 0], sizes = [2, 32], strides = [1, 1]} : vector<2x128xf32> to vector<2x32xf32>
    %603 = vector.extract_strided_slice %600 {offsets = [0, 32], sizes = [2, 32], strides = [1, 1]} : vector<2x128xf32> to vector<2x32xf32>
    %604 = vector.extract_strided_slice %601 {offsets = [0, 64], sizes = [2, 32], strides = [1, 1]} : vector<2x128xf32> to vector<2x32xf32>
    %605 = vector.extract_strided_slice %600 {offsets = [0, 96], sizes = [2, 32], strides = [1, 1]} : vector<2x128xf32> to vector<2x32xf32>
    %606 = arith.mulf %603, %586 : vector<2x32xf32>
    %607 = arith.mulf %602, %604 : vector<2x32xf32>
    %608 = arith.addf %606, %607 : vector<2x32xf32>
    %609 = math.tanh %608 : vector<2x32xf32>
    %610 = arith.mulf %605, %609 : vector<2x32xf32>
    %c14_248 = arith.constant 14 : index
    %c0_249 = arith.constant 0 : index
    %611 = vector.load %arg28[%c14_248, %c0_249] : memref<24x32xf32, #tpu.memory_space<vmem>>, vector<2x32xf32>
    tpu.vector_store %arg28[%c14_248, %c0_249], %610 {strides = array<i32>} : memref<24x32xf32, #tpu.memory_space<vmem>>, vector<2x32xf32>,
    %612 = vector.extract_strided_slice %431 {offsets = [16, 0], sizes = [2, 128], strides = [1, 1]} : vector<24x128xf32> to vector<2x128xf32>
    %c0_250 = arith.constant 0 : index
    %c0_251 = arith.constant 0 : index
    %613 = vector.load %arg17[%c0_250, %c0_251] : memref<32x128xf32, #tpu.memory_space<vmem>>, vector<32x128xf32>
    %cst_252 = arith.constant dense<0.000000e+00> : vector<2x128xf32>
    %614 = tpu.matmul %610, %613, %cst_252 {dimension_numbers = #tpu.dot_dimension_numbers<[1], [0], [0], [1], [0, 0, 1, 1], [], []>} : vector<2x32xf32>, vector<32x128xf32>, vector<2x128xf32> -> vector<2x128xf32>
    %615 = arith.addf %612, %614 : vector<2x128xf32>
    %cst_253 = arith.constant 0.000000e+00 : f32
    %616 = vector.broadcast %cst_253 : f32 to vector<2x128xf32>
    %617 = arith.subf %616, %615 : vector<2x128xf32>
    %618 = math.exp %617 : vector<2x128xf32>
    %cst_254 = arith.constant 1.000000e+00 : f32
    %619 = vector.broadcast %cst_254 : f32 to vector<2x128xf32>
    %620 = arith.addf %619, %618 : vector<2x128xf32>
    %cst_255 = arith.constant 1.000000e+00 : f32
    %621 = vector.broadcast %cst_255 : f32 to vector<2x128xf32>
    %622 = arith.divf %621, %620 : vector<2x128xf32>
    %623 = math.tanh %615 : vector<2x128xf32>
    %624 = vector.extract_strided_slice %622 {offsets = [0, 0], sizes = [2, 32], strides = [1, 1]} : vector<2x128xf32> to vector<2x32xf32>
    %625 = vector.extract_strided_slice %622 {offsets = [0, 32], sizes = [2, 32], strides = [1, 1]} : vector<2x128xf32> to vector<2x32xf32>
    %626 = vector.extract_strided_slice %623 {offsets = [0, 64], sizes = [2, 32], strides = [1, 1]} : vector<2x128xf32> to vector<2x32xf32>
    %627 = vector.extract_strided_slice %622 {offsets = [0, 96], sizes = [2, 32], strides = [1, 1]} : vector<2x128xf32> to vector<2x32xf32>
    %628 = arith.mulf %625, %608 : vector<2x32xf32>
    %629 = arith.mulf %624, %626 : vector<2x32xf32>
    %630 = arith.addf %628, %629 : vector<2x32xf32>
    %631 = math.tanh %630 : vector<2x32xf32>
    %632 = arith.mulf %627, %631 : vector<2x32xf32>
    %c16_256 = arith.constant 16 : index
    %c0_257 = arith.constant 0 : index
    %633 = vector.load %arg28[%c16_256, %c0_257] : memref<24x32xf32, #tpu.memory_space<vmem>>, vector<2x32xf32>
    tpu.vector_store %arg28[%c16_256, %c0_257], %632 {strides = array<i32>} : memref<24x32xf32, #tpu.memory_space<vmem>>, vector<2x32xf32>,
    %c1_258 = arith.constant 1 : index
    %c0_259 = arith.constant 0 : index
    %c0_260 = arith.constant 0 : index
    %634 = vector.load %arg26[%c1_258, %c0_259, %c0_260] : memref<2x2x32xf32, #tpu.memory_space<vmem>>, vector<1x2x32xf32>
    %635 = vector.shape_cast %634 : vector<1x2x32xf32> to vector<2x32xf32>
    %636 = vector.shape_cast %632 : vector<2x32xf32> to vector<1x2x32xf32>
    tpu.vector_store %arg26[%c1_258, %c0_259, %c0_260], %636 {strides = array<i32>} : memref<2x2x32xf32, #tpu.memory_space<vmem>>, vector<1x2x32xf32>,
    %c1_261 = arith.constant 1 : index
    %c0_262 = arith.constant 0 : index
    %c0_263 = arith.constant 0 : index
    %637 = vector.load %arg27[%c1_261, %c0_262, %c0_263] : memref<2x2x32xf32, #tpu.memory_space<vmem>>, vector<1x2x32xf32>
    %638 = vector.shape_cast %637 : vector<1x2x32xf32> to vector<2x32xf32>
    %639 = vector.shape_cast %630 : vector<2x32xf32> to vector<1x2x32xf32>
    tpu.vector_store %arg27[%c1_261, %c0_262, %c0_263], %639 {strides = array<i32>} : memref<2x2x32xf32, #tpu.memory_space<vmem>>, vector<1x2x32xf32>,
    %c0_264 = arith.constant 0 : index
    %c0_265 = arith.constant 0 : index
    %640 = vector.load %arg28[%c0_264, %c0_265] : memref<24x32xf32, #tpu.memory_space<vmem>>, vector<24x32xf32>
    %c0_266 = arith.constant 0 : index
    %c0_267 = arith.constant 0 : index
    %641 = vector.load %arg21[%c0_266, %c0_267] : memref<1x32xf32, #tpu.memory_space<vmem>>, vector<1x32xf32>
    %c0_268 = arith.constant 0 : index
    %c0_269 = arith.constant 0 : index
    %642 = vector.load %arg22[%c0_268, %c0_269] : memref<1x32xf32, #tpu.memory_space<vmem>>, vector<1x32xf32>
    %cst_270 = arith.constant dense<0.000000e+00> : vector<24xf32>
    %643 = vector.multi_reduction <add>, %640, %cst_270 [1] : vector<24x32xf32> to vector<24xf32>
    %644 = vector.shape_cast %643 : vector<24xf32> to vector<24x1xf32>
    %cst_271 = arith.constant 3.200000e+01 : f32
    %645 = vector.broadcast %cst_271 : f32 to vector<24x1xf32>
    %646 = arith.divf %644, %645 : vector<24x1xf32>
    %647 = vector.broadcast %646 : vector<24x1xf32> to vector<24x32xf32>
    %648 = arith.subf %640, %647 : vector<24x32xf32>
    %649 = arith.mulf %648, %648 : vector<24x32xf32>
    %cst_272 = arith.constant dense<0.000000e+00> : vector<24xf32>
    %650 = vector.multi_reduction <add>, %649, %cst_272 [1] : vector<24x32xf32> to vector<24xf32>
    %651 = vector.shape_cast %650 : vector<24xf32> to vector<24x1xf32>
    %cst_273 = arith.constant 3.200000e+01 : f32
    %652 = vector.broadcast %cst_273 : f32 to vector<24x1xf32>
    %653 = arith.divf %651, %652 : vector<24x1xf32>
    %654 = vector.broadcast %646 : vector<24x1xf32> to vector<24x32xf32>
    %655 = arith.subf %640, %654 : vector<24x32xf32>
    %cst_274 = arith.constant 9.99999974E-6 : f32
    %656 = vector.broadcast %cst_274 : f32 to vector<24x1xf32>
    %657 = arith.addf %653, %656 : vector<24x1xf32>
    %658 = math.rsqrt %657 : vector<24x1xf32>
    %659 = vector.broadcast %658 : vector<24x1xf32> to vector<24x32xf32>
    %660 = arith.mulf %655, %659 : vector<24x32xf32>
    %661 = vector.broadcast %641 : vector<1x32xf32> to vector<24x32xf32>
    %662 = arith.mulf %660, %661 : vector<24x32xf32>
    %663 = vector.broadcast %642 : vector<1x32xf32> to vector<24x32xf32>
    %664 = arith.addf %662, %663 : vector<24x32xf32>
    %cst_275 = arith.constant 5.000000e-01 : f32
    %665 = vector.broadcast %cst_275 : f32 to vector<24x32xf32>
    %666 = arith.mulf %665, %664 : vector<24x32xf32>
    %cst_276 = arith.constant 0.707106769 : f32
    %667 = vector.broadcast %cst_276 : f32 to vector<24x32xf32>
    %668 = arith.mulf %664, %667 : vector<24x32xf32>
    %cst_277 = arith.constant 0.000000e+00 : f32
    %669 = vector.broadcast %cst_277 : f32 to vector<24x32xf32>
    %670 = arith.cmpf oge, %668, %669 : vector<24x32xf32>
    %cst_278 = arith.constant 1.000000e+00 : f32
    %cst_279 = arith.constant -1.000000e+00 : f32
    %671 = vector.broadcast %cst_278 : f32 to vector<24x32xf32>
    %672 = vector.broadcast %cst_279 : f32 to vector<24x32xf32>
    %673 = arith.select %670, %671, %672 : vector<24x32xi1>, vector<24x32xf32>
    %674 = math.absf %668 : vector<24x32xf32>
    %cst_280 = arith.constant 0.327591091 : f32
    %675 = vector.broadcast %cst_280 : f32 to vector<24x32xf32>
    %676 = arith.mulf %675, %674 : vector<24x32xf32>
    %cst_281 = arith.constant 1.000000e+00 : f32
    %677 = vector.broadcast %cst_281 : f32 to vector<24x32xf32>
    %678 = arith.addf %677, %676 : vector<24x32xf32>
    %cst_282 = arith.constant 1.000000e+00 : f32
    %679 = vector.broadcast %cst_282 : f32 to vector<24x32xf32>
    %680 = arith.divf %679, %678 : vector<24x32xf32>
    %cst_283 = arith.constant 1.06140542 : f32
    %681 = vector.broadcast %cst_283 : f32 to vector<24x32xf32>
    %682 = arith.mulf %681, %680 : vector<24x32xf32>
    %cst_284 = arith.constant -1.45315206 : f32
    %683 = vector.broadcast %cst_284 : f32 to vector<24x32xf32>
    %684 = arith.addf %682, %683 : vector<24x32xf32>
    %685 = arith.mulf %684, %680 : vector<24x32xf32>
    %cst_285 = arith.constant 1.42141378 : f32
    %686 = vector.broadcast %cst_285 : f32 to vector<24x32xf32>
    %687 = arith.addf %685, %686 : vector<24x32xf32>
    %688 = arith.mulf %687, %680 : vector<24x32xf32>
    %cst_286 = arith.constant -0.284496725 : f32
    %689 = vector.broadcast %cst_286 : f32 to vector<24x32xf32>
    %690 = arith.addf %688, %689 : vector<24x32xf32>
    %691 = arith.mulf %690, %680 : vector<24x32xf32>
    %cst_287 = arith.constant 0.254829586 : f32
    %692 = vector.broadcast %cst_287 : f32 to vector<24x32xf32>
    %693 = arith.addf %691, %692 : vector<24x32xf32>
    %694 = arith.mulf %693, %680 : vector<24x32xf32>
    %cst_288 = arith.constant 0.000000e+00 : f32
    %695 = vector.broadcast %cst_288 : f32 to vector<24x32xf32>
    %696 = arith.subf %695, %674 : vector<24x32xf32>
    %697 = arith.mulf %696, %674 : vector<24x32xf32>
    %698 = math.exp %697 : vector<24x32xf32>
    %699 = arith.mulf %694, %698 : vector<24x32xf32>
    %cst_289 = arith.constant 1.000000e+00 : f32
    %700 = vector.broadcast %cst_289 : f32 to vector<24x32xf32>
    %701 = arith.subf %700, %699 : vector<24x32xf32>
    %702 = arith.mulf %673, %701 : vector<24x32xf32>
    %cst_290 = arith.constant 1.000000e+00 : f32
    %703 = vector.broadcast %cst_290 : f32 to vector<24x32xf32>
    %704 = arith.addf %703, %702 : vector<24x32xf32>
    %705 = arith.mulf %666, %704 : vector<24x32xf32>
    %c0_291 = arith.constant 0 : index
    %c0_292 = arith.constant 0 : index
    %706 = vector.load %arg23[%c0_291, %c0_292] : memref<32x128xf32, #tpu.memory_space<vmem>>, vector<32x128xf32>
    %cst_293 = arith.constant dense<0.000000e+00> : vector<24x128xf32>
    %707 = tpu.matmul %705, %706, %cst_293 {dimension_numbers = #tpu.dot_dimension_numbers<[1], [0], [0], [1], [0, 0, 1, 1], [], []>} : vector<24x32xf32>, vector<32x128xf32>, vector<24x128xf32> -> vector<24x128xf32>
    %c0_294 = arith.constant 0 : index
    %c0_295 = arith.constant 0 : index
    %708 = vector.load %arg24[%c0_294, %c0_295] : memref<1x128xf32, #tpu.memory_space<vmem>>, vector<1x128xf32>
    %709 = vector.broadcast %708 : vector<1x128xf32> to vector<24x128xf32>
    %710 = arith.addf %707, %709 : vector<24x128xf32>
    %c0_296 = arith.constant 0 : index
    %c0_297 = arith.constant 0 : index
    %711 = vector.load %arg25[%c0_296, %c0_297] : memref<24x128xf32, #tpu.memory_space<vmem>>, vector<24x128xf32>
    tpu.vector_store %arg25[%c0_296, %c0_297], %710 {strides = array<i32>} : memref<24x128xf32, #tpu.memory_space<vmem>>, vector<24x128xf32>,
    return
  }
}

</mosaic_0001>

<llo_original>
// kernel: speech_recognition_forward.1
$region0: #{speech_recognition_forward.1}
  #allocation0 [shape = 'u32[]', space=smem, size = 0x4, offset = 0x4, fixed_abs, tag = 'smem constant byte address 0x4 - core index']
  #allocation1 [shape = 'u32[144,128]{1,0:T(1,128)}', space=vmem, size = 0x12000, scoped, tag = 'internal scratch']
  #allocation2 [shape = 'f32[24,32]{1,0:T(8,128)}', space=vmem, size = 0x3000, scoped, tag = 'scratch operand']
  %s0 = inlined_call_operand.vmem [shape: f32[24,160], index: 0, kind: input, shape index: {}]
  %s1 = inlined_call_operand.vmem [shape: f32[160,16], index: 1, kind: input, shape index: {}]
  %s2 = inlined_call_operand.vmem [shape: f32[1,16], index: 2, kind: input, shape index: {}]
  %s3 = inlined_call_operand.vmem [shape: f32[1,16], index: 3, kind: input, shape index: {}]
  %s4 = inlined_call_operand.vmem [shape: f32[1,16], index: 4, kind: input, shape index: {}]
  %s5 = inlined_call_operand.vmem [shape: f32[16,128], index: 5, kind: input, shape index: {}]
  %s6 = inlined_call_operand.vmem [shape: f32[1,128], index: 6, kind: input, shape index: {}]
  %s7 = inlined_call_operand.vmem [shape: f32[1,128], index: 7, kind: input, shape index: {}]
  %s8 = inlined_call_operand.vmem [shape: f32[1,128], index: 8, kind: input, shape index: {}]
  %s9 = inlined_call_operand.vmem [shape: f32[128,128], index: 9, kind: input, shape index: {}]
  %s10 = inlined_call_operand.vmem [shape: f32[1,128], index: 10, kind: input, shape index: {}]
  %s11 = inlined_call_operand.vmem [shape: f32[1,128], index: 11, kind: input, shape index: {}]
  %s12 = inlined_call_operand.vmem [shape: f32[1,128], index: 12, kind: input, shape index: {}]
  %s13 = inlined_call_operand.vmem [shape: f32[128,128], index: 13, kind: input, shape index: {}]
  %s14 = inlined_call_operand.vmem [shape: f32[32,128], index: 14, kind: input, shape index: {}]
  %s15 = inlined_call_operand.vmem [shape: f32[1,128], index: 15, kind: input, shape index: {}]
  %s16 = inlined_call_operand.vmem [shape: f32[32,128], index: 16, kind: input, shape index: {}]
  %s17 = inlined_call_operand.vmem [shape: f32[32,128], index: 17, kind: input, shape index: {}]
  %s18 = inlined_call_operand.vmem [shape: f32[1,128], index: 18, kind: input, shape index: {}]
  %s19 = inlined_call_operand.vmem [shape: f32[2,2,32], index: 19, kind: input, shape index: {}]
  %s20 = inlined_call_operand.vmem [shape: f32[2,2,32], index: 20, kind: input, shape index: {}]
  %s21 = inlined_call_operand.vmem [shape: f32[1,32], index: 21, kind: input, shape index: {}]
  %s22 = inlined_call_operand.vmem [shape: f32[1,32], index: 22, kind: input, shape index: {}]
  %s23 = inlined_call_operand.vmem [shape: f32[32,128], index: 23, kind: input, shape index: {}]
  %s24 = inlined_call_operand.vmem [shape: f32[1,128], index: 24, kind: input, shape index: {}]
  %s25 = inlined_call_operand.vmem [shape: f32[24,128], index: 25, kind: output, shape index: {0}]
  %s26 = inlined_call_operand.hbm [shape: f32[2,2,32], index: 26, kind: output, shape index: {1}]
  %s27 = inlined_call_operand.hbm [shape: f32[2,2,32], index: 27, kind: output, shape index: {2}]
  %28 = xla_tuple %s25, %s26, %s27
  %s29 = sld [smem:[#allocation0]]
  $region126: #{speech_recognition_forward.1} parent=0
    _
  %s31 = ssub.s32 1, %s29
  %s32 = scalar_select 0, %s31, %s29
  $region1: #{speech_recognition_forward.1} parent=0
    #allocation3 [shape = 'u8[2048]{0}', space=vmem, size = 0x800, scoped, tag = 'output window, operand 1, single buffered']
    #allocation4 [shape = 's32[1]{0}', space=sflag, size = 0x4, scoped, tag = 'scoped memory for speech_recognition_forward.1']
    #allocation5 [shape = 'u8[2048]{0}', space=vmem, size = 0x800, scoped, tag = 'output window, operand 2, single buffered']
    #allocation6 [shape = 's32[1]{0}', space=sflag, size = 0x4, scoped, tag = 'scoped memory for speech_recognition_forward.1']
    %33 = vsyncpa [#allocation4], 0
    %34 = vsyncpa [#allocation6], 0
    // Predicated region
    $region2: #{speech_recognition_forward.1} parent=1 // pred_check
      _
    $region3: #{speech_recognition_forward.1} parent=1 // pred_check_branch
      %36 = sbr.rel (0) target = $region5
    $region4: #{speech_recognition_forward.1} parent=1 // pred_region
      _
    $region5: #{speech_recognition_forward.1} parent=1 // pred_fallthru
      _
    // Predicated region
    $region6: #{speech_recognition_forward.1} parent=1 // pred_check
      _
    $region7: #{speech_recognition_forward.1} parent=1 // pred_check_branch
      %38 = sbr.rel (0) target = $region9
    $region8: #{speech_recognition_forward.1} parent=1 // pred_region
      _
    $region9: #{speech_recognition_forward.1} parent=1 // pred_fallthru
      _
    // Predicated region
    $region10: #{speech_recognition_forward.1} parent=1 // pred_check
      _
    $region11: #{speech_recognition_forward.1} parent=1 // pred_check_branch
      %40 = sbr.rel (0) target = $region13
    $region12: #{speech_recognition_forward.1} parent=1 // pred_region
      _
    $region13: #{speech_recognition_forward.1} parent=1 // pred_fallthru
      _
    // Predicated region
    $region14: #{speech_recognition_forward.1} parent=1 // pred_check
      _
    $region15: #{speech_recognition_forward.1} parent=1 // pred_check_branch
      %42 = sbr.rel (0) target = $region17
    $region16: #{speech_recognition_forward.1} parent=1 // pred_region
      _
    $region17: #{speech_recognition_forward.1} parent=1 // pred_fallthru
      _
    // Predicated region
    $region18: #{speech_recognition_forward.1} parent=1 // pred_check
      _
    $region19: #{speech_recognition_forward.1} parent=1 // pred_check_branch
      %44 = sbr.rel (0) target = $region21
    $region20: #{speech_recognition_forward.1} parent=1 // pred_region
      _
    $region21: #{speech_recognition_forward.1} parent=1 // pred_fallthru
      _
    // Predicated region
    $region22: #{speech_recognition_forward.1} parent=1 // pred_check
      _
    $region23: #{speech_recognition_forward.1} parent=1 // pred_check_branch
      %46 = sbr.rel (0) target = $region25
    $region24: #{speech_recognition_forward.1} parent=1 // pred_region
      _
    $region25: #{speech_recognition_forward.1} parent=1 // pred_fallthru
      _
    // Predicated region
    $region26: #{speech_recognition_forward.1} parent=1 // pred_check
      _
    $region27: #{speech_recognition_forward.1} parent=1 // pred_check_branch
      %48 = sbr.rel (0) target = $region29
    $region28: #{speech_recognition_forward.1} parent=1 // pred_region
      _
    $region29: #{speech_recognition_forward.1} parent=1 // pred_fallthru
      _
    // Predicated region
    $region30: #{speech_recognition_forward.1} parent=1 // pred_check
      _
    $region31: #{speech_recognition_forward.1} parent=1 // pred_check_branch
      %50 = sbr.rel (0) target = $region33
    $region32: #{speech_recognition_forward.1} parent=1 // pred_region
      _
    $region33: #{speech_recognition_forward.1} parent=1 // pred_fallthru
      _
    // Predicated region
    $region34: #{speech_recognition_forward.1} parent=1 // pred_check
      _
    $region35: #{speech_recognition_forward.1} parent=1 // pred_check_branch
      %52 = sbr.rel (0) target = $region37
    $region36: #{speech_recognition_forward.1} parent=1 // pred_region
      _
    $region37: #{speech_recognition_forward.1} parent=1 // pred_fallthru
      _
    // Predicated region
    $region38: #{speech_recognition_forward.1} parent=1 // pred_check
      _
    $region39: #{speech_recognition_forward.1} parent=1 // pred_check_branch
      %54 = sbr.rel (0) target = $region41
    $region40: #{speech_recognition_forward.1} parent=1 // pred_region
      _
    $region41: #{speech_recognition_forward.1} parent=1 // pred_fallthru
      _
    // Predicated region
    $region42: #{speech_recognition_forward.1} parent=1 // pred_check
      _
    $region43: #{speech_recognition_forward.1} parent=1 // pred_check_branch
      %56 = sbr.rel (0) target = $region45
    $region44: #{speech_recognition_forward.1} parent=1 // pred_region
      _
    $region45: #{speech_recognition_forward.1} parent=1 // pred_fallthru
      _
    // Predicated region
    $region46: #{speech_recognition_forward.1} parent=1 // pred_check
      _
    $region47: #{speech_recognition_forward.1} parent=1 // pred_check_branch
      %58 = sbr.rel (0) target = $region49
    $region48: #{speech_recognition_forward.1} parent=1 // pred_region
      _
    $region49: #{speech_recognition_forward.1} parent=1 // pred_fallthru
      _
    // Predicated region
    $region50: #{speech_recognition_forward.1} parent=1 // pred_check
      _
    $region51: #{speech_recognition_forward.1} parent=1 // pred_check_branch
      %60 = sbr.rel (0) target = $region53
    $region52: #{speech_recognition_forward.1} parent=1 // pred_region
      _
    $region53: #{speech_recognition_forward.1} parent=1 // pred_fallthru
      _
    // Predicated region
    $region54: #{speech_recognition_forward.1} parent=1 // pred_check
      _
    $region55: #{speech_recognition_forward.1} parent=1 // pred_check_branch
      %62 = sbr.rel (0) target = $region57
    $region56: #{speech_recognition_forward.1} parent=1 // pred_region
      _
    $region57: #{speech_recognition_forward.1} parent=1 // pred_fallthru
      _
    // Predicated region
    $region58: #{speech_recognition_forward.1} parent=1 // pred_check
      _
    $region59: #{speech_recognition_forward.1} parent=1 // pred_check_branch
      %64 = sbr.rel (0) target = $region61
    $region60: #{speech_recognition_forward.1} parent=1 // pred_region
      _
    $region61: #{speech_recognition_forward.1} parent=1 // pred_fallthru
      _
    // Predicated region
    $region62: #{speech_recognition_forward.1} parent=1 // pred_check
      _
    $region63: #{speech_recognition_forward.1} parent=1 // pred_check_branch
      %66 = sbr.rel (0) target = $region65
    $region64: #{speech_recognition_forward.1} parent=1 // pred_region
      _
    $region65: #{speech_recognition_forward.1} parent=1 // pred_fallthru
      _
    // Predicated region
    $region66: #{speech_recognition_forward.1} parent=1 // pred_check
      _
    $region67: #{speech_recognition_forward.1} parent=1 // pred_check_branch
      %68 = sbr.rel (0) target = $region69
    $region68: #{speech_recognition_forward.1} parent=1 // pred_region
      _
    $region69: #{speech_recognition_forward.1} parent=1 // pred_fallthru
      _
    // Predicated region
    $region70: #{speech_recognition_forward.1} parent=1 // pred_check
      _
    $region71: #{speech_recognition_forward.1} parent=1 // pred_check_branch
      %70 = sbr.rel (0) target = $region73
    $region72: #{speech_recognition_forward.1} parent=1 // pred_region
      _
    $region73: #{speech_recognition_forward.1} parent=1 // pred_fallthru
      _
    // Predicated region
    $region74: #{speech_recognition_forward.1} parent=1 // pred_check
      _
    $region75: #{speech_recognition_forward.1} parent=1 // pred_check_branch
      %72 = sbr.rel (0) target = $region77
    $region76: #{speech_recognition_forward.1} parent=1 // pred_region
      _
    $region77: #{speech_recognition_forward.1} parent=1 // pred_fallthru
      _
    // Predicated region
    $region78: #{speech_recognition_forward.1} parent=1 // pred_check
      _
    $region79: #{speech_recognition_forward.1} parent=1 // pred_check_branch
      %74 = sbr.rel (0) target = $region81
    $region80: #{speech_recognition_forward.1} parent=1 // pred_region
      _
    $region81: #{speech_recognition_forward.1} parent=1 // pred_fallthru
      _
    // Predicated region
    $region82: #{speech_recognition_forward.1} parent=1 // pred_check
      _
    $region83: #{speech_recognition_forward.1} parent=1 // pred_check_branch
      %76 = sbr.rel (0) target = $region85
    $region84: #{speech_recognition_forward.1} parent=1 // pred_region
      _
    $region85: #{speech_recognition_forward.1} parent=1 // pred_fallthru
      _
    // Predicated region
    $region86: #{speech_recognition_forward.1} parent=1 // pred_check
      _
    $region87: #{speech_recognition_forward.1} parent=1 // pred_check_branch
      %78 = sbr.rel (0) target = $region89
    $region88: #{speech_recognition_forward.1} parent=1 // pred_region
      _
    $region89: #{speech_recognition_forward.1} parent=1 // pred_fallthru
      _
    // Predicated region
    $region90: #{speech_recognition_forward.1} parent=1 // pred_check
      _
    $region91: #{speech_recognition_forward.1} parent=1 // pred_check_branch
      %80 = sbr.rel (0) target = $region93
    $region92: #{speech_recognition_forward.1} parent=1 // pred_region
      _
    $region93: #{speech_recognition_forward.1} parent=1 // pred_fallthru
      _
    // Predicated region
    $region94: #{speech_recognition_forward.1} parent=1 // pred_check
      _
    $region95: #{speech_recognition_forward.1} parent=1 // pred_check_branch
      %82 = sbr.rel (0) target = $region97
    $region96: #{speech_recognition_forward.1} parent=1 // pred_region
      _
    $region97: #{speech_recognition_forward.1} parent=1 // pred_fallthru
      _
    // Predicated region
    $region98: #{speech_recognition_forward.1} parent=1 // pred_check
      _
    $region99: #{speech_recognition_forward.1} parent=1 // pred_check_branch
      %84 = sbr.rel (0) target = $region101
    $region100: #{speech_recognition_forward.1} parent=1 // pred_region
      _
    $region101: #{speech_recognition_forward.1} parent=1 // pred_fallthru
      _
    %v85 = vld [vmem:[%s0] sm:$0xff]
    %v86 = vld [vmem:[%s0 + $0x8] sm:$0xff]
    %v87 = vld [vmem:[%s0 + $0x10] sm:$0xff]
    %v88 = vld [vmem:[%s0 + $0x18] sm:$0xff]
    %v89 = vld [vmem:[%s0 + $0x20] sm:$0xff]
    %v90 = vld [vmem:[%s0 + $0x28] sm:$0xff]
    %v91 = vld [vmem:[%s1] sm:$0xff]
    %v92 = vld [vmem:[%s1 + $0x8] sm:$0xff]
    %v93 = vld [vmem:[%s1 + $0x10] sm:$0xff]
    %v94 = vld [vmem:[%s1 + $0x18] sm:$0xff]
    %v95 = vld [vmem:[%s1 + $0x20] sm:$0xff]
    %v96 = vld [vmem:[%s1 + $0x28] sm:$0xff]
    %v97 = vld [vmem:[%s1 + $0x30] sm:$0xff]
    %v98 = vld [vmem:[%s1 + $0x38] sm:$0xff]
    %v99 = vld [vmem:[%s1 + $0x40] sm:$0xff]
    %v100 = vld [vmem:[%s1 + $0x48] sm:$0xff]
    %v101 = vld [vmem:[%s1 + $0x50] sm:$0xff]
    %v102 = vld [vmem:[%s1 + $0x58] sm:$0xff]
    %v103 = vld [vmem:[%s1 + $0x60] sm:$0xff]
    %v104 = vld [vmem:[%s1 + $0x68] sm:$0xff]
    %v105 = vld [vmem:[%s1 + $0x70] sm:$0xff]
    %v106 = vld [vmem:[%s1 + $0x78] sm:$0xff]
    %v107 = vld [vmem:[%s1 + $0x80] sm:$0xff]
    %v108 = vld [vmem:[%s1 + $0x88] sm:$0xff]
    %v109 = vld [vmem:[%s1 + $0x90] sm:$0xff]
    %v110 = vld [vmem:[%s1 + $0x98] sm:$0xff]
    %v111 = vld [vmem:[%s2] sm:$0x1]
    %v113 = vlaneseq
    %v114 = vshrl.u32 %v113, 7
    %v115 = vsub.s32 0, %v114
    %v116 = vrot.slane %v111, %v115
    %vm118 = vcmask 261120
    %v120 = vsel %vm118, %v86, 0
    %v123 = vsel %vm118, %v88, 0
    %v126 = vsel %vm118, %v90, 0
    %128 = vmatprep.subr.mxu0 0.0
    %129 = vmatpush1.msra.mxu0 %v91
    %130 = vmatprep.subr.mxu0 0.0
    %131 = vmatpush1.msra.mxu0 %v92
    %132 = vmatprep.subr.mxu0 0.0
    %133 = vmatpush1.msra.mxu0 %v93
    %134 = vmatprep.subr.mxu0 0.0
    %135 = vmatpush1.msra.mxu0 %v94
    %136 = vmatprep.subr.mxu0 0.0
    %137 = vmatpush1.msra.mxu0 %v95
    %138 = vmatprep.subr.mxu0 0.0
    %139 = vmatpush1.msra.mxu0 %v96
    %140 = vmatprep.subr.mxu0 0.0
    %141 = vmatpush1.msra.mxu0 %v97
    %142 = vmatprep.subr.mxu0 0.0
    %143 = vmatpush1.msra.mxu0 %v98
    %144 = vmatprep.subr.mxu0 0.0
    %145 = vmatpush1.msra.mxu0 %v99
    %146 = vmatprep.subr.mxu0 0.0
    %147 = vmatpush1.msra.mxu0 %v100
    %148 = vmatprep.subr.mxu0 0.0
    %149 = vmatpush1.msra.mxu0 %v101
    %150 = vmatprep.subr.mxu0 0.0
    %151 = vmatpush1.msra.mxu0 %v102
    %152 = vmatprep.subr.mxu0 0.0
    %153 = vmatpush1.msra.mxu0 %v103
    %154 = vmatprep.subr.mxu0 0.0
    %155 = vmatpush1.msra.mxu0 %v104
    %156 = vmatprep.subr.mxu0 0.0
    %157 = vmatpush1.msra.mxu0 %v105
    %158 = vmatprep.subr.mxu0 0.0
    %159 = vmatpush1.msra.mxu0 %v106
    %160 = vmatprep.subr.mxu0 0.0
    %161 = vmatpush1.msra.mxu0 %v107
    %162 = vmatprep.subr.mxu0 0.0
    %163 = vmatpush1.msra.mxu0 %v108
    %164 = vmatprep.subr.mxu0 0.0
    %165 = vmatpush1.msra.mxu0 %v109
    %166 = vmatprep.subr.mxu0 0.0
    %167 = vmatpush1.msra.mxu0 %v110
    %168 = vmatprep.subr.mxu0 0.0
    %169 = vmatpush1.msra.mxu0 0.0
    %170 = vmatprep.subr.mxu0 0.0
    %171 = vmatpush1.msra.mxu0 0.0
    %172 = vmatprep.subr.mxu0 0.0
    %173 = vmatpush1.msra.mxu0 0.0
    %174 = vmatprep.subr.mxu0 0.0
    %175 = vmatpush1.msra.mxu0 0.0
    %176 = vmatprep.subr.mxu0 0.0
    %177 = vmatpush1.msra.mxu0 0.0
    %178 = vmatprep.subr.mxu0 0.0
    %179 = vmatpush1.msra.mxu0 0.0
    %180 = vmatprep.subr.mxu0 0.0
    %181 = vmatpush1.msra.mxu0 0.0
    %182 = vmatprep.subr.mxu0 0.0
    %183 = vmatpush1.msra.mxu0 0.0
    %184 = vmatprep.subr.mxu0 0.0
    %185 = vmatpush1.msra.mxu0 0.0
    %186 = vmatprep.subr.mxu0 0.0
    %187 = vmatpush1.msra.mxu0 0.0
    %188 = vmatprep.subr.mxu0 0.0
    %189 = vmatpush1.msra.mxu0 0.0
    %190 = vmatprep.subr.mxu0 0.0
    %191 = vmatpush1.msra.mxu0 0.0
    %192 = vmatprep.mubr.f32.mxu0 %v120
    %193 = vmatmul.mubr.f32.gmra.mrb[0].mxu0 %v85
    %v194 = vpop.f32.mrb[0].mxu0
    %v195 = vadd.f32 %v116, %v194
    %v196 = vpop.f32.mrb[0].mxu0
    %197 = vmatprep.mubr.f32.mxu0 %v123
    %198 = vmatmul.mubr.f32.gmra.mrb[0].mxu0 %v87
    %v199 = vpop.f32.mrb[0].mxu0
    %v200 = vadd.f32 %v116, %v199
    %v201 = vpop.f32.mrb[0].mxu0
    %202 = vmatprep.mubr.f32.mxu0 %v126
    %203 = vmatmul.mubr.f32.gmra.mrb[0].mxu0 %v89
    %v204 = vpop.f32.mrb[0].mxu0
    %v205 = vadd.f32 %v116, %v204
    %v206 = vpop.f32.mrb[0].mxu0
    %207 = vdwg.mxu0
    %v208 = vld [vmem:[%s3] sm:$0x1]
    %v209 = vld [vmem:[%s4] sm:$0x1]
    %vm210 = vcmask 130048
    %v211 = vsel %vm210, %v195, 0.0
    %212 = vadd.xlane.f32.xlu0 %v211
    %v213 = vpop.xlane.xlu0 %212
    %v214 = vsel %vm210, %v200, 0.0
    %215 = vadd.xlane.f32.xlu0 %v214
    %v216 = vpop.xlane.xlu0 %215
    %v217 = vsel %vm210, %v205, 0.0
    %218 = vadd.xlane.f32.xlu0 %v217
    %v219 = vpop.xlane.xlu0 %218
    %v220 = vrcp.pop 16.0
    %v221 = vmul.f32 %v213, %v220
    %v222 = vmul.f32 %v216, %v220
    %v223 = vmul.f32 %v219, %v220
    %v224 = vsub.f32 %v195, %v221
    %v225 = vsub.f32 %v200, %v222
    %v226 = vsub.f32 %v205, %v223
    %v227 = vmul.f32 %v224, %v224
    %v228 = vmul.f32 %v225, %v225
    %v229 = vmul.f32 %v226, %v226
    %v230 = vsel %vm210, %v227, 0.0
    %231 = vadd.xlane.f32.xlu0 %v230
    %v232 = vpop.xlane.xlu0 %231
    %v233 = vsel %vm210, %v228, 0.0
    %234 = vadd.xlane.f32.xlu0 %v233
    %v235 = vpop.xlane.xlu0 %234
    %v236 = vsel %vm210, %v229, 0.0
    %237 = vadd.xlane.f32.xlu0 %v236
    %v238 = vpop.xlane.xlu0 %237
    %v239 = vmul.f32 %v232, %v220
    %v240 = vmul.f32 %v235, %v220
    %v241 = vmul.f32 %v238, %v220
    %v242 = vadd.f32 %v239, 1e-05
    %v243 = vadd.f32 %v240, 1e-05
    %v244 = vadd.f32 %v241, 1e-05
    %v245 = vrsqrt.pop %v242
    %v246 = vrsqrt.pop %v243
    %v247 = vrsqrt.pop %v244
    %v248 = vmul.f32 %v224, %v245
    %v249 = vmul.f32 %v225, %v246
    %v250 = vmul.f32 %v226, %v247
    %v252 = vlaneseq
    %v253 = vshrl.u32 %v252, 7
    %v254 = vsub.s32 0, %v253
    %v255 = vrot.slane %v208, %v254
    %v257 = vmul.f32 %v248, %v255
    %v258 = vmul.f32 %v249, %v255
    %v259 = vmul.f32 %v250, %v255
    %v261 = vlaneseq
    %v262 = vshrl.u32 %v261, 7
    %v263 = vsub.s32 0, %v262
    %v264 = vrot.slane %v209, %v263
    %v266 = vadd.f32 %v257, %v264
    %v267 = vadd.f32 %v258, %v264
    %v268 = vadd.f32 %v259, %v264
    %v269 = vmul.f32 %v266, 0.5
    %v270 = vmul.f32 %v267, 0.5
    %v271 = vmul.f32 %v268, 0.5
    %v272 = vmul.f32 %v266, 0.70710677
    %v273 = vmul.f32 %v267, 0.70710677
    %v274 = vmul.f32 %v268, 0.70710677
    %vm275 = vcmp.ge.f32.partialorder %v272, 0.0
    %vm276 = vcmp.ge.f32.partialorder %v273, 0.0
    %vm277 = vcmp.ge.f32.partialorder %v274, 0.0
    %v278 = vsel %vm275, 1.0, -1.0
    %v279 = vsel %vm276, 1.0, -1.0
    %v280 = vsel %vm277, 1.0, -1.0
    %v281 = vand.u32 2147483647, %v272
    %v282 = vand.u32 2147483647, %v273
    %v283 = vand.u32 2147483647, %v274
    %v284 = vmul.f32 %v281, 0.3275911
    %v285 = vmul.f32 %v282, 0.3275911
    %v286 = vmul.f32 %v283, 0.3275911
    %v287 = vadd.f32 %v284, 1.0
    %v288 = vadd.f32 %v285, 1.0
    %v289 = vadd.f32 %v286, 1.0
    %v290 = vrcp.pop %v287
    %v291 = vmul.f32 1.0, %v290
    %v292 = vrcp.pop %v288
    %v293 = vmul.f32 1.0, %v292
    %v294 = vrcp.pop %v289
    %v295 = vmul.f32 1.0, %v294
    %v296 = vmul.f32 %v291, 1.0614054
    %v297 = vmul.f32 %v293, 1.0614054
    %v298 = vmul.f32 %v295, 1.0614054
    %v299 = vadd.f32 %v296, -1.4531521
    %v300 = vadd.f32 %v297, -1.4531521
    %v301 = vadd.f32 %v298, -1.4531521
    %v302 = vmul.f32 %v299, %v291
    %v303 = vmul.f32 %v300, %v293
    %v304 = vmul.f32 %v301, %v295
    %v305 = vadd.f32 %v302, 1.4214138
    %v306 = vadd.f32 %v303, 1.4214138
    %v307 = vadd.f32 %v304, 1.4214138
    %v308 = vmul.f32 %v305, %v291
    %v309 = vmul.f32 %v306, %v293
    %v310 = vmul.f32 %v307, %v295
    %v311 = vadd.f32 %v308, -0.28449672
    %v312 = vadd.f32 %v309, -0.28449672
    %v313 = vadd.f32 %v310, -0.28449672
    %v314 = vmul.f32 %v311, %v291
    %v315 = vmul.f32 %v312, %v293
    %v316 = vmul.f32 %v313, %v295
    %v317 = vadd.f32 %v314, 0.2548296
    %v318 = vadd.f32 %v315, 0.2548296
    %v319 = vadd.f32 %v316, 0.2548296
    %v320 = vmul.f32 %v317, %v291
    %v321 = vmul.f32 %v318, %v293
    %v322 = vmul.f32 %v319, %v295
    %v323 = vsub.f32 0.0, %v281
    %v324 = vsub.f32 0.0, %v282
    %v325 = vsub.f32 0.0, %v283
    %v326 = vmul.f32 %v323, %v281
    %v327 = vmul.f32 %v324, %v282
    %v328 = vmul.f32 %v325, %v283
    %v329 = vmul.f32 %v326, 1.442695
    %v330 = vpow.pop %v329
    %v331 = vmul.f32 %v327, 1.442695
    %v332 = vpow.pop %v331
    %v333 = vmul.f32 %v328, 1.442695
    %v334 = vpow.pop %v333
    %v335 = vmul.f32 %v320, %v330
    %v336 = vmul.f32 %v321, %v332
    %v337 = vmul.f32 %v322, %v334
    %v338 = vsub.f32 1.0, %v335
    %v339 = vsub.f32 1.0, %v336
    %v340 = vsub.f32 1.0, %v337
    %v341 = vmul.f32 %v278, %v338
    %v342 = vmul.f32 %v279, %v339
    %v343 = vmul.f32 %v280, %v340
    %v344 = vadd.f32 %v341, 1.0
    %v345 = vadd.f32 %v342, 1.0
    %v346 = vadd.f32 %v343, 1.0
    %v347 = vmul.f32 %v269, %v344
    %v348 = vmul.f32 %v270, %v345
    %v349 = vmul.f32 %v271, %v346
    %v350 = vld [vmem:[%s5] sm:$0xff]
    %v351 = vld [vmem:[%s5 + $0x8] sm:$0xff]
    %v352 = vld [vmem:[%s6] sm:$0x1]
    %v354 = vlaneseq
    %v355 = vshrl.u32 %v354, 7
    %v356 = vsub.s32 0, %v355
    %v357 = vrot.slane %v352, %v356
    %v360 = vsel %vm210, %v347, 0
    %v363 = vsel %vm210, %v348, 0
    %v366 = vsel %vm210, %v349, 0
    %368 = vmatprep.subr.mxu0 0.0
    %369 = vmatpush1.msra.mxu0 %v350
    %370 = vmatprep.subr.mxu0 0.0
    %371 = vmatpush1.msra.mxu0 %v351
    %372 = vmatprep.subr.mxu0 0.0
    %373 = vmatpush1.msra.mxu0 0.0
    %374 = vmatprep.subr.mxu0 0.0
    %375 = vmatpush1.msra.mxu0 0.0
    %376 = vmatprep.subr.mxu0 0.0
    %377 = vmatpush1.msra.mxu0 0.0
    %378 = vmatprep.subr.mxu0 0.0
    %379 = vmatpush1.msra.mxu0 0.0
    %380 = vmatprep.subr.mxu0 0.0
    %381 = vmatpush1.msra.mxu0 0.0
    %382 = vmatprep.subr.mxu0 0.0
    %383 = vmatpush1.msra.mxu0 0.0
    %384 = vmatprep.subr.mxu0 0.0
    %385 = vmatpush1.msra.mxu0 0.0
    %386 = vmatprep.subr.mxu0 0.0
    %387 = vmatpush1.msra.mxu0 0.0
    %388 = vmatprep.subr.mxu0 0.0
    %389 = vmatpush1.msra.mxu0 0.0
    %390 = vmatprep.subr.mxu0 0.0
    %391 = vmatpush1.msra.mxu0 0.0
    %392 = vmatprep.subr.mxu0 0.0
    %393 = vmatpush1.msra.mxu0 0.0
    %394 = vmatprep.subr.mxu0 0.0
    %395 = vmatpush1.msra.mxu0 0.0
    %396 = vmatprep.subr.mxu0 0.0
    %397 = vmatpush1.msra.mxu0 0.0
    %398 = vmatprep.subr.mxu0 0.0
    %399 = vmatpush1.msra.mxu0 0.0
    %400 = vmatprep.subr.mxu0 0.0
    %401 = vmatpush1.msra.mxu0 0.0
    %402 = vmatprep.subr.mxu0 0.0
    %403 = vmatpush1.msra.mxu0 0.0
    %404 = vmatprep.subr.mxu0 0.0
    %405 = vmatpush1.msra.mxu0 0.0
    %406 = vmatprep.subr.mxu0 0.0
    %407 = vmatpush1.msra.mxu0 0.0
    %408 = vmatprep.subr.mxu0 0.0
    %409 = vmatpush1.msra.mxu0 0.0
    %410 = vmatprep.subr.mxu0 0.0
    %411 = vmatpush1.msra.mxu0 0.0
    %412 = vmatprep.subr.mxu0 0.0
    %413 = vmatpush1.msra.mxu0 0.0
    %414 = vmatprep.subr.mxu0 0.0
    %415 = vmatpush1.msra.mxu0 0.0
    %416 = vmatprep.subr.mxu0 0.0
    %417 = vmatpush1.msra.mxu0 0.0
    %418 = vmatprep.subr.mxu0 0.0
    %419 = vmatpush1.msra.mxu0 0.0
    %420 = vmatprep.subr.mxu0 0.0
    %421 = vmatpush1.msra.mxu0 0.0
    %422 = vmatprep.subr.mxu0 0.0
    %423 = vmatpush1.msra.mxu0 0.0
    %424 = vmatprep.subr.mxu0 0.0
    %425 = vmatpush1.msra.mxu0 0.0
    %426 = vmatprep.subr.mxu0 0.0
    %427 = vmatpush1.msra.mxu0 0.0
    %428 = vmatprep.subr.mxu0 0.0
    %429 = vmatpush1.msra.mxu0 0.0
    %430 = vmatprep.subr.mxu0 0.0
    %431 = vmatpush1.msra.mxu0 0.0
    %432 = vmatprep.mubr.f32.mxu0 0.0
    %433 = vmatmul.mubr.f32.gmra.mrb[0].mxu0 %v360
    %v434 = vpop.f32.mrb[0].mxu0
    %v435 = vadd.f32 %v357, %v434
    %v436 = vpop.f32.mrb[0].mxu0
    %437 = vmatprep.mubr.f32.mxu0 0.0
    %438 = vmatmul.mubr.f32.gmra.mrb[0].mxu0 %v363
    %v439 = vpop.f32.mrb[0].mxu0
    %v440 = vadd.f32 %v357, %v439
    %v441 = vpop.f32.mrb[0].mxu0
    %442 = vmatprep.mubr.f32.mxu0 0.0
    %443 = vmatmul.mubr.f32.gmra.mrb[0].mxu0 %v366
    %v444 = vpop.f32.mrb[0].mxu0
    %v445 = vadd.f32 %v357, %v444
    %v446 = vpop.f32.mrb[0].mxu0
    %447 = vdwg.mxu0
    %v448 = vld [vmem:[%s7] sm:$0x1]
    %v449 = vld [vmem:[%s8] sm:$0x1]
    %450 = vadd.xlane.f32.xlu0 %v435
    %v451 = vpop.xlane.xlu0 %450
    %452 = vadd.xlane.f32.xlu0 %v440
    %v453 = vpop.xlane.xlu0 %452
    %454 = vadd.xlane.f32.xlu0 %v445
    %v455 = vpop.xlane.xlu0 %454
    %v456 = vrcp.pop 128.0
    %v457 = vmul.f32 %v451, %v456
    %v458 = vmul.f32 %v453, %v456
    %v459 = vmul.f32 %v455, %v456
    %v460 = vsub.f32 %v435, %v457
    %v461 = vsub.f32 %v440, %v458
    %v462 = vsub.f32 %v445, %v459
    %v463 = vmul.f32 %v460, %v460
    %v464 = vmul.f32 %v461, %v461
    %v465 = vmul.f32 %v462, %v462
    %466 = vadd.xlane.f32.xlu0 %v463
    %v467 = vpop.xlane.xlu0 %466
    %468 = vadd.xlane.f32.xlu0 %v464
    %v469 = vpop.xlane.xlu0 %468
    %470 = vadd.xlane.f32.xlu0 %v465
    %v471 = vpop.xlane.xlu0 %470
    %v472 = vmul.f32 %v467, %v456
    %v473 = vmul.f32 %v469, %v456
    %v474 = vmul.f32 %v471, %v456
    %v475 = vadd.f32 %v472, 1e-05
    %v476 = vadd.f32 %v473, 1e-05
    %v477 = vadd.f32 %v474, 1e-05
    %v478 = vrsqrt.pop %v475
    %v479 = vrsqrt.pop %v476
    %v480 = vrsqrt.pop %v477
    %v481 = vmul.f32 %v460, %v478
    %v482 = vmul.f32 %v461, %v479
    %v483 = vmul.f32 %v462, %v480
    %v485 = vlaneseq
    %v486 = vshrl.u32 %v485, 7
    %v487 = vsub.s32 0, %v486
    %v488 = vrot.slane %v448, %v487
    %v490 = vmul.f32 %v481, %v488
    %v491 = vmul.f32 %v482, %v488
    %v492 = vmul.f32 %v483, %v488
    %v494 = vlaneseq
    %v495 = vshrl.u32 %v494, 7
    %v496 = vsub.s32 0, %v495
    %v497 = vrot.slane %v449, %v496
    %v499 = vadd.f32 %v490, %v497
    %v500 = vadd.f32 %v491, %v497
    %v501 = vadd.f32 %v492, %v497
    %v502 = vmul.f32 %v499, 0.5
    %v503 = vmul.f32 %v500, 0.5
    %v504 = vmul.f32 %v501, 0.5
    %v505 = vmul.f32 %v499, 0.70710677
    %v506 = vmul.f32 %v500, 0.70710677
    %v507 = vmul.f32 %v501, 0.70710677
    %vm508 = vcmp.ge.f32.partialorder %v505, 0.0
    %vm509 = vcmp.ge.f32.partialorder %v506, 0.0
    %vm510 = vcmp.ge.f32.partialorder %v507, 0.0
    %v511 = vsel %vm508, 1.0, -1.0
    %v512 = vsel %vm509, 1.0, -1.0
    %v513 = vsel %vm510, 1.0, -1.0
    %v514 = vand.u32 2147483647, %v505
    %v515 = vand.u32 2147483647, %v506
    %v516 = vand.u32 2147483647, %v507
    %v517 = vmul.f32 %v514, 0.3275911
    %v518 = vmul.f32 %v515, 0.3275911
    %v519 = vmul.f32 %v516, 0.3275911
    %v520 = vadd.f32 %v517, 1.0
    %v521 = vadd.f32 %v518, 1.0
    %v522 = vadd.f32 %v519, 1.0
    %v523 = vrcp.pop %v520
    %v524 = vmul.f32 1.0, %v523
    %v525 = vrcp.pop %v521
    %v526 = vmul.f32 1.0, %v525
    %v527 = vrcp.pop %v522
    %v528 = vmul.f32 1.0, %v527
    %v529 = vmul.f32 %v524, 1.0614054
    %v530 = vmul.f32 %v526, 1.0614054
    %v531 = vmul.f32 %v528, 1.0614054
    %v532 = vadd.f32 %v529, -1.4531521
    %v533 = vadd.f32 %v530, -1.4531521
    %v534 = vadd.f32 %v531, -1.4531521
    %v535 = vmul.f32 %v532, %v524
    %v536 = vmul.f32 %v533, %v526
    %v537 = vmul.f32 %v534, %v528
    %v538 = vadd.f32 %v535, 1.4214138
    %v539 = vadd.f32 %v536, 1.4214138
    %v540 = vadd.f32 %v537, 1.4214138
    %v541 = vmul.f32 %v538, %v524
    %v542 = vmul.f32 %v539, %v526
    %v543 = vmul.f32 %v540, %v528
    %v544 = vadd.f32 %v541, -0.28449672
    %v545 = vadd.f32 %v542, -0.28449672
    %v546 = vadd.f32 %v543, -0.28449672
    %v547 = vmul.f32 %v544, %v524
    %v548 = vmul.f32 %v545, %v526
    %v549 = vmul.f32 %v546, %v528
    %v550 = vadd.f32 %v547, 0.2548296
    %v551 = vadd.f32 %v548, 0.2548296
    %v552 = vadd.f32 %v549, 0.2548296
    %v553 = vmul.f32 %v550, %v524
    %v554 = vmul.f32 %v551, %v526
    %v555 = vmul.f32 %v552, %v528
    %v556 = vsub.f32 0.0, %v514
    %v557 = vsub.f32 0.0, %v515
    %v558 = vsub.f32 0.0, %v516
    %v559 = vmul.f32 %v556, %v514
    %v560 = vmul.f32 %v557, %v515
    %v561 = vmul.f32 %v558, %v516
    %v562 = vmul.f32 %v559, 1.442695
    %v563 = vpow.pop %v562
    %v564 = vmul.f32 %v560, 1.442695
    %v565 = vpow.pop %v564
    %v566 = vmul.f32 %v561, 1.442695
    %v567 = vpow.pop %v566
    %v568 = vmul.f32 %v553, %v563
    %v569 = vmul.f32 %v554, %v565
    %v570 = vmul.f32 %v555, %v567
    %v571 = vsub.f32 1.0, %v568
    %v572 = vsub.f32 1.0, %v569
    %v573 = vsub.f32 1.0, %v570
    %v574 = vmul.f32 %v511, %v571
    %v575 = vmul.f32 %v512, %v572
    %v576 = vmul.f32 %v513, %v573
    %v577 = vadd.f32 %v574, 1.0
    %v578 = vadd.f32 %v575, 1.0
    %v579 = vadd.f32 %v576, 1.0
    %v580 = vmul.f32 %v502, %v577
    %v581 = vmul.f32 %v503, %v578
    %v582 = vmul.f32 %v504, %v579
    %v583 = vld [vmem:[%s9] sm:$0xff]
    %v584 = vld [vmem:[%s9 + $0x8] sm:$0xff]
    %v585 = vld [vmem:[%s9 + $0x10] sm:$0xff]
    %v586 = vld [vmem:[%s9 + $0x18] sm:$0xff]
    %v587 = vld [vmem:[%s9 + $0x20] sm:$0xff]
    %v588 = vld [vmem:[%s9 + $0x28] sm:$0xff]
    %v589 = vld [vmem:[%s9 + $0x30] sm:$0xff]
    %v590 = vld [vmem:[%s9 + $0x38] sm:$0xff]
    %v591 = vld [vmem:[%s9 + $0x40] sm:$0xff]
    %v592 = vld [vmem:[%s9 + $0x48] sm:$0xff]
    %v593 = vld [vmem:[%s9 + $0x50] sm:$0xff]
    %v594 = vld [vmem:[%s9 + $0x58] sm:$0xff]
    %v595 = vld [vmem:[%s9 + $0x60] sm:$0xff]
    %v596 = vld [vmem:[%s9 + $0x68] sm:$0xff]
    %v597 = vld [vmem:[%s9 + $0x70] sm:$0xff]
    %v598 = vld [vmem:[%s9 + $0x78] sm:$0xff]
    %v599 = vld [vmem:[%s10] sm:$0x1]
    %v601 = vlaneseq
    %v602 = vshrl.u32 %v601, 7
    %v603 = vsub.s32 0, %v602
    %v604 = vrot.slane %v599, %v603
    %606 = vmatprep.subr.mxu0 0.0
    %607 = vmatpush1.msra.mxu0 %v583
    %608 = vmatprep.subr.mxu0 0.0
    %609 = vmatpush1.msra.mxu0 %v584
    %610 = vmatprep.subr.mxu0 0.0
    %611 = vmatpush1.msra.mxu0 %v585
    %612 = vmatprep.subr.mxu0 0.0
    %613 = vmatpush1.msra.mxu0 %v586
    %614 = vmatprep.subr.mxu0 0.0
    %615 = vmatpush1.msra.mxu0 %v587
    %616 = vmatprep.subr.mxu0 0.0
    %617 = vmatpush1.msra.mxu0 %v588
    %618 = vmatprep.subr.mxu0 0.0
    %619 = vmatpush1.msra.mxu0 %v589
    %620 = vmatprep.subr.mxu0 0.0
    %621 = vmatpush1.msra.mxu0 %v590
    %622 = vmatprep.subr.mxu0 0.0
    %623 = vmatpush1.msra.mxu0 %v591
    %624 = vmatprep.subr.mxu0 0.0
    %625 = vmatpush1.msra.mxu0 %v592
    %626 = vmatprep.subr.mxu0 0.0
    %627 = vmatpush1.msra.mxu0 %v593
    %628 = vmatprep.subr.mxu0 0.0
    %629 = vmatpush1.msra.mxu0 %v594
    %630 = vmatprep.subr.mxu0 0.0
    %631 = vmatpush1.msra.mxu0 %v595
    %632 = vmatprep.subr.mxu0 0.0
    %633 = vmatpush1.msra.mxu0 %v596
    %634 = vmatprep.subr.mxu0 0.0
    %635 = vmatpush1.msra.mxu0 %v597
    %636 = vmatprep.subr.mxu0 0.0
    %637 = vmatpush1.msra.mxu0 %v598
    %638 = vmatprep.subr.mxu0 0.0
    %639 = vmatpush1.msra.mxu0 0.0
    %640 = vmatprep.subr.mxu0 0.0
    %641 = vmatpush1.msra.mxu0 0.0
    %642 = vmatprep.subr.mxu0 0.0
    %643 = vmatpush1.msra.mxu0 0.0
    %644 = vmatprep.subr.mxu0 0.0
    %645 = vmatpush1.msra.mxu0 0.0
    %646 = vmatprep.subr.mxu0 0.0
    %647 = vmatpush1.msra.mxu0 0.0
    %648 = vmatprep.subr.mxu0 0.0
    %649 = vmatpush1.msra.mxu0 0.0
    %650 = vmatprep.subr.mxu0 0.0
    %651 = vmatpush1.msra.mxu0 0.0
    %652 = vmatprep.subr.mxu0 0.0
    %653 = vmatpush1.msra.mxu0 0.0
    %654 = vmatprep.subr.mxu0 0.0
    %655 = vmatpush1.msra.mxu0 0.0
    %656 = vmatprep.subr.mxu0 0.0
    %657 = vmatpush1.msra.mxu0 0.0
    %658 = vmatprep.subr.mxu0 0.0
    %659 = vmatpush1.msra.mxu0 0.0
    %660 = vmatprep.subr.mxu0 0.0
    %661 = vmatpush1.msra.mxu0 0.0
    %662 = vmatprep.subr.mxu0 0.0
    %663 = vmatpush1.msra.mxu0 0.0
    %664 = vmatprep.subr.mxu0 0.0
    %665 = vmatpush1.msra.mxu0 0.0
    %666 = vmatprep.subr.mxu0 0.0
    %667 = vmatpush1.msra.mxu0 0.0
    %668 = vmatprep.subr.mxu0 0.0
    %669 = vmatpush1.msra.mxu0 0.0
    %670 = vmatprep.mubr.f32.mxu0 0.0
    %671 = vmatmul.mubr.f32.gmra.mrb[0].mxu0 %v580
    %v672 = vpop.f32.mrb[0].mxu0
    %v673 = vadd.f32 %v604, %v672
    %v674 = vpop.f32.mrb[0].mxu0
    %675 = vmatprep.mubr.f32.mxu0 0.0
    %676 = vmatmul.mubr.f32.gmra.mrb[0].mxu0 %v581
    %v677 = vpop.f32.mrb[0].mxu0
    %v678 = vadd.f32 %v604, %v677
    %v679 = vpop.f32.mrb[0].mxu0
    %680 = vmatprep.mubr.f32.mxu0 0.0
    %681 = vmatmul.mubr.f32.gmra.mrb[0].mxu0 %v582
    %v682 = vpop.f32.mrb[0].mxu0
    %v683 = vadd.f32 %v604, %v682
    %v684 = vpop.f32.mrb[0].mxu0
    %685 = vdwg.mxu0
    %v686 = vld [vmem:[%s11] sm:$0x1]
    %v687 = vld [vmem:[%s12] sm:$0x1]
    %688 = vadd.xlane.f32.xlu0 %v673
    %v689 = vpop.xlane.xlu0 %688
    %690 = vadd.xlane.f32.xlu0 %v678
    %v691 = vpop.xlane.xlu0 %690
    %692 = vadd.xlane.f32.xlu0 %v683
    %v693 = vpop.xlane.xlu0 %692
    %v694 = vmul.f32 %v689, %v456
    %v695 = vmul.f32 %v691, %v456
    %v696 = vmul.f32 %v693, %v456
    %v697 = vsub.f32 %v673, %v694
    %v698 = vsub.f32 %v678, %v695
    %v699 = vsub.f32 %v683, %v696
    %v700 = vmul.f32 %v697, %v697
    %v701 = vmul.f32 %v698, %v698
    %v702 = vmul.f32 %v699, %v699
    %703 = vadd.xlane.f32.xlu0 %v700
    %v704 = vpop.xlane.xlu0 %703
    %705 = vadd.xlane.f32.xlu0 %v701
    %v706 = vpop.xlane.xlu0 %705
    %707 = vadd.xlane.f32.xlu0 %v702
    %v708 = vpop.xlane.xlu0 %707
    %v709 = vmul.f32 %v704, %v456
    %v710 = vmul.f32 %v706, %v456
    %v711 = vmul.f32 %v708, %v456
    %v712 = vadd.f32 %v709, 1e-05
    %v713 = vadd.f32 %v710, 1e-05
    %v714 = vadd.f32 %v711, 1e-05
    %v715 = vrsqrt.pop %v712
    %v716 = vrsqrt.pop %v713
    %v717 = vrsqrt.pop %v714
    %v718 = vmul.f32 %v697, %v715
    %v719 = vmul.f32 %v698, %v716
    %v720 = vmul.f32 %v699, %v717
    %v722 = vlaneseq
    %v723 = vshrl.u32 %v722, 7
    %v724 = vsub.s32 0, %v723
    %v725 = vrot.slane %v686, %v724
    %v727 = vmul.f32 %v718, %v725
    %v728 = vmul.f32 %v719, %v725
    %v729 = vmul.f32 %v720, %v725
    %v731 = vlaneseq
    %v732 = vshrl.u32 %v731, 7
    %v733 = vsub.s32 0, %v732
    %v734 = vrot.slane %v687, %v733
    %v736 = vadd.f32 %v727, %v734
    %v737 = vadd.f32 %v728, %v734
    %v738 = vadd.f32 %v729, %v734
    %v739 = vmul.f32 %v736, 0.5
    %v740 = vmul.f32 %v737, 0.5
    %v741 = vmul.f32 %v738, 0.5
    %v742 = vmul.f32 %v736, 0.70710677
    %v743 = vmul.f32 %v737, 0.70710677
    %v744 = vmul.f32 %v738, 0.70710677
    %vm745 = vcmp.ge.f32.partialorder %v742, 0.0
    %vm746 = vcmp.ge.f32.partialorder %v743, 0.0
    %vm747 = vcmp.ge.f32.partialorder %v744, 0.0
    %v748 = vsel %vm745, 1.0, -1.0
    %v749 = vsel %vm746, 1.0, -1.0
    %v750 = vsel %vm747, 1.0, -1.0
    %v751 = vand.u32 2147483647, %v742
    %v752 = vand.u32 2147483647, %v743
    %v753 = vand.u32 2147483647, %v744
    %v754 = vmul.f32 %v751, 0.3275911
    %v755 = vmul.f32 %v752, 0.3275911
    %v756 = vmul.f32 %v753, 0.3275911
    %v757 = vadd.f32 %v754, 1.0
    %v758 = vadd.f32 %v755, 1.0
    %v759 = vadd.f32 %v756, 1.0
    %v760 = vrcp.pop %v757
    %v761 = vmul.f32 1.0, %v760
    %v762 = vrcp.pop %v758
    %v763 = vmul.f32 1.0, %v762
    %v764 = vrcp.pop %v759
    %v765 = vmul.f32 1.0, %v764
    %v766 = vmul.f32 %v761, 1.0614054
    %v767 = vmul.f32 %v763, 1.0614054
    %v768 = vmul.f32 %v765, 1.0614054
    %v769 = vadd.f32 %v766, -1.4531521
    %v770 = vadd.f32 %v767, -1.4531521
    %v771 = vadd.f32 %v768, -1.4531521
    %v772 = vmul.f32 %v769, %v761
    %v773 = vmul.f32 %v770, %v763
    %v774 = vmul.f32 %v771, %v765
    %v775 = vadd.f32 %v772, 1.4214138
    %v776 = vadd.f32 %v773, 1.4214138
    %v777 = vadd.f32 %v774, 1.4214138
    %v778 = vmul.f32 %v775, %v761
    %v779 = vmul.f32 %v776, %v763
    %v780 = vmul.f32 %v777, %v765
    %v781 = vadd.f32 %v778, -0.28449672
    %v782 = vadd.f32 %v779, -0.28449672
    %v783 = vadd.f32 %v780, -0.28449672
    %v784 = vmul.f32 %v781, %v761
    %v785 = vmul.f32 %v782, %v763
    %v786 = vmul.f32 %v783, %v765
    %v787 = vadd.f32 %v784, 0.2548296
    %v788 = vadd.f32 %v785, 0.2548296
    %v789 = vadd.f32 %v786, 0.2548296
    %v790 = vmul.f32 %v787, %v761
    %v791 = vmul.f32 %v788, %v763
    %v792 = vmul.f32 %v789, %v765
    %v793 = vsub.f32 0.0, %v751
    %v794 = vsub.f32 0.0, %v752
    %v795 = vsub.f32 0.0, %v753
    %v796 = vmul.f32 %v793, %v751
    %v797 = vmul.f32 %v794, %v752
    %v798 = vmul.f32 %v795, %v753
    %v799 = vmul.f32 %v796, 1.442695
    %v800 = vpow.pop %v799
    %v801 = vmul.f32 %v797, 1.442695
    %v802 = vpow.pop %v801
    %v803 = vmul.f32 %v798, 1.442695
    %v804 = vpow.pop %v803
    %v805 = vmul.f32 %v790, %v800
    %v806 = vmul.f32 %v791, %v802
    %v807 = vmul.f32 %v792, %v804
    %v808 = vsub.f32 1.0, %v805
    %v809 = vsub.f32 1.0, %v806
    %v810 = vsub.f32 1.0, %v807
    %v811 = vmul.f32 %v748, %v808
    %v812 = vmul.f32 %v749, %v809
    %v813 = vmul.f32 %v750, %v810
    %v814 = vadd.f32 %v811, 1.0
    %v815 = vadd.f32 %v812, 1.0
    %v816 = vadd.f32 %v813, 1.0
    %v817 = vmul.f32 %v739, %v814
    %v818 = vmul.f32 %v740, %v815
    %v819 = vmul.f32 %v741, %v816
    %820 = vst.msk [vmem:[#allocation2] sm:$0xff] %vm118, 0.0
    %821 = vst.msk [vmem:[#allocation2 + $0x8] sm:$0xff] %vm118, 0.0
    %822 = vst.msk [vmem:[#allocation2 + $0x10] sm:$0xff] %vm118, 0.0
    %v823 = vld [vmem:[%s13] sm:$0xff]
    %v824 = vld [vmem:[%s13 + $0x8] sm:$0xff]
    %v825 = vld [vmem:[%s13 + $0x10] sm:$0xff]
    %v826 = vld [vmem:[%s13 + $0x18] sm:$0xff]
    %v827 = vld [vmem:[%s13 + $0x20] sm:$0xff]
    %v828 = vld [vmem:[%s13 + $0x28] sm:$0xff]
    %v829 = vld [vmem:[%s13 + $0x30] sm:$0xff]
    %v830 = vld [vmem:[%s13 + $0x38] sm:$0xff]
    %v831 = vld [vmem:[%s13 + $0x40] sm:$0xff]
    %v832 = vld [vmem:[%s13 + $0x48] sm:$0xff]
    %v833 = vld [vmem:[%s13 + $0x50] sm:$0xff]
    %v834 = vld [vmem:[%s13 + $0x58] sm:$0xff]
    %v835 = vld [vmem:[%s13 + $0x60] sm:$0xff]
    %v836 = vld [vmem:[%s13 + $0x68] sm:$0xff]
    %v837 = vld [vmem:[%s13 + $0x70] sm:$0xff]
    %v838 = vld [vmem:[%s13 + $0x78] sm:$0xff]
    %v839 = vld [vmem:[%s15] sm:$0x1]
    %v841 = vlaneseq
    %v842 = vshrl.u32 %v841, 7
    %v843 = vsub.s32 0, %v842
    %v844 = vrot.slane %v839, %v843
    %846 = vmatprep.subr.mxu0 0.0
    %847 = vmatpush1.msra.mxu0 %v823
    %848 = vmatprep.subr.mxu0 0.0
    %849 = vmatpush1.msra.mxu0 %v824
    %850 = vmatprep.subr.mxu0 0.0
    %851 = vmatpush1.msra.mxu0 %v825
    %852 = vmatprep.subr.mxu0 0.0
    %853 = vmatpush1.msra.mxu0 %v826
    %854 = vmatprep.subr.mxu0 0.0
    %855 = vmatpush1.msra.mxu0 %v827
    %856 = vmatprep.subr.mxu0 0.0
    %857 = vmatpush1.msra.mxu0 %v828
    %858 = vmatprep.subr.mxu0 0.0
    %859 = vmatpush1.msra.mxu0 %v829
    %860 = vmatprep.subr.mxu0 0.0
    %861 = vmatpush1.msra.mxu0 %v830
    %862 = vmatprep.subr.mxu0 0.0
    %863 = vmatpush1.msra.mxu0 %v831
    %864 = vmatprep.subr.mxu0 0.0
    %865 = vmatpush1.msra.mxu0 %v832
    %866 = vmatprep.subr.mxu0 0.0
    %867 = vmatpush1.msra.mxu0 %v833
    %868 = vmatprep.subr.mxu0 0.0
    %869 = vmatpush1.msra.mxu0 %v834
    %870 = vmatprep.subr.mxu0 0.0
    %871 = vmatpush1.msra.mxu0 %v835
    %872 = vmatprep.subr.mxu0 0.0
    %873 = vmatpush1.msra.mxu0 %v836
    %874 = vmatprep.subr.mxu0 0.0
    %875 = vmatpush1.msra.mxu0 %v837
    %876 = vmatprep.subr.mxu0 0.0
    %877 = vmatpush1.msra.mxu0 %v838
    %878 = vmatprep.subr.mxu0 0.0
    %879 = vmatpush1.msra.mxu0 0.0
    %880 = vmatprep.subr.mxu0 0.0
    %881 = vmatpush1.msra.mxu0 0.0
    %882 = vmatprep.subr.mxu0 0.0
    %883 = vmatpush1.msra.mxu0 0.0
    %884 = vmatprep.subr.mxu0 0.0
    %885 = vmatpush1.msra.mxu0 0.0
    %886 = vmatprep.subr.mxu0 0.0
    %887 = vmatpush1.msra.mxu0 0.0
    %888 = vmatprep.subr.mxu0 0.0
    %889 = vmatpush1.msra.mxu0 0.0
    %890 = vmatprep.subr.mxu0 0.0
    %891 = vmatpush1.msra.mxu0 0.0
    %892 = vmatprep.subr.mxu0 0.0
    %893 = vmatpush1.msra.mxu0 0.0
    %894 = vmatprep.subr.mxu0 0.0
    %895 = vmatpush1.msra.mxu0 0.0
    %896 = vmatprep.subr.mxu0 0.0
    %897 = vmatpush1.msra.mxu0 0.0
    %898 = vmatprep.subr.mxu0 0.0
    %899 = vmatpush1.msra.mxu0 0.0
    %900 = vmatprep.subr.mxu0 0.0
    %901 = vmatpush1.msra.mxu0 0.0
    %902 = vmatprep.subr.mxu0 0.0
    %903 = vmatpush1.msra.mxu0 0.0
    %904 = vmatprep.subr.mxu0 0.0
    %905 = vmatpush1.msra.mxu0 0.0
    %906 = vmatprep.subr.mxu0 0.0
    %907 = vmatpush1.msra.mxu0 0.0
    %908 = vmatprep.subr.mxu0 0.0
    %909 = vmatpush1.msra.mxu0 0.0
    %910 = vmatprep.mubr.f32.mxu0 0.0
    %911 = vmatmul.mubr.f32.gmra.mrb[0].mxu0 %v817
    %v912 = vpop.f32.mrb[0].mxu0
    %v913 = vadd.f32 %v844, %v912
    %v914 = vpop.f32.mrb[0].mxu0
    %915 = vmatprep.mubr.f32.mxu0 0.0
    %916 = vmatmul.mubr.f32.gmra.mrb[0].mxu0 %v818
    %v917 = vpop.f32.mrb[0].mxu0
    %v918 = vadd.f32 %v844, %v917
    %v919 = vpop.f32.mrb[0].mxu0
    %920 = vmatprep.mubr.f32.mxu0 0.0
    %921 = vmatmul.mubr.f32.gmra.mrb[0].mxu0 %v819
    %v922 = vpop.f32.mrb[0].mxu0
    %v923 = vadd.f32 %v844, %v922
    %v924 = vpop.f32.mrb[0].mxu0
    %925 = vdwg.mxu0
    %v926 = vld [vmem:[%s19] sm:$0x3]
    %v927 = vld [vmem:[%s20] sm:$0x3]
    %v928 = vld [vmem:[%s14] sm:$0xff]
    %v929 = vld [vmem:[%s14 + $0x8] sm:$0xff]
    %v930 = vld [vmem:[%s14 + $0x10] sm:$0xff]
    %v931 = vld [vmem:[%s14 + $0x18] sm:$0xff]
    %v933 = vsel %vm118, %v926, 0
    %935 = vmatprep.subr.mxu0 0.0
    %936 = vmatpush1.msra.mxu0 %v928
    %937 = vmatprep.subr.mxu0 0.0
    %938 = vmatpush1.msra.mxu0 %v929
    %939 = vmatprep.subr.mxu0 0.0
    %940 = vmatpush1.msra.mxu0 %v930
    %941 = vmatprep.subr.mxu0 0.0
    %942 = vmatpush1.msra.mxu0 %v931
    %943 = vmatprep.subr.mxu0 0.0
    %944 = vmatpush1.msra.mxu0 0.0
    %945 = vmatprep.subr.mxu0 0.0
    %946 = vmatpush1.msra.mxu0 0.0
    %947 = vmatprep.subr.mxu0 0.0
    %948 = vmatpush1.msra.mxu0 0.0
    %949 = vmatprep.subr.mxu0 0.0
    %950 = vmatpush1.msra.mxu0 0.0
    %951 = vmatprep.subr.mxu0 0.0
    %952 = vmatpush1.msra.mxu0 0.0
    %953 = vmatprep.subr.mxu0 0.0
    %954 = vmatpush1.msra.mxu0 0.0
    %955 = vmatprep.subr.mxu0 0.0
    %956 = vmatpush1.msra.mxu0 0.0
    %957 = vmatprep.subr.mxu0 0.0
    %958 = vmatpush1.msra.mxu0 0.0
    %959 = vmatprep.subr.mxu0 0.0
    %960 = vmatpush1.msra.mxu0 0.0
    %961 = vmatprep.subr.mxu0 0.0
    %962 = vmatpush1.msra.mxu0 0.0
    %963 = vmatprep.subr.mxu0 0.0
    %964 = vmatpush1.msra.mxu0 0.0
    %965 = vmatprep.subr.mxu0 0.0
    %966 = vmatpush1.msra.mxu0 0.0
    %967 = vmatprep.subr.mxu0 0.0
    %968 = vmatpush1.msra.mxu0 0.0
    %969 = vmatprep.subr.mxu0 0.0
    %970 = vmatpush1.msra.mxu0 0.0
    %971 = vmatprep.subr.mxu0 0.0
    %972 = vmatpush1.msra.mxu0 0.0
    %973 = vmatprep.subr.mxu0 0.0
    %974 = vmatpush1.msra.mxu0 0.0
    %975 = vmatprep.subr.mxu0 0.0
    %976 = vmatpush1.msra.mxu0 0.0
    %977 = vmatprep.subr.mxu0 0.0
    %978 = vmatpush1.msra.mxu0 0.0
    %979 = vmatprep.subr.mxu0 0.0
    %980 = vmatpush1.msra.mxu0 0.0
    %981 = vmatprep.subr.mxu0 0.0
    %982 = vmatpush1.msra.mxu0 0.0
    %983 = vmatprep.subr.mxu0 0.0
    %984 = vmatpush1.msra.mxu0 0.0
    %985 = vmatprep.subr.mxu0 0.0
    %986 = vmatpush1.msra.mxu0 0.0
    %987 = vmatprep.subr.mxu0 0.0
    %988 = vmatpush1.msra.mxu0 0.0
    %989 = vmatprep.subr.mxu0 0.0
    %990 = vmatpush1.msra.mxu0 0.0
    %991 = vmatprep.subr.mxu0 0.0
    %992 = vmatpush1.msra.mxu0 0.0
    %993 = vmatprep.subr.mxu0 0.0
    %994 = vmatpush1.msra.mxu0 0.0
    %995 = vmatprep.subr.mxu0 0.0
    %996 = vmatpush1.msra.mxu0 0.0
    %997 = vmatprep.subr.mxu0 0.0
    %998 = vmatpush1.msra.mxu0 0.0
    %999 = vmatprep.mubr.f32.mxu0 0.0
    %1000 = vmatmul.mubr.f32.gmra.mrb[0].mxu0 %v933
    %v1001 = vpop.f32.mrb[0].mxu0
    %v1002 = vadd.f32 0.0, %v1001
    %v1003 = vpop.f32.mrb[0].mxu0
    %1004 = vdwg.mxu0
    %v1005 = vadd.f32 %v913, %v1002
    %v1006 = vsub.f32 0.0, %v1005
    %v1007 = vmul.f32 %v1006, 1.442695
    %v1008 = vpow.pop %v1007
    %v1009 = vadd.f32 %v1008, 1.0
    %v1010 = vrcp.pop %v1009
    %v1011 = vmul.f32 1.0, %v1010
    %v1012 = vtanh.pop %v1005
    %1014 = vrot.lane.b32.xlu0 %v927, 32
    %v1015 = vpop.permute.xlu0 %1014
    %v1017 = vmul.f32 %v1011, %v1015
    %1019 = vrot.lane.b32.xlu0 %v1012, 64
    %v1020 = vpop.permute.xlu0 %1019
    %v1022 = vmul.f32 %v1011, %v1020
    %1024 = vrot.lane.b32.xlu0 %v1022, 32
    %v1025 = vpop.permute.xlu0 %1024
    %v1027 = vadd.f32 %v1017, %v1025
    %v1028 = vtanh.pop %v1027
    %1030 = vrot.lane.b32.xlu0 %v1028, 64
    %v1031 = vpop.permute.xlu0 %1030
    %v1033 = vmul.f32 %v1011, %v1031
    %1035 = vrot.lane.b32.xlu0 %v1033, 32
    %v1036 = vpop.permute.xlu0 %1035
    %vm1038 = vcmask 254976
    %1039 = vst.msk [vmem:[#allocation2] sm:$0x3] %vm1038, %v1036
    %v1040 = vld [vmem:[%s14] sm:$0xff]
    %v1041 = vld [vmem:[%s14 + $0x8] sm:$0xff]
    %v1042 = vld [vmem:[%s14 + $0x10] sm:$0xff]
    %v1043 = vld [vmem:[%s14 + $0x18] sm:$0xff]
    %v1044 = vsel %vm118, %v1036, 0
    %1046 = vmatprep.subr.mxu0 0.0
    %1047 = vmatpush1.msra.mxu0 %v1040
    %1048 = vmatprep.subr.mxu0 0.0
    %1049 = vmatpush1.msra.mxu0 %v1041
    %1050 = vmatprep.subr.mxu0 0.0
    %1051 = vmatpush1.msra.mxu0 %v1042
    %1052 = vmatprep.subr.mxu0 0.0
    %1053 = vmatpush1.msra.mxu0 %v1043
    %1054 = vmatprep.subr.mxu0 0.0
    %1055 = vmatpush1.msra.mxu0 0.0
    %1056 = vmatprep.subr.mxu0 0.0
    %1057 = vmatpush1.msra.mxu0 0.0
    %1058 = vmatprep.subr.mxu0 0.0
    %1059 = vmatpush1.msra.mxu0 0.0
    %1060 = vmatprep.subr.mxu0 0.0
    %1061 = vmatpush1.msra.mxu0 0.0
    %1062 = vmatprep.subr.mxu0 0.0
    %1063 = vmatpush1.msra.mxu0 0.0
    %1064 = vmatprep.subr.mxu0 0.0
    %1065 = vmatpush1.msra.mxu0 0.0
    %1066 = vmatprep.subr.mxu0 0.0
    %1067 = vmatpush1.msra.mxu0 0.0
    %1068 = vmatprep.subr.mxu0 0.0
    %1069 = vmatpush1.msra.mxu0 0.0
    %1070 = vmatprep.subr.mxu0 0.0
    %1071 = vmatpush1.msra.mxu0 0.0
    %1072 = vmatprep.subr.mxu0 0.0
    %1073 = vmatpush1.msra.mxu0 0.0
    %1074 = vmatprep.subr.mxu0 0.0
    %1075 = vmatpush1.msra.mxu0 0.0
    %1076 = vmatprep.subr.mxu0 0.0
    %1077 = vmatpush1.msra.mxu0 0.0
    %1078 = vmatprep.subr.mxu0 0.0
    %1079 = vmatpush1.msra.mxu0 0.0
    %1080 = vmatprep.subr.mxu0 0.0
    %1081 = vmatpush1.msra.mxu0 0.0
    %1082 = vmatprep.subr.mxu0 0.0
    %1083 = vmatpush1.msra.mxu0 0.0
    %1084 = vmatprep.subr.mxu0 0.0
    %1085 = vmatpush1.msra.mxu0 0.0
    %1086 = vmatprep.subr.mxu0 0.0
    %1087 = vmatpush1.msra.mxu0 0.0
    %1088 = vmatprep.subr.mxu0 0.0
    %1089 = vmatpush1.msra.mxu0 0.0
    %1090 = vmatprep.subr.mxu0 0.0
    %1091 = vmatpush1.msra.mxu0 0.0
    %1092 = vmatprep.subr.mxu0 0.0
    %1093 = vmatpush1.msra.mxu0 0.0
    %1094 = vmatprep.subr.mxu0 0.0
    %1095 = vmatpush1.msra.mxu0 0.0
    %1096 = vmatprep.subr.mxu0 0.0
    %1097 = vmatpush1.msra.mxu0 0.0
    %1098 = vmatprep.subr.mxu0 0.0
    %1099 = vmatpush1.msra.mxu0 0.0
    %1100 = vmatprep.subr.mxu0 0.0
    %1101 = vmatpush1.msra.mxu0 0.0
    %1102 = vmatprep.subr.mxu0 0.0
    %1103 = vmatpush1.msra.mxu0 0.0
    %1104 = vmatprep.subr.mxu0 0.0
    %1105 = vmatpush1.msra.mxu0 0.0
    %1106 = vmatprep.subr.mxu0 0.0
    %1107 = vmatpush1.msra.mxu0 0.0
    %1108 = vmatprep.subr.mxu0 0.0
    %1109 = vmatpush1.msra.mxu0 0.0
    %1110 = vmatprep.mubr.f32.mxu0 0.0
    %1111 = vmatmul.mubr.f32.gmra.mrb[0].mxu0 %v1044
    %v1112 = vpop.f32.mrb[0].mxu0
    %v1113 = vadd.f32 0.0, %v1112
    %v1114 = vpop.f32.mrb[0].mxu0
    %1115 = vdwg.mxu0
    %v1117 = vrot.slane %v1113, 6
    %v1119 = vadd.f32 %v913, %v1117
    %v1120 = vsub.f32 0.0, %v1119
    %v1121 = vmul.f32 %v1120, 1.442695
    %v1122 = vpow.pop %v1121
    %v1123 = vadd.f32 %v1122, 1.0
    %v1124 = vrcp.pop %v1123
    %v1125 = vmul.f32 1.0, %v1124
    %v1126 = vtanh.pop %v1119
    %v1128 = vrot.slane %v1027, 6
    %v1130 = vmul.f32 %v1125, %v1128
    %1132 = vrot.lane.b32.xlu0 %v1126, 64
    %v1133 = vpop.permute.xlu0 %1132
    %v1135 = vmul.f32 %v1125, %v1133
    %1137 = vrot.lane.b32.xlu0 %v1135, 32
    %v1138 = vpop.permute.xlu0 %1137
    %v1140 = vadd.f32 %v1130, %v1138
    %v1141 = vtanh.pop %v1140
    %1143 = vrot.lane.b32.xlu0 %v1141, 64
    %v1144 = vpop.permute.xlu0 %1143
    %v1146 = vmul.f32 %v1125, %v1144
    %1148 = vrot.lane.b32.xlu0 %v1146, 32
    %v1149 = vpop.permute.xlu0 %1148
    %vm1151 = vcmask 257026
    %1152 = vst.msk [vmem:[#allocation2] sm:$0xc] %vm1151, %v1149
    %v1153 = vld [vmem:[%s14] sm:$0xff]
    %v1154 = vld [vmem:[%s14 + $0x8] sm:$0xff]
    %v1155 = vld [vmem:[%s14 + $0x10] sm:$0xff]
    %v1156 = vld [vmem:[%s14 + $0x18] sm:$0xff]
    %v1157 = vrot.slane %v1146, 2
    %1158 = vrot.lane.b32.xlu0 %v1157, 32
    %v1159 = vpop.permute.xlu0 %1158
    %v1160 = vsel %vm118, %v1159, 0
    %1162 = vmatprep.subr.mxu0 0.0
    %1163 = vmatpush1.msra.mxu0 %v1153
    %1164 = vmatprep.subr.mxu0 0.0
    %1165 = vmatpush1.msra.mxu0 %v1154
    %1166 = vmatprep.subr.mxu0 0.0
    %1167 = vmatpush1.msra.mxu0 %v1155
    %1168 = vmatprep.subr.mxu0 0.0
    %1169 = vmatpush1.msra.mxu0 %v1156
    %1170 = vmatprep.subr.mxu0 0.0
    %1171 = vmatpush1.msra.mxu0 0.0
    %1172 = vmatprep.subr.mxu0 0.0
    %1173 = vmatpush1.msra.mxu0 0.0
    %1174 = vmatprep.subr.mxu0 0.0
    %1175 = vmatpush1.msra.mxu0 0.0
    %1176 = vmatprep.subr.mxu0 0.0
    %1177 = vmatpush1.msra.mxu0 0.0
    %1178 = vmatprep.subr.mxu0 0.0
    %1179 = vmatpush1.msra.mxu0 0.0
    %1180 = vmatprep.subr.mxu0 0.0
    %1181 = vmatpush1.msra.mxu0 0.0
    %1182 = vmatprep.subr.mxu0 0.0
    %1183 = vmatpush1.msra.mxu0 0.0
    %1184 = vmatprep.subr.mxu0 0.0
    %1185 = vmatpush1.msra.mxu0 0.0
    %1186 = vmatprep.subr.mxu0 0.0
    %1187 = vmatpush1.msra.mxu0 0.0
    %1188 = vmatprep.subr.mxu0 0.0
    %1189 = vmatpush1.msra.mxu0 0.0
    %1190 = vmatprep.subr.mxu0 0.0
    %1191 = vmatpush1.msra.mxu0 0.0
    %1192 = vmatprep.subr.mxu0 0.0
    %1193 = vmatpush1.msra.mxu0 0.0
    %1194 = vmatprep.subr.mxu0 0.0
    %1195 = vmatpush1.msra.mxu0 0.0
    %1196 = vmatprep.subr.mxu0 0.0
    %1197 = vmatpush1.msra.mxu0 0.0
    %1198 = vmatprep.subr.mxu0 0.0
    %1199 = vmatpush1.msra.mxu0 0.0
    %1200 = vmatprep.subr.mxu0 0.0
    %1201 = vmatpush1.msra.mxu0 0.0
    %1202 = vmatprep.subr.mxu0 0.0
    %1203 = vmatpush1.msra.mxu0 0.0
    %1204 = vmatprep.subr.mxu0 0.0
    %1205 = vmatpush1.msra.mxu0 0.0
    %1206 = vmatprep.subr.mxu0 0.0
    %1207 = vmatpush1.msra.mxu0 0.0
    %1208 = vmatprep.subr.mxu0 0.0
    %1209 = vmatpush1.msra.mxu0 0.0
    %1210 = vmatprep.subr.mxu0 0.0
    %1211 = vmatpush1.msra.mxu0 0.0
    %1212 = vmatprep.subr.mxu0 0.0
    %1213 = vmatpush1.msra.mxu0 0.0
    %1214 = vmatprep.subr.mxu0 0.0
    %1215 = vmatpush1.msra.mxu0 0.0
    %1216 = vmatprep.subr.mxu0 0.0
    %1217 = vmatpush1.msra.mxu0 0.0
    %1218 = vmatprep.subr.mxu0 0.0
    %1219 = vmatpush1.msra.mxu0 0.0
    %1220 = vmatprep.subr.mxu0 0.0
    %1221 = vmatpush1.msra.mxu0 0.0
    %1222 = vmatprep.subr.mxu0 0.0
    %1223 = vmatpush1.msra.mxu0 0.0
    %1224 = vmatprep.subr.mxu0 0.0
    %1225 = vmatpush1.msra.mxu0 0.0
    %1226 = vmatprep.mubr.f32.mxu0 0.0
    %1227 = vmatmul.mubr.f32.gmra.mrb[0].mxu0 %v1160
    %v1228 = vpop.f32.mrb[0].mxu0
    %v1229 = vadd.f32 0.0, %v1228
    %v1230 = vpop.f32.mrb[0].mxu0
    %1231 = vdwg.mxu0
    %v1233 = vrot.slane %v1229, 4
    %v1235 = vadd.f32 %v913, %v1233
    %v1236 = vsub.f32 0.0, %v1235
    %v1237 = vmul.f32 %v1236, 1.442695
    %v1238 = vpow.pop %v1237
    %v1239 = vadd.f32 %v1238, 1.0
    %v1240 = vrcp.pop %v1239
    %v1241 = vmul.f32 1.0, %v1240
    %v1242 = vtanh.pop %v1235
    %v1244 = vrot.slane %v1140, 6
    %v1246 = vmul.f32 %v1241, %v1244
    %1248 = vrot.lane.b32.xlu0 %v1242, 64
    %v1249 = vpop.permute.xlu0 %1248
    %v1251 = vmul.f32 %v1241, %v1249
    %1253 = vrot.lane.b32.xlu0 %v1251, 32
    %v1254 = vpop.permute.xlu0 %1253
    %v1256 = vadd.f32 %v1246, %v1254
    %v1257 = vtanh.pop %v1256
    %1259 = vrot.lane.b32.xlu0 %v1257, 64
    %v1260 = vpop.permute.xlu0 %1259
    %v1262 = vmul.f32 %v1241, %v1260
    %1264 = vrot.lane.b32.xlu0 %v1262, 32
    %v1265 = vpop.permute.xlu0 %1264
    %vm1267 = vcmask 259076
    %1268 = vst.msk [vmem:[#allocation2] sm:$0x30] %vm1267, %v1265
    %v1269 = vld [vmem:[%s14] sm:$0xff]
    %v1270 = vld [vmem:[%s14 + $0x8] sm:$0xff]
    %v1271 = vld [vmem:[%s14 + $0x10] sm:$0xff]
    %v1272 = vld [vmem:[%s14 + $0x18] sm:$0xff]
    %v1273 = vrot.slane %v1262, 4
    %1274 = vrot.lane.b32.xlu0 %v1273, 32
    %v1275 = vpop.permute.xlu0 %1274
    %v1276 = vsel %vm118, %v1275, 0
    %1278 = vmatprep.subr.mxu0 0.0
    %1279 = vmatpush1.msra.mxu0 %v1269
    %1280 = vmatprep.subr.mxu0 0.0
    %1281 = vmatpush1.msra.mxu0 %v1270
    %1282 = vmatprep.subr.mxu0 0.0
    %1283 = vmatpush1.msra.mxu0 %v1271
    %1284 = vmatprep.subr.mxu0 0.0
    %1285 = vmatpush1.msra.mxu0 %v1272
    %1286 = vmatprep.subr.mxu0 0.0
    %1287 = vmatpush1.msra.mxu0 0.0
    %1288 = vmatprep.subr.mxu0 0.0
    %1289 = vmatpush1.msra.mxu0 0.0
    %1290 = vmatprep.subr.mxu0 0.0
    %1291 = vmatpush1.msra.mxu0 0.0
    %1292 = vmatprep.subr.mxu0 0.0
    %1293 = vmatpush1.msra.mxu0 0.0
    %1294 = vmatprep.subr.mxu0 0.0
    %1295 = vmatpush1.msra.mxu0 0.0
    %1296 = vmatprep.subr.mxu0 0.0
    %1297 = vmatpush1.msra.mxu0 0.0
    %1298 = vmatprep.subr.mxu0 0.0
    %1299 = vmatpush1.msra.mxu0 0.0
    %1300 = vmatprep.subr.mxu0 0.0
    %1301 = vmatpush1.msra.mxu0 0.0
    %1302 = vmatprep.subr.mxu0 0.0
    %1303 = vmatpush1.msra.mxu0 0.0
    %1304 = vmatprep.subr.mxu0 0.0
    %1305 = vmatpush1.msra.mxu0 0.0
    %1306 = vmatprep.subr.mxu0 0.0
    %1307 = vmatpush1.msra.mxu0 0.0
    %1308 = vmatprep.subr.mxu0 0.0
    %1309 = vmatpush1.msra.mxu0 0.0
    %1310 = vmatprep.subr.mxu0 0.0
    %1311 = vmatpush1.msra.mxu0 0.0
    %1312 = vmatprep.subr.mxu0 0.0
    %1313 = vmatpush1.msra.mxu0 0.0
    %1314 = vmatprep.subr.mxu0 0.0
    %1315 = vmatpush1.msra.mxu0 0.0
    %1316 = vmatprep.subr.mxu0 0.0
    %1317 = vmatpush1.msra.mxu0 0.0
    %1318 = vmatprep.subr.mxu0 0.0
    %1319 = vmatpush1.msra.mxu0 0.0
    %1320 = vmatprep.subr.mxu0 0.0
    %1321 = vmatpush1.msra.mxu0 0.0
    %1322 = vmatprep.subr.mxu0 0.0
    %1323 = vmatpush1.msra.mxu0 0.0
    %1324 = vmatprep.subr.mxu0 0.0
    %1325 = vmatpush1.msra.mxu0 0.0
    %1326 = vmatprep.subr.mxu0 0.0
    %1327 = vmatpush1.msra.mxu0 0.0
    %1328 = vmatprep.subr.mxu0 0.0
    %1329 = vmatpush1.msra.mxu0 0.0
    %1330 = vmatprep.subr.mxu0 0.0
    %1331 = vmatpush1.msra.mxu0 0.0
    %1332 = vmatprep.subr.mxu0 0.0
    %1333 = vmatpush1.msra.mxu0 0.0
    %1334 = vmatprep.subr.mxu0 0.0
    %1335 = vmatpush1.msra.mxu0 0.0
    %1336 = vmatprep.subr.mxu0 0.0
    %1337 = vmatpush1.msra.mxu0 0.0
    %1338 = vmatprep.subr.mxu0 0.0
    %1339 = vmatpush1.msra.mxu0 0.0
    %1340 = vmatprep.subr.mxu0 0.0
    %1341 = vmatpush1.msra.mxu0 0.0
    %1342 = vmatprep.mubr.f32.mxu0 0.0
    %1343 = vmatmul.mubr.f32.gmra.mrb[0].mxu0 %v1276
    %v1344 = vpop.f32.mrb[0].mxu0
    %v1345 = vadd.f32 0.0, %v1344
    %v1346 = vpop.f32.mrb[0].mxu0
    %1347 = vdwg.mxu0
    %v1349 = vrot.slane %v1345, 2
    %v1351 = vadd.f32 %v913, %v1349
    %v1352 = vsub.f32 0.0, %v1351
    %v1353 = vmul.f32 %v1352, 1.442695
    %v1354 = vpow.pop %v1353
    %v1355 = vadd.f32 %v1354, 1.0
    %v1356 = vrcp.pop %v1355
    %v1357 = vmul.f32 1.0, %v1356
    %v1358 = vtanh.pop %v1351
    %v1360 = vrot.slane %v1256, 6
    %v1362 = vmul.f32 %v1357, %v1360
    %1364 = vrot.lane.b32.xlu0 %v1358, 64
    %v1365 = vpop.permute.xlu0 %1364
    %v1367 = vmul.f32 %v1357, %v1365
    %1369 = vrot.lane.b32.xlu0 %v1367, 32
    %v1370 = vpop.permute.xlu0 %1369
    %v1372 = vadd.f32 %v1362, %v1370
    %v1373 = vtanh.pop %v1372
    %1375 = vrot.lane.b32.xlu0 %v1373, 64
    %v1376 = vpop.permute.xlu0 %1375
    %v1378 = vmul.f32 %v1357, %v1376
    %1380 = vrot.lane.b32.xlu0 %v1378, 32
    %v1381 = vpop.permute.xlu0 %1380
    %vm1383 = vcmask 261126
    %1384 = vst.msk [vmem:[#allocation2] sm:$0xc0] %vm1383, %v1381
    %v1385 = vld [vmem:[%s14] sm:$0xff]
    %v1386 = vld [vmem:[%s14 + $0x8] sm:$0xff]
    %v1387 = vld [vmem:[%s14 + $0x10] sm:$0xff]
    %v1388 = vld [vmem:[%s14 + $0x18] sm:$0xff]
    %v1389 = vrot.slane %v1378, 6
    %1390 = vrot.lane.b32.xlu0 %v1389, 32
    %v1391 = vpop.permute.xlu0 %1390
    %v1392 = vsel %vm118, %v1391, 0
    %1394 = vmatprep.subr.mxu0 0.0
    %1395 = vmatpush1.msra.mxu0 %v1385
    %1396 = vmatprep.subr.mxu0 0.0
    %1397 = vmatpush1.msra.mxu0 %v1386
    %1398 = vmatprep.subr.mxu0 0.0
    %1399 = vmatpush1.msra.mxu0 %v1387
    %1400 = vmatprep.subr.mxu0 0.0
    %1401 = vmatpush1.msra.mxu0 %v1388
    %1402 = vmatprep.subr.mxu0 0.0
    %1403 = vmatpush1.msra.mxu0 0.0
    %1404 = vmatprep.subr.mxu0 0.0
    %1405 = vmatpush1.msra.mxu0 0.0
    %1406 = vmatprep.subr.mxu0 0.0
    %1407 = vmatpush1.msra.mxu0 0.0
    %1408 = vmatprep.subr.mxu0 0.0
    %1409 = vmatpush1.msra.mxu0 0.0
    %1410 = vmatprep.subr.mxu0 0.0
    %1411 = vmatpush1.msra.mxu0 0.0
    %1412 = vmatprep.subr.mxu0 0.0
    %1413 = vmatpush1.msra.mxu0 0.0
    %1414 = vmatprep.subr.mxu0 0.0
    %1415 = vmatpush1.msra.mxu0 0.0
    %1416 = vmatprep.subr.mxu0 0.0
    %1417 = vmatpush1.msra.mxu0 0.0
    %1418 = vmatprep.subr.mxu0 0.0
    %1419 = vmatpush1.msra.mxu0 0.0
    %1420 = vmatprep.subr.mxu0 0.0
    %1421 = vmatpush1.msra.mxu0 0.0
    %1422 = vmatprep.subr.mxu0 0.0
    %1423 = vmatpush1.msra.mxu0 0.0
    %1424 = vmatprep.subr.mxu0 0.0
    %1425 = vmatpush1.msra.mxu0 0.0
    %1426 = vmatprep.subr.mxu0 0.0
    %1427 = vmatpush1.msra.mxu0 0.0
    %1428 = vmatprep.subr.mxu0 0.0
    %1429 = vmatpush1.msra.mxu0 0.0
    %1430 = vmatprep.subr.mxu0 0.0
    %1431 = vmatpush1.msra.mxu0 0.0
    %1432 = vmatprep.subr.mxu0 0.0
    %1433 = vmatpush1.msra.mxu0 0.0
    %1434 = vmatprep.subr.mxu0 0.0
    %1435 = vmatpush1.msra.mxu0 0.0
    %1436 = vmatprep.subr.mxu0 0.0
    %1437 = vmatpush1.msra.mxu0 0.0
    %1438 = vmatprep.subr.mxu0 0.0
    %1439 = vmatpush1.msra.mxu0 0.0
    %1440 = vmatprep.subr.mxu0 0.0
    %1441 = vmatpush1.msra.mxu0 0.0
    %1442 = vmatprep.subr.mxu0 0.0
    %1443 = vmatpush1.msra.mxu0 0.0
    %1444 = vmatprep.subr.mxu0 0.0
    %1445 = vmatpush1.msra.mxu0 0.0
    %1446 = vmatprep.subr.mxu0 0.0
    %1447 = vmatpush1.msra.mxu0 0.0
    %1448 = vmatprep.subr.mxu0 0.0
    %1449 = vmatpush1.msra.mxu0 0.0
    %1450 = vmatprep.subr.mxu0 0.0
    %1451 = vmatpush1.msra.mxu0 0.0
    %1452 = vmatprep.subr.mxu0 0.0
    %1453 = vmatpush1.msra.mxu0 0.0
    %1454 = vmatprep.subr.mxu0 0.0
    %1455 = vmatpush1.msra.mxu0 0.0
    %1456 = vmatprep.subr.mxu0 0.0
    %1457 = vmatpush1.msra.mxu0 0.0
    %1458 = vmatprep.mubr.f32.mxu0 0.0
    %1459 = vmatmul.mubr.f32.gmra.mrb[0].mxu0 %v1392
    %v1460 = vpop.f32.mrb[0].mxu0
    %v1461 = vadd.f32 0.0, %v1460
    %v1462 = vpop.f32.mrb[0].mxu0
    %1463 = vdwg.mxu0
    %v1464 = vadd.f32 %v918, %v1461
    %v1465 = vsub.f32 0.0, %v1464
    %v1466 = vmul.f32 %v1465, 1.442695
    %v1467 = vpow.pop %v1466
    %v1468 = vadd.f32 %v1467, 1.0
    %v1469 = vrcp.pop %v1468
    %v1470 = vmul.f32 1.0, %v1469
    %v1471 = vtanh.pop %v1464
    %v1473 = vrot.slane %v1372, 6
    %v1475 = vmul.f32 %v1470, %v1473
    %1477 = vrot.lane.b32.xlu0 %v1471, 64
    %v1478 = vpop.permute.xlu0 %1477
    %v1480 = vmul.f32 %v1470, %v1478
    %1482 = vrot.lane.b32.xlu0 %v1480, 32
    %v1483 = vpop.permute.xlu0 %1482
    %v1485 = vadd.f32 %v1475, %v1483
    %v1486 = vtanh.pop %v1485
    %1488 = vrot.lane.b32.xlu0 %v1486, 64
    %v1489 = vpop.permute.xlu0 %1488
    %v1491 = vmul.f32 %v1470, %v1489
    %1493 = vrot.lane.b32.xlu0 %v1491, 32
    %v1494 = vpop.permute.xlu0 %1493
    %1496 = vst.msk [vmem:[#allocation2 + $0x8] sm:$0x3] %vm1038, %v1494
    %v1497 = vld [vmem:[%s14] sm:$0xff]
    %v1498 = vld [vmem:[%s14 + $0x8] sm:$0xff]
    %v1499 = vld [vmem:[%s14 + $0x10] sm:$0xff]
    %v1500 = vld [vmem:[%s14 + $0x18] sm:$0xff]
    %v1501 = vsel %vm118, %v1494, 0
    %1503 = vmatprep.subr.mxu0 0.0
    %1504 = vmatpush1.msra.mxu0 %v1497
    %1505 = vmatprep.subr.mxu0 0.0
    %1506 = vmatpush1.msra.mxu0 %v1498
    %1507 = vmatprep.subr.mxu0 0.0
    %1508 = vmatpush1.msra.mxu0 %v1499
    %1509 = vmatprep.subr.mxu0 0.0
    %1510 = vmatpush1.msra.mxu0 %v1500
    %1511 = vmatprep.subr.mxu0 0.0
    %1512 = vmatpush1.msra.mxu0 0.0
    %1513 = vmatprep.subr.mxu0 0.0
    %1514 = vmatpush1.msra.mxu0 0.0
    %1515 = vmatprep.subr.mxu0 0.0
    %1516 = vmatpush1.msra.mxu0 0.0
    %1517 = vmatprep.subr.mxu0 0.0
    %1518 = vmatpush1.msra.mxu0 0.0
    %1519 = vmatprep.subr.mxu0 0.0
    %1520 = vmatpush1.msra.mxu0 0.0
    %1521 = vmatprep.subr.mxu0 0.0
    %1522 = vmatpush1.msra.mxu0 0.0
    %1523 = vmatprep.subr.mxu0 0.0
    %1524 = vmatpush1.msra.mxu0 0.0
    %1525 = vmatprep.subr.mxu0 0.0
    %1526 = vmatpush1.msra.mxu0 0.0
    %1527 = vmatprep.subr.mxu0 0.0
    %1528 = vmatpush1.msra.mxu0 0.0
    %1529 = vmatprep.subr.mxu0 0.0
    %1530 = vmatpush1.msra.mxu0 0.0
    %1531 = vmatprep.subr.mxu0 0.0
    %1532 = vmatpush1.msra.mxu0 0.0
    %1533 = vmatprep.subr.mxu0 0.0
    %1534 = vmatpush1.msra.mxu0 0.0
    %1535 = vmatprep.subr.mxu0 0.0
    %1536 = vmatpush1.msra.mxu0 0.0
    %1537 = vmatprep.subr.mxu0 0.0
    %1538 = vmatpush1.msra.mxu0 0.0
    %1539 = vmatprep.subr.mxu0 0.0
    %1540 = vmatpush1.msra.mxu0 0.0
    %1541 = vmatprep.subr.mxu0 0.0
    %1542 = vmatpush1.msra.mxu0 0.0
    %1543 = vmatprep.subr.mxu0 0.0
    %1544 = vmatpush1.msra.mxu0 0.0
    %1545 = vmatprep.subr.mxu0 0.0
    %1546 = vmatpush1.msra.mxu0 0.0
    %1547 = vmatprep.subr.mxu0 0.0
    %1548 = vmatpush1.msra.mxu0 0.0
    %1549 = vmatprep.subr.mxu0 0.0
    %1550 = vmatpush1.msra.mxu0 0.0
    %1551 = vmatprep.subr.mxu0 0.0
    %1552 = vmatpush1.msra.mxu0 0.0
    %1553 = vmatprep.subr.mxu0 0.0
    %1554 = vmatpush1.msra.mxu0 0.0
    %1555 = vmatprep.subr.mxu0 0.0
    %1556 = vmatpush1.msra.mxu0 0.0
    %1557 = vmatprep.subr.mxu0 0.0
    %1558 = vmatpush1.msra.mxu0 0.0
    %1559 = vmatprep.subr.mxu0 0.0
    %1560 = vmatpush1.msra.mxu0 0.0
    %1561 = vmatprep.subr.mxu0 0.0
    %1562 = vmatpush1.msra.mxu0 0.0
    %1563 = vmatprep.subr.mxu0 0.0
    %1564 = vmatpush1.msra.mxu0 0.0
    %1565 = vmatprep.subr.mxu0 0.0
    %1566 = vmatpush1.msra.mxu0 0.0
    %1567 = vmatprep.mubr.f32.mxu0 0.0
    %1568 = vmatmul.mubr.f32.gmra.mrb[0].mxu0 %v1501
    %v1569 = vpop.f32.mrb[0].mxu0
    %v1570 = vadd.f32 0.0, %v1569
    %v1571 = vpop.f32.mrb[0].mxu0
    %1572 = vdwg.mxu0
    %v1574 = vrot.slane %v1570, 6
    %v1576 = vadd.f32 %v918, %v1574
    %v1577 = vsub.f32 0.0, %v1576
    %v1578 = vmul.f32 %v1577, 1.442695
    %v1579 = vpow.pop %v1578
    %v1580 = vadd.f32 %v1579, 1.0
    %v1581 = vrcp.pop %v1580
    %v1582 = vmul.f32 1.0, %v1581
    %v1583 = vtanh.pop %v1576
    %v1585 = vrot.slane %v1485, 6
    %v1587 = vmul.f32 %v1582, %v1585
    %1589 = vrot.lane.b32.xlu0 %v1583, 64
    %v1590 = vpop.permute.xlu0 %1589
    %v1592 = vmul.f32 %v1582, %v1590
    %1594 = vrot.lane.b32.xlu0 %v1592, 32
    %v1595 = vpop.permute.xlu0 %1594
    %v1597 = vadd.f32 %v1587, %v1595
    %v1598 = vtanh.pop %v1597
    %1600 = vrot.lane.b32.xlu0 %v1598, 64
    %v1601 = vpop.permute.xlu0 %1600
    %v1603 = vmul.f32 %v1582, %v1601
    %1605 = vrot.lane.b32.xlu0 %v1603, 32
    %v1606 = vpop.permute.xlu0 %1605
    %1608 = vst.msk [vmem:[#allocation2 + $0x8] sm:$0xc] %vm1151, %v1606
    %v1609 = vld [vmem:[%s14] sm:$0xff]
    %v1610 = vld [vmem:[%s14 + $0x8] sm:$0xff]
    %v1611 = vld [vmem:[%s14 + $0x10] sm:$0xff]
    %v1612 = vld [vmem:[%s14 + $0x18] sm:$0xff]
    %v1613 = vrot.slane %v1603, 2
    %1614 = vrot.lane.b32.xlu0 %v1613, 32
    %v1615 = vpop.permute.xlu0 %1614
    %v1616 = vsel %vm118, %v1615, 0
    %1618 = vmatprep.subr.mxu0 0.0
    %1619 = vmatpush1.msra.mxu0 %v1609
    %1620 = vmatprep.subr.mxu0 0.0
    %1621 = vmatpush1.msra.mxu0 %v1610
    %1622 = vmatprep.subr.mxu0 0.0
    %1623 = vmatpush1.msra.mxu0 %v1611
    %1624 = vmatprep.subr.mxu0 0.0
    %1625 = vmatpush1.msra.mxu0 %v1612
    %1626 = vmatprep.subr.mxu0 0.0
    %1627 = vmatpush1.msra.mxu0 0.0
    %1628 = vmatprep.subr.mxu0 0.0
    %1629 = vmatpush1.msra.mxu0 0.0
    %1630 = vmatprep.subr.mxu0 0.0
    %1631 = vmatpush1.msra.mxu0 0.0
    %1632 = vmatprep.subr.mxu0 0.0
    %1633 = vmatpush1.msra.mxu0 0.0
    %1634 = vmatprep.subr.mxu0 0.0
    %1635 = vmatpush1.msra.mxu0 0.0
    %1636 = vmatprep.subr.mxu0 0.0
    %1637 = vmatpush1.msra.mxu0 0.0
    %1638 = vmatprep.subr.mxu0 0.0
    %1639 = vmatpush1.msra.mxu0 0.0
    %1640 = vmatprep.subr.mxu0 0.0
    %1641 = vmatpush1.msra.mxu0 0.0
    %1642 = vmatprep.subr.mxu0 0.0
    %1643 = vmatpush1.msra.mxu0 0.0
    %1644 = vmatprep.subr.mxu0 0.0
    %1645 = vmatpush1.msra.mxu0 0.0
    %1646 = vmatprep.subr.mxu0 0.0
    %1647 = vmatpush1.msra.mxu0 0.0
    %1648 = vmatprep.subr.mxu0 0.0
    %1649 = vmatpush1.msra.mxu0 0.0
    %1650 = vmatprep.subr.mxu0 0.0
    %1651 = vmatpush1.msra.mxu0 0.0
    %1652 = vmatprep.subr.mxu0 0.0
    %1653 = vmatpush1.msra.mxu0 0.0
    %1654 = vmatprep.subr.mxu0 0.0
    %1655 = vmatpush1.msra.mxu0 0.0
    %1656 = vmatprep.subr.mxu0 0.0
    %1657 = vmatpush1.msra.mxu0 0.0
    %1658 = vmatprep.subr.mxu0 0.0
    %1659 = vmatpush1.msra.mxu0 0.0
    %1660 = vmatprep.subr.mxu0 0.0
    %1661 = vmatpush1.msra.mxu0 0.0
    %1662 = vmatprep.subr.mxu0 0.0
    %1663 = vmatpush1.msra.mxu0 0.0
    %1664 = vmatprep.subr.mxu0 0.0
    %1665 = vmatpush1.msra.mxu0 0.0
    %1666 = vmatprep.subr.mxu0 0.0
    %1667 = vmatpush1.msra.mxu0 0.0
    %1668 = vmatprep.subr.mxu0 0.0
    %1669 = vmatpush1.msra.mxu0 0.0
    %1670 = vmatprep.subr.mxu0 0.0
    %1671 = vmatpush1.msra.mxu0 0.0
    %1672 = vmatprep.subr.mxu0 0.0
    %1673 = vmatpush1.msra.mxu0 0.0
    %1674 = vmatprep.subr.mxu0 0.0
    %1675 = vmatpush1.msra.mxu0 0.0
    %1676 = vmatprep.subr.mxu0 0.0
    %1677 = vmatpush1.msra.mxu0 0.0
    %1678 = vmatprep.subr.mxu0 0.0
    %1679 = vmatpush1.msra.mxu0 0.0
    %1680 = vmatprep.subr.mxu0 0.0
    %1681 = vmatpush1.msra.mxu0 0.0
    %1682 = vmatprep.mubr.f32.mxu0 0.0
    %1683 = vmatmul.mubr.f32.gmra.mrb[0].mxu0 %v1616
    %v1684 = vpop.f32.mrb[0].mxu0
    %v1685 = vadd.f32 0.0, %v1684
    %v1686 = vpop.f32.mrb[0].mxu0
    %1687 = vdwg.mxu0
    %v1689 = vrot.slane %v1685, 4
    %v1691 = vadd.f32 %v918, %v1689
    %v1692 = vsub.f32 0.0, %v1691
    %v1693 = vmul.f32 %v1692, 1.442695
    %v1694 = vpow.pop %v1693
    %v1695 = vadd.f32 %v1694, 1.0
    %v1696 = vrcp.pop %v1695
    %v1697 = vmul.f32 1.0, %v1696
    %v1698 = vtanh.pop %v1691
    %v1700 = vrot.slane %v1597, 6
    %v1702 = vmul.f32 %v1697, %v1700
    %1704 = vrot.lane.b32.xlu0 %v1698, 64
    %v1705 = vpop.permute.xlu0 %1704
    %v1707 = vmul.f32 %v1697, %v1705
    %1709 = vrot.lane.b32.xlu0 %v1707, 32
    %v1710 = vpop.permute.xlu0 %1709
    %v1712 = vadd.f32 %v1702, %v1710
    %v1713 = vtanh.pop %v1712
    %1715 = vrot.lane.b32.xlu0 %v1713, 64
    %v1716 = vpop.permute.xlu0 %1715
    %v1718 = vmul.f32 %v1697, %v1716
    %1720 = vrot.lane.b32.xlu0 %v1718, 32
    %v1721 = vpop.permute.xlu0 %1720
    %1723 = vst.msk [vmem:[#allocation2 + $0x8] sm:$0x30] %vm1267, %v1721
    %v1724 = vld [vmem:[%s14] sm:$0xff]
    %v1725 = vld [vmem:[%s14 + $0x8] sm:$0xff]
    %v1726 = vld [vmem:[%s14 + $0x10] sm:$0xff]
    %v1727 = vld [vmem:[%s14 + $0x18] sm:$0xff]
    %v1728 = vrot.slane %v1718, 4
    %1729 = vrot.lane.b32.xlu0 %v1728, 32
    %v1730 = vpop.permute.xlu0 %1729
    %v1731 = vsel %vm118, %v1730, 0
    %1733 = vmatprep.subr.mxu0 0.0
    %1734 = vmatpush1.msra.mxu0 %v1724
    %1735 = vmatprep.subr.mxu0 0.0
    %1736 = vmatpush1.msra.mxu0 %v1725
    %1737 = vmatprep.subr.mxu0 0.0
    %1738 = vmatpush1.msra.mxu0 %v1726
    %1739 = vmatprep.subr.mxu0 0.0
    %1740 = vmatpush1.msra.mxu0 %v1727
    %1741 = vmatprep.subr.mxu0 0.0
    %1742 = vmatpush1.msra.mxu0 0.0
    %1743 = vmatprep.subr.mxu0 0.0
    %1744 = vmatpush1.msra.mxu0 0.0
    %1745 = vmatprep.subr.mxu0 0.0
    %1746 = vmatpush1.msra.mxu0 0.0
    %1747 = vmatprep.subr.mxu0 0.0
    %1748 = vmatpush1.msra.mxu0 0.0
    %1749 = vmatprep.subr.mxu0 0.0
    %1750 = vmatpush1.msra.mxu0 0.0
    %1751 = vmatprep.subr.mxu0 0.0
    %1752 = vmatpush1.msra.mxu0 0.0
    %1753 = vmatprep.subr.mxu0 0.0
    %1754 = vmatpush1.msra.mxu0 0.0
    %1755 = vmatprep.subr.mxu0 0.0
    %1756 = vmatpush1.msra.mxu0 0.0
    %1757 = vmatprep.subr.mxu0 0.0
    %1758 = vmatpush1.msra.mxu0 0.0
    %1759 = vmatprep.subr.mxu0 0.0
    %1760 = vmatpush1.msra.mxu0 0.0
    %1761 = vmatprep.subr.mxu0 0.0
    %1762 = vmatpush1.msra.mxu0 0.0
    %1763 = vmatprep.subr.mxu0 0.0
    %1764 = vmatpush1.msra.mxu0 0.0
    %1765 = vmatprep.subr.mxu0 0.0
    %1766 = vmatpush1.msra.mxu0 0.0
    %1767 = vmatprep.subr.mxu0 0.0
    %1768 = vmatpush1.msra.mxu0 0.0
    %1769 = vmatprep.subr.mxu0 0.0
    %1770 = vmatpush1.msra.mxu0 0.0
    %1771 = vmatprep.subr.mxu0 0.0
    %1772 = vmatpush1.msra.mxu0 0.0
    %1773 = vmatprep.subr.mxu0 0.0
    %1774 = vmatpush1.msra.mxu0 0.0
    %1775 = vmatprep.subr.mxu0 0.0
    %1776 = vmatpush1.msra.mxu0 0.0
    %1777 = vmatprep.subr.mxu0 0.0
    %1778 = vmatpush1.msra.mxu0 0.0
    %1779 = vmatprep.subr.mxu0 0.0
    %1780 = vmatpush1.msra.mxu0 0.0
    %1781 = vmatprep.subr.mxu0 0.0
    %1782 = vmatpush1.msra.mxu0 0.0
    %1783 = vmatprep.subr.mxu0 0.0
    %1784 = vmatpush1.msra.mxu0 0.0
    %1785 = vmatprep.subr.mxu0 0.0
    %1786 = vmatpush1.msra.mxu0 0.0
    %1787 = vmatprep.subr.mxu0 0.0
    %1788 = vmatpush1.msra.mxu0 0.0
    %1789 = vmatprep.subr.mxu0 0.0
    %1790 = vmatpush1.msra.mxu0 0.0
    %1791 = vmatprep.subr.mxu0 0.0
    %1792 = vmatpush1.msra.mxu0 0.0
    %1793 = vmatprep.subr.mxu0 0.0
    %1794 = vmatpush1.msra.mxu0 0.0
    %1795 = vmatprep.subr.mxu0 0.0
    %1796 = vmatpush1.msra.mxu0 0.0
    %1797 = vmatprep.mubr.f32.mxu0 0.0
    %1798 = vmatmul.mubr.f32.gmra.mrb[0].mxu0 %v1731
    %v1799 = vpop.f32.mrb[0].mxu0
    %v1800 = vadd.f32 0.0, %v1799
    %v1801 = vpop.f32.mrb[0].mxu0
    %1802 = vdwg.mxu0
    %v1804 = vrot.slane %v1800, 2
    %v1806 = vadd.f32 %v918, %v1804
    %v1807 = vsub.f32 0.0, %v1806
    %v1808 = vmul.f32 %v1807, 1.442695
    %v1809 = vpow.pop %v1808
    %v1810 = vadd.f32 %v1809, 1.0
    %v1811 = vrcp.pop %v1810
    %v1812 = vmul.f32 1.0, %v1811
    %v1813 = vtanh.pop %v1806
    %v1815 = vrot.slane %v1712, 6
    %v1817 = vmul.f32 %v1812, %v1815
    %1819 = vrot.lane.b32.xlu0 %v1813, 64
    %v1820 = vpop.permute.xlu0 %1819
    %v1822 = vmul.f32 %v1812, %v1820
    %1824 = vrot.lane.b32.xlu0 %v1822, 32
    %v1825 = vpop.permute.xlu0 %1824
    %v1827 = vadd.f32 %v1817, %v1825
    %v1828 = vtanh.pop %v1827
    %1830 = vrot.lane.b32.xlu0 %v1828, 64
    %v1831 = vpop.permute.xlu0 %1830
    %v1833 = vmul.f32 %v1812, %v1831
    %1835 = vrot.lane.b32.xlu0 %v1833, 32
    %v1836 = vpop.permute.xlu0 %1835
    %1838 = vst.msk [vmem:[#allocation2 + $0x8] sm:$0xc0] %vm1383, %v1836
    %v1839 = vld [vmem:[%s14] sm:$0xff]
    %v1840 = vld [vmem:[%s14 + $0x8] sm:$0xff]
    %v1841 = vld [vmem:[%s14 + $0x10] sm:$0xff]
    %v1842 = vld [vmem:[%s14 + $0x18] sm:$0xff]
    %v1843 = vrot.slane %v1833, 6
    %1844 = vrot.lane.b32.xlu0 %v1843, 32
    %v1845 = vpop.permute.xlu0 %1844
    %v1846 = vsel %vm118, %v1845, 0
    %1848 = vmatprep.subr.mxu0 0.0
    %1849 = vmatpush1.msra.mxu0 %v1839
    %1850 = vmatprep.subr.mxu0 0.0
    %1851 = vmatpush1.msra.mxu0 %v1840
    %1852 = vmatprep.subr.mxu0 0.0
    %1853 = vmatpush1.msra.mxu0 %v1841
    %1854 = vmatprep.subr.mxu0 0.0
    %1855 = vmatpush1.msra.mxu0 %v1842
    %1856 = vmatprep.subr.mxu0 0.0
    %1857 = vmatpush1.msra.mxu0 0.0
    %1858 = vmatprep.subr.mxu0 0.0
    %1859 = vmatpush1.msra.mxu0 0.0
    %1860 = vmatprep.subr.mxu0 0.0
    %1861 = vmatpush1.msra.mxu0 0.0
    %1862 = vmatprep.subr.mxu0 0.0
    %1863 = vmatpush1.msra.mxu0 0.0
    %1864 = vmatprep.subr.mxu0 0.0
    %1865 = vmatpush1.msra.mxu0 0.0
    %1866 = vmatprep.subr.mxu0 0.0
    %1867 = vmatpush1.msra.mxu0 0.0
    %1868 = vmatprep.subr.mxu0 0.0
    %1869 = vmatpush1.msra.mxu0 0.0
    %1870 = vmatprep.subr.mxu0 0.0
    %1871 = vmatpush1.msra.mxu0 0.0
    %1872 = vmatprep.subr.mxu0 0.0
    %1873 = vmatpush1.msra.mxu0 0.0
    %1874 = vmatprep.subr.mxu0 0.0
    %1875 = vmatpush1.msra.mxu0 0.0
    %1876 = vmatprep.subr.mxu0 0.0
    %1877 = vmatpush1.msra.mxu0 0.0
    %1878 = vmatprep.subr.mxu0 0.0
    %1879 = vmatpush1.msra.mxu0 0.0
    %1880 = vmatprep.subr.mxu0 0.0
    %1881 = vmatpush1.msra.mxu0 0.0
    %1882 = vmatprep.subr.mxu0 0.0
    %1883 = vmatpush1.msra.mxu0 0.0
    %1884 = vmatprep.subr.mxu0 0.0
    %1885 = vmatpush1.msra.mxu0 0.0
    %1886 = vmatprep.subr.mxu0 0.0
    %1887 = vmatpush1.msra.mxu0 0.0
    %1888 = vmatprep.subr.mxu0 0.0
    %1889 = vmatpush1.msra.mxu0 0.0
    %1890 = vmatprep.subr.mxu0 0.0
    %1891 = vmatpush1.msra.mxu0 0.0
    %1892 = vmatprep.subr.mxu0 0.0
    %1893 = vmatpush1.msra.mxu0 0.0
    %1894 = vmatprep.subr.mxu0 0.0
    %1895 = vmatpush1.msra.mxu0 0.0
    %1896 = vmatprep.subr.mxu0 0.0
    %1897 = vmatpush1.msra.mxu0 0.0
    %1898 = vmatprep.subr.mxu0 0.0
    %1899 = vmatpush1.msra.mxu0 0.0
    %1900 = vmatprep.subr.mxu0 0.0
    %1901 = vmatpush1.msra.mxu0 0.0
    %1902 = vmatprep.subr.mxu0 0.0
    %1903 = vmatpush1.msra.mxu0 0.0
    %1904 = vmatprep.subr.mxu0 0.0
    %1905 = vmatpush1.msra.mxu0 0.0
    %1906 = vmatprep.subr.mxu0 0.0
    %1907 = vmatpush1.msra.mxu0 0.0
    %1908 = vmatprep.subr.mxu0 0.0
    %1909 = vmatpush1.msra.mxu0 0.0
    %1910 = vmatprep.subr.mxu0 0.0
    %1911 = vmatpush1.msra.mxu0 0.0
    %1912 = vmatprep.mubr.f32.mxu0 0.0
    %1913 = vmatmul.mubr.f32.gmra.mrb[0].mxu0 %v1846
    %v1914 = vpop.f32.mrb[0].mxu0
    %v1915 = vadd.f32 0.0, %v1914
    %v1916 = vpop.f32.mrb[0].mxu0
    %1917 = vdwg.mxu0
    %v1918 = vadd.f32 %v923, %v1915
    %v1919 = vsub.f32 0.0, %v1918
    %v1920 = vmul.f32 %v1919, 1.442695
    %v1921 = vpow.pop %v1920
    %v1922 = vadd.f32 %v1921, 1.0
    %v1923 = vrcp.pop %v1922
    %v1924 = vmul.f32 1.0, %v1923
    %v1925 = vtanh.pop %v1918
    %v1927 = vrot.slane %v1827, 6
    %v1929 = vmul.f32 %v1924, %v1927
    %1931 = vrot.lane.b32.xlu0 %v1925, 64
    %v1932 = vpop.permute.xlu0 %1931
    %v1934 = vmul.f32 %v1924, %v1932
    %1936 = vrot.lane.b32.xlu0 %v1934, 32
    %v1937 = vpop.permute.xlu0 %1936
    %v1939 = vadd.f32 %v1929, %v1937
    %v1940 = vtanh.pop %v1939
    %1942 = vrot.lane.b32.xlu0 %v1940, 64
    %v1943 = vpop.permute.xlu0 %1942
    %v1945 = vmul.f32 %v1924, %v1943
    %1947 = vrot.lane.b32.xlu0 %v1945, 32
    %v1948 = vpop.permute.xlu0 %1947
    %1950 = vst.msk [vmem:[#allocation2 + $0x10] sm:$0x3] %vm1038, %v1948
    %1951 = vst.msk [vmem:[#allocation3] sm:$0x3] %vm1038, %v1948
    %1953 = vrot.lane.b32.xlu0 %v1939, 96
    %v1954 = vpop.permute.xlu0 %1953
    %1956 = vst.msk [vmem:[#allocation5] sm:$0x3] %vm1038, %v1954
    %v1957 = vld [vmem:[#allocation2] sm:$0xff]
    %v1958 = vld [vmem:[#allocation2 + $0x8] sm:$0xff]
    %v1959 = vld [vmem:[#allocation2 + $0x10] sm:$0xff]
    %v1960 = vld [vmem:[%s16] sm:$0xff]
    %v1961 = vld [vmem:[%s16 + $0x8] sm:$0xff]
    %v1962 = vld [vmem:[%s16 + $0x10] sm:$0xff]
    %v1963 = vld [vmem:[%s16 + $0x18] sm:$0xff]
    %v1964 = vld [vmem:[%s18] sm:$0x1]
    %v1966 = vlaneseq
    %v1967 = vshrl.u32 %v1966, 7
    %v1968 = vsub.s32 0, %v1967
    %v1969 = vrot.slane %v1964, %v1968
    %v1972 = vsel %vm118, %v1957, 0
    %v1975 = vsel %vm118, %v1958, 0
    %v1978 = vsel %vm118, %v1959, 0
    %1980 = vmatprep.subr.mxu0 0.0
    %1981 = vmatpush1.msra.mxu0 %v1960
    %1982 = vmatprep.subr.mxu0 0.0
    %1983 = vmatpush1.msra.mxu0 %v1961
    %1984 = vmatprep.subr.mxu0 0.0
    %1985 = vmatpush1.msra.mxu0 %v1962
    %1986 = vmatprep.subr.mxu0 0.0
    %1987 = vmatpush1.msra.mxu0 %v1963
    %1988 = vmatprep.subr.mxu0 0.0
    %1989 = vmatpush1.msra.mxu0 0.0
    %1990 = vmatprep.subr.mxu0 0.0
    %1991 = vmatpush1.msra.mxu0 0.0
    %1992 = vmatprep.subr.mxu0 0.0
    %1993 = vmatpush1.msra.mxu0 0.0
    %1994 = vmatprep.subr.mxu0 0.0
    %1995 = vmatpush1.msra.mxu0 0.0
    %1996 = vmatprep.subr.mxu0 0.0
    %1997 = vmatpush1.msra.mxu0 0.0
    %1998 = vmatprep.subr.mxu0 0.0
    %1999 = vmatpush1.msra.mxu0 0.0
    %2000 = vmatprep.subr.mxu0 0.0
    %2001 = vmatpush1.msra.mxu0 0.0
    %2002 = vmatprep.subr.mxu0 0.0
    %2003 = vmatpush1.msra.mxu0 0.0
    %2004 = vmatprep.subr.mxu0 0.0
    %2005 = vmatpush1.msra.mxu0 0.0
    %2006 = vmatprep.subr.mxu0 0.0
    %2007 = vmatpush1.msra.mxu0 0.0
    %2008 = vmatprep.subr.mxu0 0.0
    %2009 = vmatpush1.msra.mxu0 0.0
    %2010 = vmatprep.subr.mxu0 0.0
    %2011 = vmatpush1.msra.mxu0 0.0
    %2012 = vmatprep.subr.mxu0 0.0
    %2013 = vmatpush1.msra.mxu0 0.0
    %2014 = vmatprep.subr.mxu0 0.0
    %2015 = vmatpush1.msra.mxu0 0.0
    %2016 = vmatprep.subr.mxu0 0.0
    %2017 = vmatpush1.msra.mxu0 0.0
    %2018 = vmatprep.subr.mxu0 0.0
    %2019 = vmatpush1.msra.mxu0 0.0
    %2020 = vmatprep.subr.mxu0 0.0
    %2021 = vmatpush1.msra.mxu0 0.0
    %2022 = vmatprep.subr.mxu0 0.0
    %2023 = vmatpush1.msra.mxu0 0.0
    %2024 = vmatprep.subr.mxu0 0.0
    %2025 = vmatpush1.msra.mxu0 0.0
    %2026 = vmatprep.subr.mxu0 0.0
    %2027 = vmatpush1.msra.mxu0 0.0
    %2028 = vmatprep.subr.mxu0 0.0
    %2029 = vmatpush1.msra.mxu0 0.0
    %2030 = vmatprep.subr.mxu0 0.0
    %2031 = vmatpush1.msra.mxu0 0.0
    %2032 = vmatprep.subr.mxu0 0.0
    %2033 = vmatpush1.msra.mxu0 0.0
    %2034 = vmatprep.subr.mxu0 0.0
    %2035 = vmatpush1.msra.mxu0 0.0
    %2036 = vmatprep.subr.mxu0 0.0
    %2037 = vmatpush1.msra.mxu0 0.0
    %2038 = vmatprep.subr.mxu0 0.0
    %2039 = vmatpush1.msra.mxu0 0.0
    %2040 = vmatprep.subr.mxu0 0.0
    %2041 = vmatpush1.msra.mxu0 0.0
    %2042 = vmatprep.subr.mxu0 0.0
    %2043 = vmatpush1.msra.mxu0 0.0
    %2044 = vmatprep.mubr.f32.mxu0 0.0
    %2045 = vmatmul.mubr.f32.gmra.mrb[0].mxu0 %v1972
    %v2046 = vpop.f32.mrb[0].mxu0
    %v2047 = vadd.f32 %v1969, %v2046
    %v2048 = vpop.f32.mrb[0].mxu0
    %2049 = vmatprep.mubr.f32.mxu0 0.0
    %2050 = vmatmul.mubr.f32.gmra.mrb[0].mxu0 %v1975
    %v2051 = vpop.f32.mrb[0].mxu0
    %v2052 = vadd.f32 %v1969, %v2051
    %v2053 = vpop.f32.mrb[0].mxu0
    %2054 = vmatprep.mubr.f32.mxu0 0.0
    %2055 = vmatmul.mubr.f32.gmra.mrb[0].mxu0 %v1978
    %v2056 = vpop.f32.mrb[0].mxu0
    %v2057 = vadd.f32 %v1969, %v2056
    %v2058 = vpop.f32.mrb[0].mxu0
    %2059 = vdwg.mxu0
    %s2060 = scalar_lea.vmem %s19, 2
    %v2061 = vld [vmem:[%s2060] sm:$0x3]
    %s2062 = scalar_lea.vmem %s20, 2
    %v2063 = vld [vmem:[%s2062] sm:$0x3]
    %v2064 = vld [vmem:[%s17] sm:$0xff]
    %v2065 = vld [vmem:[%s17 + $0x8] sm:$0xff]
    %v2066 = vld [vmem:[%s17 + $0x10] sm:$0xff]
    %v2067 = vld [vmem:[%s17 + $0x18] sm:$0xff]
    %v2069 = vsel %vm118, %v2061, 0
    %2071 = vmatprep.subr.mxu0 0.0
    %2072 = vmatpush1.msra.mxu0 %v2064
    %2073 = vmatprep.subr.mxu0 0.0
    %2074 = vmatpush1.msra.mxu0 %v2065
    %2075 = vmatprep.subr.mxu0 0.0
    %2076 = vmatpush1.msra.mxu0 %v2066
    %2077 = vmatprep.subr.mxu0 0.0
    %2078 = vmatpush1.msra.mxu0 %v2067
    %2079 = vmatprep.subr.mxu0 0.0
    %2080 = vmatpush1.msra.mxu0 0.0
    %2081 = vmatprep.subr.mxu0 0.0
    %2082 = vmatpush1.msra.mxu0 0.0
    %2083 = vmatprep.subr.mxu0 0.0
    %2084 = vmatpush1.msra.mxu0 0.0
    %2085 = vmatprep.subr.mxu0 0.0
    %2086 = vmatpush1.msra.mxu0 0.0
    %2087 = vmatprep.subr.mxu0 0.0
    %2088 = vmatpush1.msra.mxu0 0.0
    %2089 = vmatprep.subr.mxu0 0.0
    %2090 = vmatpush1.msra.mxu0 0.0
    %2091 = vmatprep.subr.mxu0 0.0
    %2092 = vmatpush1.msra.mxu0 0.0
    %2093 = vmatprep.subr.mxu0 0.0
    %2094 = vmatpush1.msra.mxu0 0.0
    %2095 = vmatprep.subr.mxu0 0.0
    %2096 = vmatpush1.msra.mxu0 0.0
    %2097 = vmatprep.subr.mxu0 0.0
    %2098 = vmatpush1.msra.mxu0 0.0
    %2099 = vmatprep.subr.mxu0 0.0
    %2100 = vmatpush1.msra.mxu0 0.0
    %2101 = vmatprep.subr.mxu0 0.0
    %2102 = vmatpush1.msra.mxu0 0.0
    %2103 = vmatprep.subr.mxu0 0.0
    %2104 = vmatpush1.msra.mxu0 0.0
    %2105 = vmatprep.subr.mxu0 0.0
    %2106 = vmatpush1.msra.mxu0 0.0
    %2107 = vmatprep.subr.mxu0 0.0
    %2108 = vmatpush1.msra.mxu0 0.0
    %2109 = vmatprep.subr.mxu0 0.0
    %2110 = vmatpush1.msra.mxu0 0.0
    %2111 = vmatprep.subr.mxu0 0.0
    %2112 = vmatpush1.msra.mxu0 0.0
    %2113 = vmatprep.subr.mxu0 0.0
    %2114 = vmatpush1.msra.mxu0 0.0
    %2115 = vmatprep.subr.mxu0 0.0
    %2116 = vmatpush1.msra.mxu0 0.0
    %2117 = vmatprep.subr.mxu0 0.0
    %2118 = vmatpush1.msra.mxu0 0.0
    %2119 = vmatprep.subr.mxu0 0.0
    %2120 = vmatpush1.msra.mxu0 0.0
    %2121 = vmatprep.subr.mxu0 0.0
    %2122 = vmatpush1.msra.mxu0 0.0
    %2123 = vmatprep.subr.mxu0 0.0
    %2124 = vmatpush1.msra.mxu0 0.0
    %2125 = vmatprep.subr.mxu0 0.0
    %2126 = vmatpush1.msra.mxu0 0.0
    %2127 = vmatprep.subr.mxu0 0.0
    %2128 = vmatpush1.msra.mxu0 0.0
    %2129 = vmatprep.subr.mxu0 0.0
    %2130 = vmatpush1.msra.mxu0 0.0
    %2131 = vmatprep.subr.mxu0 0.0
    %2132 = vmatpush1.msra.mxu0 0.0
    %2133 = vmatprep.subr.mxu0 0.0
    %2134 = vmatpush1.msra.mxu0 0.0
    %2135 = vmatprep.mubr.f32.mxu0 0.0
    %2136 = vmatmul.mubr.f32.gmra.mrb[0].mxu0 %v2069
    %v2137 = vpop.f32.mrb[0].mxu0
    %v2138 = vadd.f32 0.0, %v2137
    %v2139 = vpop.f32.mrb[0].mxu0
    %2140 = vdwg.mxu0
    %v2141 = vadd.f32 %v2047, %v2138
    %v2142 = vsub.f32 0.0, %v2141
    %v2143 = vmul.f32 %v2142, 1.442695
    %v2144 = vpow.pop %v2143
    %v2145 = vadd.f32 %v2144, 1.0
    %v2146 = vrcp.pop %v2145
    %v2147 = vmul.f32 1.0, %v2146
    %v2148 = vtanh.pop %v2141
    %2150 = vrot.lane.b32.xlu0 %v2063, 32
    %v2151 = vpop.permute.xlu0 %2150
    %v2153 = vmul.f32 %v2147, %v2151
    %2155 = vrot.lane.b32.xlu0 %v2148, 64
    %v2156 = vpop.permute.xlu0 %2155
    %v2158 = vmul.f32 %v2147, %v2156
    %2160 = vrot.lane.b32.xlu0 %v2158, 32
    %v2161 = vpop.permute.xlu0 %2160
    %v2163 = vadd.f32 %v2153, %v2161
    %v2164 = vtanh.pop %v2163
    %2166 = vrot.lane.b32.xlu0 %v2164, 64
    %v2167 = vpop.permute.xlu0 %2166
    %v2169 = vmul.f32 %v2147, %v2167
    %2171 = vrot.lane.b32.xlu0 %v2169, 32
    %v2172 = vpop.permute.xlu0 %2171
    %2174 = vst.msk [vmem:[#allocation2] sm:$0x3] %vm1038, %v2172
    %v2175 = vld [vmem:[%s17] sm:$0xff]
    %v2176 = vld [vmem:[%s17 + $0x8] sm:$0xff]
    %v2177 = vld [vmem:[%s17 + $0x10] sm:$0xff]
    %v2178 = vld [vmem:[%s17 + $0x18] sm:$0xff]
    %v2179 = vsel %vm118, %v2172, 0
    %2181 = vmatprep.subr.mxu0 0.0
    %2182 = vmatpush1.msra.mxu0 %v2175
    %2183 = vmatprep.subr.mxu0 0.0
    %2184 = vmatpush1.msra.mxu0 %v2176
    %2185 = vmatprep.subr.mxu0 0.0
    %2186 = vmatpush1.msra.mxu0 %v2177
    %2187 = vmatprep.subr.mxu0 0.0
    %2188 = vmatpush1.msra.mxu0 %v2178
    %2189 = vmatprep.subr.mxu0 0.0
    %2190 = vmatpush1.msra.mxu0 0.0
    %2191 = vmatprep.subr.mxu0 0.0
    %2192 = vmatpush1.msra.mxu0 0.0
    %2193 = vmatprep.subr.mxu0 0.0
    %2194 = vmatpush1.msra.mxu0 0.0
    %2195 = vmatprep.subr.mxu0 0.0
    %2196 = vmatpush1.msra.mxu0 0.0
    %2197 = vmatprep.subr.mxu0 0.0
    %2198 = vmatpush1.msra.mxu0 0.0
    %2199 = vmatprep.subr.mxu0 0.0
    %2200 = vmatpush1.msra.mxu0 0.0
    %2201 = vmatprep.subr.mxu0 0.0
    %2202 = vmatpush1.msra.mxu0 0.0
    %2203 = vmatprep.subr.mxu0 0.0
    %2204 = vmatpush1.msra.mxu0 0.0
    %2205 = vmatprep.subr.mxu0 0.0
    %2206 = vmatpush1.msra.mxu0 0.0
    %2207 = vmatprep.subr.mxu0 0.0
    %2208 = vmatpush1.msra.mxu0 0.0
    %2209 = vmatprep.subr.mxu0 0.0
    %2210 = vmatpush1.msra.mxu0 0.0
    %2211 = vmatprep.subr.mxu0 0.0
    %2212 = vmatpush1.msra.mxu0 0.0
    %2213 = vmatprep.subr.mxu0 0.0
    %2214 = vmatpush1.msra.mxu0 0.0
    %2215 = vmatprep.subr.mxu0 0.0
    %2216 = vmatpush1.msra.mxu0 0.0
    %2217 = vmatprep.subr.mxu0 0.0
    %2218 = vmatpush1.msra.mxu0 0.0
    %2219 = vmatprep.subr.mxu0 0.0
    %2220 = vmatpush1.msra.mxu0 0.0
    %2221 = vmatprep.subr.mxu0 0.0
    %2222 = vmatpush1.msra.mxu0 0.0
    %2223 = vmatprep.subr.mxu0 0.0
    %2224 = vmatpush1.msra.mxu0 0.0
    %2225 = vmatprep.subr.mxu0 0.0
    %2226 = vmatpush1.msra.mxu0 0.0
    %2227 = vmatprep.subr.mxu0 0.0
    %2228 = vmatpush1.msra.mxu0 0.0
    %2229 = vmatprep.subr.mxu0 0.0
    %2230 = vmatpush1.msra.mxu0 0.0
    %2231 = vmatprep.subr.mxu0 0.0
    %2232 = vmatpush1.msra.mxu0 0.0
    %2233 = vmatprep.subr.mxu0 0.0
    %2234 = vmatpush1.msra.mxu0 0.0
    %2235 = vmatprep.subr.mxu0 0.0
    %2236 = vmatpush1.msra.mxu0 0.0
    %2237 = vmatprep.subr.mxu0 0.0
    %2238 = vmatpush1.msra.mxu0 0.0
    %2239 = vmatprep.subr.mxu0 0.0
    %2240 = vmatpush1.msra.mxu0 0.0
    %2241 = vmatprep.subr.mxu0 0.0
    %2242 = vmatpush1.msra.mxu0 0.0
    %2243 = vmatprep.subr.mxu0 0.0
    %2244 = vmatpush1.msra.mxu0 0.0
    %2245 = vmatprep.mubr.f32.mxu0 0.0
    %2246 = vmatmul.mubr.f32.gmra.mrb[0].mxu0 %v2179
    %v2247 = vpop.f32.mrb[0].mxu0
    %v2248 = vadd.f32 0.0, %v2247
    %v2249 = vpop.f32.mrb[0].mxu0
    %2250 = vdwg.mxu0
    %v2252 = vrot.slane %v2248, 6
    %v2254 = vadd.f32 %v2047, %v2252
    %v2255 = vsub.f32 0.0, %v2254
    %v2256 = vmul.f32 %v2255, 1.442695
    %v2257 = vpow.pop %v2256
    %v2258 = vadd.f32 %v2257, 1.0
    %v2259 = vrcp.pop %v2258
    %v2260 = vmul.f32 1.0, %v2259
    %v2261 = vtanh.pop %v2254
    %v2263 = vrot.slane %v2163, 6
    %v2265 = vmul.f32 %v2260, %v2263
    %2267 = vrot.lane.b32.xlu0 %v2261, 64
    %v2268 = vpop.permute.xlu0 %2267
    %v2270 = vmul.f32 %v2260, %v2268
    %2272 = vrot.lane.b32.xlu0 %v2270, 32
    %v2273 = vpop.permute.xlu0 %2272
    %v2275 = vadd.f32 %v2265, %v2273
    %v2276 = vtanh.pop %v2275
    %2278 = vrot.lane.b32.xlu0 %v2276, 64
    %v2279 = vpop.permute.xlu0 %2278
    %v2281 = vmul.f32 %v2260, %v2279
    %2283 = vrot.lane.b32.xlu0 %v2281, 32
    %v2284 = vpop.permute.xlu0 %2283
    %2286 = vst.msk [vmem:[#allocation2] sm:$0xc] %vm1151, %v2284
    %v2287 = vld [vmem:[%s17] sm:$0xff]
    %v2288 = vld [vmem:[%s17 + $0x8] sm:$0xff]
    %v2289 = vld [vmem:[%s17 + $0x10] sm:$0xff]
    %v2290 = vld [vmem:[%s17 + $0x18] sm:$0xff]
    %v2291 = vrot.slane %v2281, 2
    %2292 = vrot.lane.b32.xlu0 %v2291, 32
    %v2293 = vpop.permute.xlu0 %2292
    %v2294 = vsel %vm118, %v2293, 0
    %2296 = vmatprep.subr.mxu0 0.0
    %2297 = vmatpush1.msra.mxu0 %v2287
    %2298 = vmatprep.subr.mxu0 0.0
    %2299 = vmatpush1.msra.mxu0 %v2288
    %2300 = vmatprep.subr.mxu0 0.0
    %2301 = vmatpush1.msra.mxu0 %v2289
    %2302 = vmatprep.subr.mxu0 0.0
    %2303 = vmatpush1.msra.mxu0 %v2290
    %2304 = vmatprep.subr.mxu0 0.0
    %2305 = vmatpush1.msra.mxu0 0.0
    %2306 = vmatprep.subr.mxu0 0.0
    %2307 = vmatpush1.msra.mxu0 0.0
    %2308 = vmatprep.subr.mxu0 0.0
    %2309 = vmatpush1.msra.mxu0 0.0
    %2310 = vmatprep.subr.mxu0 0.0
    %2311 = vmatpush1.msra.mxu0 0.0
    %2312 = vmatprep.subr.mxu0 0.0
    %2313 = vmatpush1.msra.mxu0 0.0
    %2314 = vmatprep.subr.mxu0 0.0
    %2315 = vmatpush1.msra.mxu0 0.0
    %2316 = vmatprep.subr.mxu0 0.0
    %2317 = vmatpush1.msra.mxu0 0.0
    %2318 = vmatprep.subr.mxu0 0.0
    %2319 = vmatpush1.msra.mxu0 0.0
    %2320 = vmatprep.subr.mxu0 0.0
    %2321 = vmatpush1.msra.mxu0 0.0
    %2322 = vmatprep.subr.mxu0 0.0
    %2323 = vmatpush1.msra.mxu0 0.0
    %2324 = vmatprep.subr.mxu0 0.0
    %2325 = vmatpush1.msra.mxu0 0.0
    %2326 = vmatprep.subr.mxu0 0.0
    %2327 = vmatpush1.msra.mxu0 0.0
    %2328 = vmatprep.subr.mxu0 0.0
    %2329 = vmatpush1.msra.mxu0 0.0
    %2330 = vmatprep.subr.mxu0 0.0
    %2331 = vmatpush1.msra.mxu0 0.0
    %2332 = vmatprep.subr.mxu0 0.0
    %2333 = vmatpush1.msra.mxu0 0.0
    %2334 = vmatprep.subr.mxu0 0.0
    %2335 = vmatpush1.msra.mxu0 0.0
    %2336 = vmatprep.subr.mxu0 0.0
    %2337 = vmatpush1.msra.mxu0 0.0
    %2338 = vmatprep.subr.mxu0 0.0
    %2339 = vmatpush1.msra.mxu0 0.0
    %2340 = vmatprep.subr.mxu0 0.0
    %2341 = vmatpush1.msra.mxu0 0.0
    %2342 = vmatprep.subr.mxu0 0.0
    %2343 = vmatpush1.msra.mxu0 0.0
    %2344 = vmatprep.subr.mxu0 0.0
    %2345 = vmatpush1.msra.mxu0 0.0
    %2346 = vmatprep.subr.mxu0 0.0
    %2347 = vmatpush1.msra.mxu0 0.0
    %2348 = vmatprep.subr.mxu0 0.0
    %2349 = vmatpush1.msra.mxu0 0.0
    %2350 = vmatprep.subr.mxu0 0.0
    %2351 = vmatpush1.msra.mxu0 0.0
    %2352 = vmatprep.subr.mxu0 0.0
    %2353 = vmatpush1.msra.mxu0 0.0
    %2354 = vmatprep.subr.mxu0 0.0
    %2355 = vmatpush1.msra.mxu0 0.0
    %2356 = vmatprep.subr.mxu0 0.0
    %2357 = vmatpush1.msra.mxu0 0.0
    %2358 = vmatprep.subr.mxu0 0.0
    %2359 = vmatpush1.msra.mxu0 0.0
    %2360 = vmatprep.mubr.f32.mxu0 0.0
    %2361 = vmatmul.mubr.f32.gmra.mrb[0].mxu0 %v2294
    %v2362 = vpop.f32.mrb[0].mxu0
    %v2363 = vadd.f32 0.0, %v2362
    %v2364 = vpop.f32.mrb[0].mxu0
    %2365 = vdwg.mxu0
    %v2367 = vrot.slane %v2363, 4
    %v2369 = vadd.f32 %v2047, %v2367
    %v2370 = vsub.f32 0.0, %v2369
    %v2371 = vmul.f32 %v2370, 1.442695
    %v2372 = vpow.pop %v2371
    %v2373 = vadd.f32 %v2372, 1.0
    %v2374 = vrcp.pop %v2373
    %v2375 = vmul.f32 1.0, %v2374
    %v2376 = vtanh.pop %v2369
    %v2378 = vrot.slane %v2275, 6
    %v2380 = vmul.f32 %v2375, %v2378
    %2382 = vrot.lane.b32.xlu0 %v2376, 64
    %v2383 = vpop.permute.xlu0 %2382
    %v2385 = vmul.f32 %v2375, %v2383
    %2387 = vrot.lane.b32.xlu0 %v2385, 32
    %v2388 = vpop.permute.xlu0 %2387
    %v2390 = vadd.f32 %v2380, %v2388
    %v2391 = vtanh.pop %v2390
    %2393 = vrot.lane.b32.xlu0 %v2391, 64
    %v2394 = vpop.permute.xlu0 %2393
    %v2396 = vmul.f32 %v2375, %v2394
    %2398 = vrot.lane.b32.xlu0 %v2396, 32
    %v2399 = vpop.permute.xlu0 %2398
    %2401 = vst.msk [vmem:[#allocation2] sm:$0x30] %vm1267, %v2399
    %v2402 = vld [vmem:[%s17] sm:$0xff]
    %v2403 = vld [vmem:[%s17 + $0x8] sm:$0xff]
    %v2404 = vld [vmem:[%s17 + $0x10] sm:$0xff]
    %v2405 = vld [vmem:[%s17 + $0x18] sm:$0xff]
    %v2406 = vrot.slane %v2396, 4
    %2407 = vrot.lane.b32.xlu0 %v2406, 32
    %v2408 = vpop.permute.xlu0 %2407
    %v2409 = vsel %vm118, %v2408, 0
    %2411 = vmatprep.subr.mxu0 0.0
    %2412 = vmatpush1.msra.mxu0 %v2402
    %2413 = vmatprep.subr.mxu0 0.0
    %2414 = vmatpush1.msra.mxu0 %v2403
    %2415 = vmatprep.subr.mxu0 0.0
    %2416 = vmatpush1.msra.mxu0 %v2404
    %2417 = vmatprep.subr.mxu0 0.0
    %2418 = vmatpush1.msra.mxu0 %v2405
    %2419 = vmatprep.subr.mxu0 0.0
    %2420 = vmatpush1.msra.mxu0 0.0
    %2421 = vmatprep.subr.mxu0 0.0
    %2422 = vmatpush1.msra.mxu0 0.0
    %2423 = vmatprep.subr.mxu0 0.0
    %2424 = vmatpush1.msra.mxu0 0.0
    %2425 = vmatprep.subr.mxu0 0.0
    %2426 = vmatpush1.msra.mxu0 0.0
    %2427 = vmatprep.subr.mxu0 0.0
    %2428 = vmatpush1.msra.mxu0 0.0
    %2429 = vmatprep.subr.mxu0 0.0
    %2430 = vmatpush1.msra.mxu0 0.0
    %2431 = vmatprep.subr.mxu0 0.0
    %2432 = vmatpush1.msra.mxu0 0.0
    %2433 = vmatprep.subr.mxu0 0.0
    %2434 = vmatpush1.msra.mxu0 0.0
    %2435 = vmatprep.subr.mxu0 0.0
    %2436 = vmatpush1.msra.mxu0 0.0
    %2437 = vmatprep.subr.mxu0 0.0
    %2438 = vmatpush1.msra.mxu0 0.0
    %2439 = vmatprep.subr.mxu0 0.0
    %2440 = vmatpush1.msra.mxu0 0.0
    %2441 = vmatprep.subr.mxu0 0.0
    %2442 = vmatpush1.msra.mxu0 0.0
    %2443 = vmatprep.subr.mxu0 0.0
    %2444 = vmatpush1.msra.mxu0 0.0
    %2445 = vmatprep.subr.mxu0 0.0
    %2446 = vmatpush1.msra.mxu0 0.0
    %2447 = vmatprep.subr.mxu0 0.0
    %2448 = vmatpush1.msra.mxu0 0.0
    %2449 = vmatprep.subr.mxu0 0.0
    %2450 = vmatpush1.msra.mxu0 0.0
    %2451 = vmatprep.subr.mxu0 0.0
    %2452 = vmatpush1.msra.mxu0 0.0
    %2453 = vmatprep.subr.mxu0 0.0
    %2454 = vmatpush1.msra.mxu0 0.0
    %2455 = vmatprep.subr.mxu0 0.0
    %2456 = vmatpush1.msra.mxu0 0.0
    %2457 = vmatprep.subr.mxu0 0.0
    %2458 = vmatpush1.msra.mxu0 0.0
    %2459 = vmatprep.subr.mxu0 0.0
    %2460 = vmatpush1.msra.mxu0 0.0
    %2461 = vmatprep.subr.mxu0 0.0
    %2462 = vmatpush1.msra.mxu0 0.0
    %2463 = vmatprep.subr.mxu0 0.0
    %2464 = vmatpush1.msra.mxu0 0.0
    %2465 = vmatprep.subr.mxu0 0.0
    %2466 = vmatpush1.msra.mxu0 0.0
    %2467 = vmatprep.subr.mxu0 0.0
    %2468 = vmatpush1.msra.mxu0 0.0
    %2469 = vmatprep.subr.mxu0 0.0
    %2470 = vmatpush1.msra.mxu0 0.0
    %2471 = vmatprep.subr.mxu0 0.0
    %2472 = vmatpush1.msra.mxu0 0.0
    %2473 = vmatprep.subr.mxu0 0.0
    %2474 = vmatpush1.msra.mxu0 0.0
    %2475 = vmatprep.mubr.f32.mxu0 0.0
    %2476 = vmatmul.mubr.f32.gmra.mrb[0].mxu0 %v2409
    %v2477 = vpop.f32.mrb[0].mxu0
    %v2478 = vadd.f32 0.0, %v2477
    %v2479 = vpop.f32.mrb[0].mxu0
    %2480 = vdwg.mxu0
    %v2482 = vrot.slane %v2478, 2
    %v2484 = vadd.f32 %v2047, %v2482
    %v2485 = vsub.f32 0.0, %v2484
    %v2486 = vmul.f32 %v2485, 1.442695
    %v2487 = vpow.pop %v2486
    %v2488 = vadd.f32 %v2487, 1.0
    %v2489 = vrcp.pop %v2488
    %v2490 = vmul.f32 1.0, %v2489
    %v2491 = vtanh.pop %v2484
    %v2493 = vrot.slane %v2390, 6
    %v2495 = vmul.f32 %v2490, %v2493
    %2497 = vrot.lane.b32.xlu0 %v2491, 64
    %v2498 = vpop.permute.xlu0 %2497
    %v2500 = vmul.f32 %v2490, %v2498
    %2502 = vrot.lane.b32.xlu0 %v2500, 32
    %v2503 = vpop.permute.xlu0 %2502
    %v2505 = vadd.f32 %v2495, %v2503
    %v2506 = vtanh.pop %v2505
    %2508 = vrot.lane.b32.xlu0 %v2506, 64
    %v2509 = vpop.permute.xlu0 %2508
    %v2511 = vmul.f32 %v2490, %v2509
    %2513 = vrot.lane.b32.xlu0 %v2511, 32
    %v2514 = vpop.permute.xlu0 %2513
    %2516 = vst.msk [vmem:[#allocation2] sm:$0xc0] %vm1383, %v2514
    %v2517 = vld [vmem:[%s17] sm:$0xff]
    %v2518 = vld [vmem:[%s17 + $0x8] sm:$0xff]
    %v2519 = vld [vmem:[%s17 + $0x10] sm:$0xff]
    %v2520 = vld [vmem:[%s17 + $0x18] sm:$0xff]
    %v2521 = vrot.slane %v2511, 6
    %2522 = vrot.lane.b32.xlu0 %v2521, 32
    %v2523 = vpop.permute.xlu0 %2522
    %v2524 = vsel %vm118, %v2523, 0
    %2526 = vmatprep.subr.mxu0 0.0
    %2527 = vmatpush1.msra.mxu0 %v2517
    %2528 = vmatprep.subr.mxu0 0.0
    %2529 = vmatpush1.msra.mxu0 %v2518
    %2530 = vmatprep.subr.mxu0 0.0
    %2531 = vmatpush1.msra.mxu0 %v2519
    %2532 = vmatprep.subr.mxu0 0.0
    %2533 = vmatpush1.msra.mxu0 %v2520
    %2534 = vmatprep.subr.mxu0 0.0
    %2535 = vmatpush1.msra.mxu0 0.0
    %2536 = vmatprep.subr.mxu0 0.0
    %2537 = vmatpush1.msra.mxu0 0.0
    %2538 = vmatprep.subr.mxu0 0.0
    %2539 = vmatpush1.msra.mxu0 0.0
    %2540 = vmatprep.subr.mxu0 0.0
    %2541 = vmatpush1.msra.mxu0 0.0
    %2542 = vmatprep.subr.mxu0 0.0
    %2543 = vmatpush1.msra.mxu0 0.0
    %2544 = vmatprep.subr.mxu0 0.0
    %2545 = vmatpush1.msra.mxu0 0.0
    %2546 = vmatprep.subr.mxu0 0.0
    %2547 = vmatpush1.msra.mxu0 0.0
    %2548 = vmatprep.subr.mxu0 0.0
    %2549 = vmatpush1.msra.mxu0 0.0
    %2550 = vmatprep.subr.mxu0 0.0
    %2551 = vmatpush1.msra.mxu0 0.0
    %2552 = vmatprep.subr.mxu0 0.0
    %2553 = vmatpush1.msra.mxu0 0.0
    %2554 = vmatprep.subr.mxu0 0.0
    %2555 = vmatpush1.msra.mxu0 0.0
    %2556 = vmatprep.subr.mxu0 0.0
    %2557 = vmatpush1.msra.mxu0 0.0
    %2558 = vmatprep.subr.mxu0 0.0
    %2559 = vmatpush1.msra.mxu0 0.0
    %2560 = vmatprep.subr.mxu0 0.0
    %2561 = vmatpush1.msra.mxu0 0.0
    %2562 = vmatprep.subr.mxu0 0.0
    %2563 = vmatpush1.msra.mxu0 0.0
    %2564 = vmatprep.subr.mxu0 0.0
    %2565 = vmatpush1.msra.mxu0 0.0
    %2566 = vmatprep.subr.mxu0 0.0
    %2567 = vmatpush1.msra.mxu0 0.0
    %2568 = vmatprep.subr.mxu0 0.0
    %2569 = vmatpush1.msra.mxu0 0.0
    %2570 = vmatprep.subr.mxu0 0.0
    %2571 = vmatpush1.msra.mxu0 0.0
    %2572 = vmatprep.subr.mxu0 0.0
    %2573 = vmatpush1.msra.mxu0 0.0
    %2574 = vmatprep.subr.mxu0 0.0
    %2575 = vmatpush1.msra.mxu0 0.0
    %2576 = vmatprep.subr.mxu0 0.0
    %2577 = vmatpush1.msra.mxu0 0.0
    %2578 = vmatprep.subr.mxu0 0.0
    %2579 = vmatpush1.msra.mxu0 0.0
    %2580 = vmatprep.subr.mxu0 0.0
    %2581 = vmatpush1.msra.mxu0 0.0
    %2582 = vmatprep.subr.mxu0 0.0
    %2583 = vmatpush1.msra.mxu0 0.0
    %2584 = vmatprep.subr.mxu0 0.0
    %2585 = vmatpush1.msra.mxu0 0.0
    %2586 = vmatprep.subr.mxu0 0.0
    %2587 = vmatpush1.msra.mxu0 0.0
    %2588 = vmatprep.subr.mxu0 0.0
    %2589 = vmatpush1.msra.mxu0 0.0
    %2590 = vmatprep.mubr.f32.mxu0 0.0
    %2591 = vmatmul.mubr.f32.gmra.mrb[0].mxu0 %v2524
    %v2592 = vpop.f32.mrb[0].mxu0
    %v2593 = vadd.f32 0.0, %v2592
    %v2594 = vpop.f32.mrb[0].mxu0
    %2595 = vdwg.mxu0
    %v2596 = vadd.f32 %v2052, %v2593
    %v2597 = vsub.f32 0.0, %v2596
    %v2598 = vmul.f32 %v2597, 1.442695
    %v2599 = vpow.pop %v2598
    %v2600 = vadd.f32 %v2599, 1.0
    %v2601 = vrcp.pop %v2600
    %v2602 = vmul.f32 1.0, %v2601
    %v2603 = vtanh.pop %v2596
    %v2605 = vrot.slane %v2505, 6
    %v2607 = vmul.f32 %v2602, %v2605
    %2609 = vrot.lane.b32.xlu0 %v2603, 64
    %v2610 = vpop.permute.xlu0 %2609
    %v2612 = vmul.f32 %v2602, %v2610
    %2614 = vrot.lane.b32.xlu0 %v2612, 32
    %v2615 = vpop.permute.xlu0 %2614
    %v2617 = vadd.f32 %v2607, %v2615
    %v2618 = vtanh.pop %v2617
    %2620 = vrot.lane.b32.xlu0 %v2618, 64
    %v2621 = vpop.permute.xlu0 %2620
    %v2623 = vmul.f32 %v2602, %v2621
    %2625 = vrot.lane.b32.xlu0 %v2623, 32
    %v2626 = vpop.permute.xlu0 %2625
    %2628 = vst.msk [vmem:[#allocation2 + $0x8] sm:$0x3] %vm1038, %v2626
    %v2629 = vld [vmem:[%s17] sm:$0xff]
    %v2630 = vld [vmem:[%s17 + $0x8] sm:$0xff]
    %v2631 = vld [vmem:[%s17 + $0x10] sm:$0xff]
    %v2632 = vld [vmem:[%s17 + $0x18] sm:$0xff]
    %v2633 = vsel %vm118, %v2626, 0
    %2635 = vmatprep.subr.mxu0 0.0
    %2636 = vmatpush1.msra.mxu0 %v2629
    %2637 = vmatprep.subr.mxu0 0.0
    %2638 = vmatpush1.msra.mxu0 %v2630
    %2639 = vmatprep.subr.mxu0 0.0
    %2640 = vmatpush1.msra.mxu0 %v2631
    %2641 = vmatprep.subr.mxu0 0.0
    %2642 = vmatpush1.msra.mxu0 %v2632
    %2643 = vmatprep.subr.mxu0 0.0
    %2644 = vmatpush1.msra.mxu0 0.0
    %2645 = vmatprep.subr.mxu0 0.0
    %2646 = vmatpush1.msra.mxu0 0.0
    %2647 = vmatprep.subr.mxu0 0.0
    %2648 = vmatpush1.msra.mxu0 0.0
    %2649 = vmatprep.subr.mxu0 0.0
    %2650 = vmatpush1.msra.mxu0 0.0
    %2651 = vmatprep.subr.mxu0 0.0
    %2652 = vmatpush1.msra.mxu0 0.0
    %2653 = vmatprep.subr.mxu0 0.0
    %2654 = vmatpush1.msra.mxu0 0.0
    %2655 = vmatprep.subr.mxu0 0.0
    %2656 = vmatpush1.msra.mxu0 0.0
    %2657 = vmatprep.subr.mxu0 0.0
    %2658 = vmatpush1.msra.mxu0 0.0
    %2659 = vmatprep.subr.mxu0 0.0
    %2660 = vmatpush1.msra.mxu0 0.0
    %2661 = vmatprep.subr.mxu0 0.0
    %2662 = vmatpush1.msra.mxu0 0.0
    %2663 = vmatprep.subr.mxu0 0.0
    %2664 = vmatpush1.msra.mxu0 0.0
    %2665 = vmatprep.subr.mxu0 0.0
    %2666 = vmatpush1.msra.mxu0 0.0
    %2667 = vmatprep.subr.mxu0 0.0
    %2668 = vmatpush1.msra.mxu0 0.0
    %2669 = vmatprep.subr.mxu0 0.0
    %2670 = vmatpush1.msra.mxu0 0.0
    %2671 = vmatprep.subr.mxu0 0.0
    %2672 = vmatpush1.msra.mxu0 0.0
    %2673 = vmatprep.subr.mxu0 0.0
    %2674 = vmatpush1.msra.mxu0 0.0
    %2675 = vmatprep.subr.mxu0 0.0
    %2676 = vmatpush1.msra.mxu0 0.0
    %2677 = vmatprep.subr.mxu0 0.0
    %2678 = vmatpush1.msra.mxu0 0.0
    %2679 = vmatprep.subr.mxu0 0.0
    %2680 = vmatpush1.msra.mxu0 0.0
    %2681 = vmatprep.subr.mxu0 0.0
    %2682 = vmatpush1.msra.mxu0 0.0
    %2683 = vmatprep.subr.mxu0 0.0
    %2684 = vmatpush1.msra.mxu0 0.0
    %2685 = vmatprep.subr.mxu0 0.0
    %2686 = vmatpush1.msra.mxu0 0.0
    %2687 = vmatprep.subr.mxu0 0.0
    %2688 = vmatpush1.msra.mxu0 0.0
    %2689 = vmatprep.subr.mxu0 0.0
    %2690 = vmatpush1.msra.mxu0 0.0
    %2691 = vmatprep.subr.mxu0 0.0
    %2692 = vmatpush1.msra.mxu0 0.0
    %2693 = vmatprep.subr.mxu0 0.0
    %2694 = vmatpush1.msra.mxu0 0.0
    %2695 = vmatprep.subr.mxu0 0.0
    %2696 = vmatpush1.msra.mxu0 0.0
    %2697 = vmatprep.subr.mxu0 0.0
    %2698 = vmatpush1.msra.mxu0 0.0
    %2699 = vmatprep.mubr.f32.mxu0 0.0
    %2700 = vmatmul.mubr.f32.gmra.mrb[0].mxu0 %v2633
    %v2701 = vpop.f32.mrb[0].mxu0
    %v2702 = vadd.f32 0.0, %v2701
    %v2703 = vpop.f32.mrb[0].mxu0
    %2704 = vdwg.mxu0
    %v2706 = vrot.slane %v2702, 6
    %v2708 = vadd.f32 %v2052, %v2706
    %v2709 = vsub.f32 0.0, %v2708
    %v2710 = vmul.f32 %v2709, 1.442695
    %v2711 = vpow.pop %v2710
    %v2712 = vadd.f32 %v2711, 1.0
    %v2713 = vrcp.pop %v2712
    %v2714 = vmul.f32 1.0, %v2713
    %v2715 = vtanh.pop %v2708
    %v2717 = vrot.slane %v2617, 6
    %v2719 = vmul.f32 %v2714, %v2717
    %2721 = vrot.lane.b32.xlu0 %v2715, 64
    %v2722 = vpop.permute.xlu0 %2721
    %v2724 = vmul.f32 %v2714, %v2722
    %2726 = vrot.lane.b32.xlu0 %v2724, 32
    %v2727 = vpop.permute.xlu0 %2726
    %v2729 = vadd.f32 %v2719, %v2727
    %v2730 = vtanh.pop %v2729
    %2732 = vrot.lane.b32.xlu0 %v2730, 64
    %v2733 = vpop.permute.xlu0 %2732
    %v2735 = vmul.f32 %v2714, %v2733
    %2737 = vrot.lane.b32.xlu0 %v2735, 32
    %v2738 = vpop.permute.xlu0 %2737
    %2740 = vst.msk [vmem:[#allocation2 + $0x8] sm:$0xc] %vm1151, %v2738
    %v2741 = vld [vmem:[%s17] sm:$0xff]
    %v2742 = vld [vmem:[%s17 + $0x8] sm:$0xff]
    %v2743 = vld [vmem:[%s17 + $0x10] sm:$0xff]
    %v2744 = vld [vmem:[%s17 + $0x18] sm:$0xff]
    %v2745 = vrot.slane %v2735, 2
    %2746 = vrot.lane.b32.xlu0 %v2745, 32
    %v2747 = vpop.permute.xlu0 %2746
    %v2748 = vsel %vm118, %v2747, 0
    %2750 = vmatprep.subr.mxu0 0.0
    %2751 = vmatpush1.msra.mxu0 %v2741
    %2752 = vmatprep.subr.mxu0 0.0
    %2753 = vmatpush1.msra.mxu0 %v2742
    %2754 = vmatprep.subr.mxu0 0.0
    %2755 = vmatpush1.msra.mxu0 %v2743
    %2756 = vmatprep.subr.mxu0 0.0
    %2757 = vmatpush1.msra.mxu0 %v2744
    %2758 = vmatprep.subr.mxu0 0.0
    %2759 = vmatpush1.msra.mxu0 0.0
    %2760 = vmatprep.subr.mxu0 0.0
    %2761 = vmatpush1.msra.mxu0 0.0
    %2762 = vmatprep.subr.mxu0 0.0
    %2763 = vmatpush1.msra.mxu0 0.0
    %2764 = vmatprep.subr.mxu0 0.0
    %2765 = vmatpush1.msra.mxu0 0.0
    %2766 = vmatprep.subr.mxu0 0.0
    %2767 = vmatpush1.msra.mxu0 0.0
    %2768 = vmatprep.subr.mxu0 0.0
    %2769 = vmatpush1.msra.mxu0 0.0
    %2770 = vmatprep.subr.mxu0 0.0
    %2771 = vmatpush1.msra.mxu0 0.0
    %2772 = vmatprep.subr.mxu0 0.0
    %2773 = vmatpush1.msra.mxu0 0.0
    %2774 = vmatprep.subr.mxu0 0.0
    %2775 = vmatpush1.msra.mxu0 0.0
    %2776 = vmatprep.subr.mxu0 0.0
    %2777 = vmatpush1.msra.mxu0 0.0
    %2778 = vmatprep.subr.mxu0 0.0
    %2779 = vmatpush1.msra.mxu0 0.0
    %2780 = vmatprep.subr.mxu0 0.0
    %2781 = vmatpush1.msra.mxu0 0.0
    %2782 = vmatprep.subr.mxu0 0.0
    %2783 = vmatpush1.msra.mxu0 0.0
    %2784 = vmatprep.subr.mxu0 0.0
    %2785 = vmatpush1.msra.mxu0 0.0
    %2786 = vmatprep.subr.mxu0 0.0
    %2787 = vmatpush1.msra.mxu0 0.0
    %2788 = vmatprep.subr.mxu0 0.0
    %2789 = vmatpush1.msra.mxu0 0.0
    %2790 = vmatprep.subr.mxu0 0.0
    %2791 = vmatpush1.msra.mxu0 0.0
    %2792 = vmatprep.subr.mxu0 0.0
    %2793 = vmatpush1.msra.mxu0 0.0
    %2794 = vmatprep.subr.mxu0 0.0
    %2795 = vmatpush1.msra.mxu0 0.0
    %2796 = vmatprep.subr.mxu0 0.0
    %2797 = vmatpush1.msra.mxu0 0.0
    %2798 = vmatprep.subr.mxu0 0.0
    %2799 = vmatpush1.msra.mxu0 0.0
    %2800 = vmatprep.subr.mxu0 0.0
    %2801 = vmatpush1.msra.mxu0 0.0
    %2802 = vmatprep.subr.mxu0 0.0
    %2803 = vmatpush1.msra.mxu0 0.0
    %2804 = vmatprep.subr.mxu0 0.0
    %2805 = vmatpush1.msra.mxu0 0.0
    %2806 = vmatprep.subr.mxu0 0.0
    %2807 = vmatpush1.msra.mxu0 0.0
    %2808 = vmatprep.subr.mxu0 0.0
    %2809 = vmatpush1.msra.mxu0 0.0
    %2810 = vmatprep.subr.mxu0 0.0
    %2811 = vmatpush1.msra.mxu0 0.0
    %2812 = vmatprep.subr.mxu0 0.0
    %2813 = vmatpush1.msra.mxu0 0.0
    %2814 = vmatprep.mubr.f32.mxu0 0.0
    %2815 = vmatmul.mubr.f32.gmra.mrb[0].mxu0 %v2748
    %v2816 = vpop.f32.mrb[0].mxu0
    %v2817 = vadd.f32 0.0, %v2816
    %v2818 = vpop.f32.mrb[0].mxu0
    %2819 = vdwg.mxu0
    %v2821 = vrot.slane %v2817, 4
    %v2823 = vadd.f32 %v2052, %v2821
    %v2824 = vsub.f32 0.0, %v2823
    %v2825 = vmul.f32 %v2824, 1.442695
    %v2826 = vpow.pop %v2825
    %v2827 = vadd.f32 %v2826, 1.0
    %v2828 = vrcp.pop %v2827
    %v2829 = vmul.f32 1.0, %v2828
    %v2830 = vtanh.pop %v2823
    %v2832 = vrot.slane %v2729, 6
    %v2834 = vmul.f32 %v2829, %v2832
    %2836 = vrot.lane.b32.xlu0 %v2830, 64
    %v2837 = vpop.permute.xlu0 %2836
    %v2839 = vmul.f32 %v2829, %v2837
    %2841 = vrot.lane.b32.xlu0 %v2839, 32
    %v2842 = vpop.permute.xlu0 %2841
    %v2844 = vadd.f32 %v2834, %v2842
    %v2845 = vtanh.pop %v2844
    %2847 = vrot.lane.b32.xlu0 %v2845, 64
    %v2848 = vpop.permute.xlu0 %2847
    %v2850 = vmul.f32 %v2829, %v2848
    %2852 = vrot.lane.b32.xlu0 %v2850, 32
    %v2853 = vpop.permute.xlu0 %2852
    %2855 = vst.msk [vmem:[#allocation2 + $0x8] sm:$0x30] %vm1267, %v2853
    %v2856 = vld [vmem:[%s17] sm:$0xff]
    %v2857 = vld [vmem:[%s17 + $0x8] sm:$0xff]
    %v2858 = vld [vmem:[%s17 + $0x10] sm:$0xff]
    %v2859 = vld [vmem:[%s17 + $0x18] sm:$0xff]
    %v2860 = vrot.slane %v2850, 4
    %2861 = vrot.lane.b32.xlu0 %v2860, 32
    %v2862 = vpop.permute.xlu0 %2861
    %v2863 = vsel %vm118, %v2862, 0
    %2865 = vmatprep.subr.mxu0 0.0
    %2866 = vmatpush1.msra.mxu0 %v2856
    %2867 = vmatprep.subr.mxu0 0.0
    %2868 = vmatpush1.msra.mxu0 %v2857
    %2869 = vmatprep.subr.mxu0 0.0
    %2870 = vmatpush1.msra.mxu0 %v2858
    %2871 = vmatprep.subr.mxu0 0.0
    %2872 = vmatpush1.msra.mxu0 %v2859
    %2873 = vmatprep.subr.mxu0 0.0
    %2874 = vmatpush1.msra.mxu0 0.0
    %2875 = vmatprep.subr.mxu0 0.0
    %2876 = vmatpush1.msra.mxu0 0.0
    %2877 = vmatprep.subr.mxu0 0.0
    %2878 = vmatpush1.msra.mxu0 0.0
    %2879 = vmatprep.subr.mxu0 0.0
    %2880 = vmatpush1.msra.mxu0 0.0
    %2881 = vmatprep.subr.mxu0 0.0
    %2882 = vmatpush1.msra.mxu0 0.0
    %2883 = vmatprep.subr.mxu0 0.0
    %2884 = vmatpush1.msra.mxu0 0.0
    %2885 = vmatprep.subr.mxu0 0.0
    %2886 = vmatpush1.msra.mxu0 0.0
    %2887 = vmatprep.subr.mxu0 0.0
    %2888 = vmatpush1.msra.mxu0 0.0
    %2889 = vmatprep.subr.mxu0 0.0
    %2890 = vmatpush1.msra.mxu0 0.0
    %2891 = vmatprep.subr.mxu0 0.0
    %2892 = vmatpush1.msra.mxu0 0.0
    %2893 = vmatprep.subr.mxu0 0.0
    %2894 = vmatpush1.msra.mxu0 0.0
    %2895 = vmatprep.subr.mxu0 0.0
    %2896 = vmatpush1.msra.mxu0 0.0
    %2897 = vmatprep.subr.mxu0 0.0
    %2898 = vmatpush1.msra.mxu0 0.0
    %2899 = vmatprep.subr.mxu0 0.0
    %2900 = vmatpush1.msra.mxu0 0.0
    %2901 = vmatprep.subr.mxu0 0.0
    %2902 = vmatpush1.msra.mxu0 0.0
    %2903 = vmatprep.subr.mxu0 0.0
    %2904 = vmatpush1.msra.mxu0 0.0
    %2905 = vmatprep.subr.mxu0 0.0
    %2906 = vmatpush1.msra.mxu0 0.0
    %2907 = vmatprep.subr.mxu0 0.0
    %2908 = vmatpush1.msra.mxu0 0.0
    %2909 = vmatprep.subr.mxu0 0.0
    %2910 = vmatpush1.msra.mxu0 0.0
    %2911 = vmatprep.subr.mxu0 0.0
    %2912 = vmatpush1.msra.mxu0 0.0
    %2913 = vmatprep.subr.mxu0 0.0
    %2914 = vmatpush1.msra.mxu0 0.0
    %2915 = vmatprep.subr.mxu0 0.0
    %2916 = vmatpush1.msra.mxu0 0.0
    %2917 = vmatprep.subr.mxu0 0.0
    %2918 = vmatpush1.msra.mxu0 0.0
    %2919 = vmatprep.subr.mxu0 0.0
    %2920 = vmatpush1.msra.mxu0 0.0
    %2921 = vmatprep.subr.mxu0 0.0
    %2922 = vmatpush1.msra.mxu0 0.0
    %2923 = vmatprep.subr.mxu0 0.0
    %2924 = vmatpush1.msra.mxu0 0.0
    %2925 = vmatprep.subr.mxu0 0.0
    %2926 = vmatpush1.msra.mxu0 0.0
    %2927 = vmatprep.subr.mxu0 0.0
    %2928 = vmatpush1.msra.mxu0 0.0
    %2929 = vmatprep.mubr.f32.mxu0 0.0
    %2930 = vmatmul.mubr.f32.gmra.mrb[0].mxu0 %v2863
    %v2931 = vpop.f32.mrb[0].mxu0
    %v2932 = vadd.f32 0.0, %v2931
    %v2933 = vpop.f32.mrb[0].mxu0
    %2934 = vdwg.mxu0
    %v2936 = vrot.slane %v2932, 2
    %v2938 = vadd.f32 %v2052, %v2936
    %v2939 = vsub.f32 0.0, %v2938
    %v2940 = vmul.f32 %v2939, 1.442695
    %v2941 = vpow.pop %v2940
    %v2942 = vadd.f32 %v2941, 1.0
    %v2943 = vrcp.pop %v2942
    %v2944 = vmul.f32 1.0, %v2943
    %v2945 = vtanh.pop %v2938
    %v2947 = vrot.slane %v2844, 6
    %v2949 = vmul.f32 %v2944, %v2947
    %2951 = vrot.lane.b32.xlu0 %v2945, 64
    %v2952 = vpop.permute.xlu0 %2951
    %v2954 = vmul.f32 %v2944, %v2952
    %2956 = vrot.lane.b32.xlu0 %v2954, 32
    %v2957 = vpop.permute.xlu0 %2956
    %v2959 = vadd.f32 %v2949, %v2957
    %v2960 = vtanh.pop %v2959
    %2962 = vrot.lane.b32.xlu0 %v2960, 64
    %v2963 = vpop.permute.xlu0 %2962
    %v2965 = vmul.f32 %v2944, %v2963
    %2967 = vrot.lane.b32.xlu0 %v2965, 32
    %v2968 = vpop.permute.xlu0 %2967
    %2970 = vst.msk [vmem:[#allocation2 + $0x8] sm:$0xc0] %vm1383, %v2968
    %v2971 = vld [vmem:[%s17] sm:$0xff]
    %v2972 = vld [vmem:[%s17 + $0x8] sm:$0xff]
    %v2973 = vld [vmem:[%s17 + $0x10] sm:$0xff]
    %v2974 = vld [vmem:[%s17 + $0x18] sm:$0xff]
    %v2975 = vrot.slane %v2965, 6
    %2976 = vrot.lane.b32.xlu0 %v2975, 32
    %v2977 = vpop.permute.xlu0 %2976
    %v2978 = vsel %vm118, %v2977, 0
    %2980 = vmatprep.subr.mxu0 0.0
    %2981 = vmatpush1.msra.mxu0 %v2971
    %2982 = vmatprep.subr.mxu0 0.0
    %2983 = vmatpush1.msra.mxu0 %v2972
    %2984 = vmatprep.subr.mxu0 0.0
    %2985 = vmatpush1.msra.mxu0 %v2973
    %2986 = vmatprep.subr.mxu0 0.0
    %2987 = vmatpush1.msra.mxu0 %v2974
    %2988 = vmatprep.subr.mxu0 0.0
    %2989 = vmatpush1.msra.mxu0 0.0
    %2990 = vmatprep.subr.mxu0 0.0
    %2991 = vmatpush1.msra.mxu0 0.0
    %2992 = vmatprep.subr.mxu0 0.0
    %2993 = vmatpush1.msra.mxu0 0.0
    %2994 = vmatprep.subr.mxu0 0.0
    %2995 = vmatpush1.msra.mxu0 0.0
    %2996 = vmatprep.subr.mxu0 0.0
    %2997 = vmatpush1.msra.mxu0 0.0
    %2998 = vmatprep.subr.mxu0 0.0
    %2999 = vmatpush1.msra.mxu0 0.0
    %3000 = vmatprep.subr.mxu0 0.0
    %3001 = vmatpush1.msra.mxu0 0.0
    %3002 = vmatprep.subr.mxu0 0.0
    %3003 = vmatpush1.msra.mxu0 0.0
    %3004 = vmatprep.subr.mxu0 0.0
    %3005 = vmatpush1.msra.mxu0 0.0
    %3006 = vmatprep.subr.mxu0 0.0
    %3007 = vmatpush1.msra.mxu0 0.0
    %3008 = vmatprep.subr.mxu0 0.0
    %3009 = vmatpush1.msra.mxu0 0.0
    %3010 = vmatprep.subr.mxu0 0.0
    %3011 = vmatpush1.msra.mxu0 0.0
    %3012 = vmatprep.subr.mxu0 0.0
    %3013 = vmatpush1.msra.mxu0 0.0
    %3014 = vmatprep.subr.mxu0 0.0
    %3015 = vmatpush1.msra.mxu0 0.0
    %3016 = vmatprep.subr.mxu0 0.0
    %3017 = vmatpush1.msra.mxu0 0.0
    %3018 = vmatprep.subr.mxu0 0.0
    %3019 = vmatpush1.msra.mxu0 0.0
    %3020 = vmatprep.subr.mxu0 0.0
    %3021 = vmatpush1.msra.mxu0 0.0
    %3022 = vmatprep.subr.mxu0 0.0
    %3023 = vmatpush1.msra.mxu0 0.0
    %3024 = vmatprep.subr.mxu0 0.0
    %3025 = vmatpush1.msra.mxu0 0.0
    %3026 = vmatprep.subr.mxu0 0.0
    %3027 = vmatpush1.msra.mxu0 0.0
    %3028 = vmatprep.subr.mxu0 0.0
    %3029 = vmatpush1.msra.mxu0 0.0
    %3030 = vmatprep.subr.mxu0 0.0
    %3031 = vmatpush1.msra.mxu0 0.0
    %3032 = vmatprep.subr.mxu0 0.0
    %3033 = vmatpush1.msra.mxu0 0.0
    %3034 = vmatprep.subr.mxu0 0.0
    %3035 = vmatpush1.msra.mxu0 0.0
    %3036 = vmatprep.subr.mxu0 0.0
    %3037 = vmatpush1.msra.mxu0 0.0
    %3038 = vmatprep.subr.mxu0 0.0
    %3039 = vmatpush1.msra.mxu0 0.0
    %3040 = vmatprep.subr.mxu0 0.0
    %3041 = vmatpush1.msra.mxu0 0.0
    %3042 = vmatprep.subr.mxu0 0.0
    %3043 = vmatpush1.msra.mxu0 0.0
    %3044 = vmatprep.mubr.f32.mxu0 0.0
    %3045 = vmatmul.mubr.f32.gmra.mrb[0].mxu0 %v2978
    %v3046 = vpop.f32.mrb[0].mxu0
    %v3047 = vadd.f32 0.0, %v3046
    %v3048 = vpop.f32.mrb[0].mxu0
    %3049 = vdwg.mxu0
    %v3050 = vadd.f32 %v2057, %v3047
    %v3051 = vsub.f32 0.0, %v3050
    %v3052 = vmul.f32 %v3051, 1.442695
    %v3053 = vpow.pop %v3052
    %v3054 = vadd.f32 %v3053, 1.0
    %v3055 = vrcp.pop %v3054
    %v3056 = vmul.f32 1.0, %v3055
    %v3057 = vtanh.pop %v3050
    %v3059 = vrot.slane %v2959, 6
    %v3061 = vmul.f32 %v3056, %v3059
    %3063 = vrot.lane.b32.xlu0 %v3057, 64
    %v3064 = vpop.permute.xlu0 %3063
    %v3066 = vmul.f32 %v3056, %v3064
    %3068 = vrot.lane.b32.xlu0 %v3066, 32
    %v3069 = vpop.permute.xlu0 %3068
    %v3071 = vadd.f32 %v3061, %v3069
    %v3072 = vtanh.pop %v3071
    %3074 = vrot.lane.b32.xlu0 %v3072, 64
    %v3075 = vpop.permute.xlu0 %3074
    %v3077 = vmul.f32 %v3056, %v3075
    %3079 = vrot.lane.b32.xlu0 %v3077, 32
    %v3080 = vpop.permute.xlu0 %3079
    %3082 = vst.msk [vmem:[#allocation2 + $0x10] sm:$0x3] %vm1038, %v3080
    %s3083 = scalar_lea.vmem [#allocation3], 2
    %3084 = vst.msk [vmem:[%s3083] sm:$0x3] %vm1038, %v3080
    %3086 = vrot.lane.b32.xlu0 %v3071, 96
    %v3087 = vpop.permute.xlu0 %3086
    %s3089 = scalar_lea.vmem [#allocation5], 2
    %3090 = vst.msk [vmem:[%s3089] sm:$0x3] %vm1038, %v3087
    %v3091 = vld [vmem:[#allocation2] sm:$0xff]
    %v3092 = vld [vmem:[#allocation2 + $0x8] sm:$0xff]
    %v3093 = vld [vmem:[#allocation2 + $0x10] sm:$0xff]
    %v3094 = vld [vmem:[%s21] sm:$0x1]
    %v3095 = vld [vmem:[%s22] sm:$0x1]
    %v3096 = vsel %vm118, %v3091, 0.0
    %3097 = vadd.xlane.f32.xlu0 %v3096
    %v3098 = vpop.xlane.xlu0 %3097
    %v3099 = vsel %vm118, %v3092, 0.0
    %3100 = vadd.xlane.f32.xlu0 %v3099
    %v3101 = vpop.xlane.xlu0 %3100
    %v3102 = vsel %vm118, %v3093, 0.0
    %3103 = vadd.xlane.f32.xlu0 %v3102
    %v3104 = vpop.xlane.xlu0 %3103
    %v3105 = vrcp.pop 32.0
    %v3106 = vmul.f32 %v3098, %v3105
    %v3107 = vmul.f32 %v3101, %v3105
    %v3108 = vmul.f32 %v3104, %v3105
    %v3109 = vsub.f32 %v3091, %v3106
    %v3110 = vsub.f32 %v3092, %v3107
    %v3111 = vsub.f32 %v3093, %v3108
    %v3112 = vmul.f32 %v3109, %v3109
    %v3113 = vmul.f32 %v3110, %v3110
    %v3114 = vmul.f32 %v3111, %v3111
    %v3115 = vsel %vm118, %v3112, 0.0
    %3116 = vadd.xlane.f32.xlu0 %v3115
    %v3117 = vpop.xlane.xlu0 %3116
    %v3118 = vsel %vm118, %v3113, 0.0
    %3119 = vadd.xlane.f32.xlu0 %v3118
    %v3120 = vpop.xlane.xlu0 %3119
    %v3121 = vsel %vm118, %v3114, 0.0
    %3122 = vadd.xlane.f32.xlu0 %v3121
    %v3123 = vpop.xlane.xlu0 %3122
    %v3124 = vmul.f32 %v3117, %v3105
    %v3125 = vmul.f32 %v3120, %v3105
    %v3126 = vmul.f32 %v3123, %v3105
    %v3127 = vadd.f32 %v3124, 1e-05
    %v3128 = vadd.f32 %v3125, 1e-05
    %v3129 = vadd.f32 %v3126, 1e-05
    %v3130 = vrsqrt.pop %v3127
    %v3131 = vrsqrt.pop %v3128
    %v3132 = vrsqrt.pop %v3129
    %v3133 = vmul.f32 %v3109, %v3130
    %v3134 = vmul.f32 %v3110, %v3131
    %v3135 = vmul.f32 %v3111, %v3132
    %v3137 = vlaneseq
    %v3138 = vshrl.u32 %v3137, 7
    %v3139 = vsub.s32 0, %v3138
    %v3140 = vrot.slane %v3094, %v3139
    %v3142 = vmul.f32 %v3133, %v3140
    %v3143 = vmul.f32 %v3134, %v3140
    %v3144 = vmul.f32 %v3135, %v3140
    %v3146 = vlaneseq
    %v3147 = vshrl.u32 %v3146, 7
    %v3148 = vsub.s32 0, %v3147
    %v3149 = vrot.slane %v3095, %v3148
    %v3151 = vadd.f32 %v3142, %v3149
    %v3152 = vadd.f32 %v3143, %v3149
    %v3153 = vadd.f32 %v3144, %v3149
    %v3154 = vmul.f32 %v3151, 0.5
    %v3155 = vmul.f32 %v3152, 0.5
    %v3156 = vmul.f32 %v3153, 0.5
    %v3157 = vmul.f32 %v3151, 0.70710677
    %v3158 = vmul.f32 %v3152, 0.70710677
    %v3159 = vmul.f32 %v3153, 0.70710677
    %vm3160 = vcmp.ge.f32.partialorder %v3157, 0.0
    %vm3161 = vcmp.ge.f32.partialorder %v3158, 0.0
    %vm3162 = vcmp.ge.f32.partialorder %v3159, 0.0
    %v3163 = vsel %vm3160, 1.0, -1.0
    %v3164 = vsel %vm3161, 1.0, -1.0
    %v3165 = vsel %vm3162, 1.0, -1.0
    %v3166 = vand.u32 2147483647, %v3157
    %v3167 = vand.u32 2147483647, %v3158
    %v3168 = vand.u32 2147483647, %v3159
    %v3169 = vmul.f32 %v3166, 0.3275911
    %v3170 = vmul.f32 %v3167, 0.3275911
    %v3171 = vmul.f32 %v3168, 0.3275911
    %v3172 = vadd.f32 %v3169, 1.0
    %v3173 = vadd.f32 %v3170, 1.0
    %v3174 = vadd.f32 %v3171, 1.0
    %v3175 = vrcp.pop %v3172
    %v3176 = vmul.f32 1.0, %v3175
    %v3177 = vrcp.pop %v3173
    %v3178 = vmul.f32 1.0, %v3177
    %v3179 = vrcp.pop %v3174
    %v3180 = vmul.f32 1.0, %v3179
    %v3181 = vmul.f32 %v3176, 1.0614054
    %v3182 = vmul.f32 %v3178, 1.0614054
    %v3183 = vmul.f32 %v3180, 1.0614054
    %v3184 = vadd.f32 %v3181, -1.4531521
    %v3185 = vadd.f32 %v3182, -1.4531521
    %v3186 = vadd.f32 %v3183, -1.4531521
    %v3187 = vmul.f32 %v3184, %v3176
    %v3188 = vmul.f32 %v3185, %v3178
    %v3189 = vmul.f32 %v3186, %v3180
    %v3190 = vadd.f32 %v3187, 1.4214138
    %v3191 = vadd.f32 %v3188, 1.4214138
    %v3192 = vadd.f32 %v3189, 1.4214138
    %v3193 = vmul.f32 %v3190, %v3176
    %v3194 = vmul.f32 %v3191, %v3178
    %v3195 = vmul.f32 %v3192, %v3180
    %v3196 = vadd.f32 %v3193, -0.28449672
    %v3197 = vadd.f32 %v3194, -0.28449672
    %v3198 = vadd.f32 %v3195, -0.28449672
    %v3199 = vmul.f32 %v3196, %v3176
    %v3200 = vmul.f32 %v3197, %v3178
    %v3201 = vmul.f32 %v3198, %v3180
    %v3202 = vadd.f32 %v3199, 0.2548296
    %v3203 = vadd.f32 %v3200, 0.2548296
    %v3204 = vadd.f32 %v3201, 0.2548296
    %v3205 = vmul.f32 %v3202, %v3176
    %v3206 = vmul.f32 %v3203, %v3178
    %v3207 = vmul.f32 %v3204, %v3180
    %v3208 = vsub.f32 0.0, %v3166
    %v3209 = vsub.f32 0.0, %v3167
    %v3210 = vsub.f32 0.0, %v3168
    %v3211 = vmul.f32 %v3208, %v3166
    %v3212 = vmul.f32 %v3209, %v3167
    %v3213 = vmul.f32 %v3210, %v3168
    %v3214 = vmul.f32 %v3211, 1.442695
    %v3215 = vpow.pop %v3214
    %v3216 = vmul.f32 %v3212, 1.442695
    %v3217 = vpow.pop %v3216
    %v3218 = vmul.f32 %v3213, 1.442695
    %v3219 = vpow.pop %v3218
    %v3220 = vmul.f32 %v3205, %v3215
    %v3221 = vmul.f32 %v3206, %v3217
    %v3222 = vmul.f32 %v3207, %v3219
    %v3223 = vsub.f32 1.0, %v3220
    %v3224 = vsub.f32 1.0, %v3221
    %v3225 = vsub.f32 1.0, %v3222
    %v3226 = vmul.f32 %v3163, %v3223
    %v3227 = vmul.f32 %v3164, %v3224
    %v3228 = vmul.f32 %v3165, %v3225
    %v3229 = vadd.f32 %v3226, 1.0
    %v3230 = vadd.f32 %v3227, 1.0
    %v3231 = vadd.f32 %v3228, 1.0
    %v3232 = vmul.f32 %v3154, %v3229
    %v3233 = vmul.f32 %v3155, %v3230
    %v3234 = vmul.f32 %v3156, %v3231
    %v3235 = vld [vmem:[%s23] sm:$0xff]
    %v3236 = vld [vmem:[%s23 + $0x8] sm:$0xff]
    %v3237 = vld [vmem:[%s23 + $0x10] sm:$0xff]
    %v3238 = vld [vmem:[%s23 + $0x18] sm:$0xff]
    %v3239 = vld [vmem:[%s24] sm:$0x1]
    %v3241 = vlaneseq
    %v3242 = vshrl.u32 %v3241, 7
    %v3243 = vsub.s32 0, %v3242
    %v3244 = vrot.slane %v3239, %v3243
    %v3247 = vsel %vm118, %v3232, 0
    %v3250 = vsel %vm118, %v3233, 0
    %v3253 = vsel %vm118, %v3234, 0
    %3255 = vmatprep.subr.mxu0 0.0
    %3256 = vmatpush1.msra.mxu0 %v3235
    %3257 = vmatprep.subr.mxu0 0.0
    %3258 = vmatpush1.msra.mxu0 %v3236
    %3259 = vmatprep.subr.mxu0 0.0
    %3260 = vmatpush1.msra.mxu0 %v3237
    %3261 = vmatprep.subr.mxu0 0.0
    %3262 = vmatpush1.msra.mxu0 %v3238
    %3263 = vmatprep.subr.mxu0 0.0
    %3264 = vmatpush1.msra.mxu0 0.0
    %3265 = vmatprep.subr.mxu0 0.0
    %3266 = vmatpush1.msra.mxu0 0.0
    %3267 = vmatprep.subr.mxu0 0.0
    %3268 = vmatpush1.msra.mxu0 0.0
    %3269 = vmatprep.subr.mxu0 0.0
    %3270 = vmatpush1.msra.mxu0 0.0
    %3271 = vmatprep.subr.mxu0 0.0
    %3272 = vmatpush1.msra.mxu0 0.0
    %3273 = vmatprep.subr.mxu0 0.0
    %3274 = vmatpush1.msra.mxu0 0.0
    %3275 = vmatprep.subr.mxu0 0.0
    %3276 = vmatpush1.msra.mxu0 0.0
    %3277 = vmatprep.subr.mxu0 0.0
    %3278 = vmatpush1.msra.mxu0 0.0
    %3279 = vmatprep.subr.mxu0 0.0
    %3280 = vmatpush1.msra.mxu0 0.0
    %3281 = vmatprep.subr.mxu0 0.0
    %3282 = vmatpush1.msra.mxu0 0.0
    %3283 = vmatprep.subr.mxu0 0.0
    %3284 = vmatpush1.msra.mxu0 0.0
    %3285 = vmatprep.subr.mxu0 0.0
    %3286 = vmatpush1.msra.mxu0 0.0
    %3287 = vmatprep.subr.mxu0 0.0
    %3288 = vmatpush1.msra.mxu0 0.0
    %3289 = vmatprep.subr.mxu0 0.0
    %3290 = vmatpush1.msra.mxu0 0.0
    %3291 = vmatprep.subr.mxu0 0.0
    %3292 = vmatpush1.msra.mxu0 0.0
    %3293 = vmatprep.subr.mxu0 0.0
    %3294 = vmatpush1.msra.mxu0 0.0
    %3295 = vmatprep.subr.mxu0 0.0
    %3296 = vmatpush1.msra.mxu0 0.0
    %3297 = vmatprep.subr.mxu0 0.0
    %3298 = vmatpush1.msra.mxu0 0.0
    %3299 = vmatprep.subr.mxu0 0.0
    %3300 = vmatpush1.msra.mxu0 0.0
    %3301 = vmatprep.subr.mxu0 0.0
    %3302 = vmatpush1.msra.mxu0 0.0
    %3303 = vmatprep.subr.mxu0 0.0
    %3304 = vmatpush1.msra.mxu0 0.0
    %3305 = vmatprep.subr.mxu0 0.0
    %3306 = vmatpush1.msra.mxu0 0.0
    %3307 = vmatprep.subr.mxu0 0.0
    %3308 = vmatpush1.msra.mxu0 0.0
    %3309 = vmatprep.subr.mxu0 0.0
    %3310 = vmatpush1.msra.mxu0 0.0
    %3311 = vmatprep.subr.mxu0 0.0
    %3312 = vmatpush1.msra.mxu0 0.0
    %3313 = vmatprep.subr.mxu0 0.0
    %3314 = vmatpush1.msra.mxu0 0.0
    %3315 = vmatprep.subr.mxu0 0.0
    %3316 = vmatpush1.msra.mxu0 0.0
    %3317 = vmatprep.subr.mxu0 0.0
    %3318 = vmatpush1.msra.mxu0 0.0
    %3319 = vmatprep.mubr.f32.mxu0 0.0
    %3320 = vmatmul.mubr.f32.gmra.mrb[0].mxu0 %v3247
    %v3321 = vpop.f32.mrb[0].mxu0
    %v3322 = vadd.f32 %v3244, %v3321
    %v3323 = vpop.f32.mrb[0].mxu0
    %3324 = vmatprep.mubr.f32.mxu0 0.0
    %3325 = vmatmul.mubr.f32.gmra.mrb[0].mxu0 %v3250
    %v3326 = vpop.f32.mrb[0].mxu0
    %v3327 = vadd.f32 %v3244, %v3326
    %v3328 = vpop.f32.mrb[0].mxu0
    %3329 = vmatprep.mubr.f32.mxu0 0.0
    %3330 = vmatmul.mubr.f32.gmra.mrb[0].mxu0 %v3253
    %v3331 = vpop.f32.mrb[0].mxu0
    %v3332 = vadd.f32 %v3244, %v3331
    %v3333 = vpop.f32.mrb[0].mxu0
    %3334 = vdwg.mxu0
    %3335 = vst [vmem:[%s25] sm:$0xff] %v3322
    %3336 = vst [vmem:[%s25 + $0x8] sm:$0xff] %v3327
    %3337 = vst [vmem:[%s25 + $0x10] sm:$0xff] %v3332
    // Predicated region
    $region102: #{speech_recognition_forward.1} parent=1 // pred_check
      _
    $region103: #{speech_recognition_forward.1} parent=1 // pred_check_branch
      %3339 = sbr.rel (0) target = $region105
    $region104: #{speech_recognition_forward.1} parent=1 // pred_region
      _
    $region105: #{speech_recognition_forward.1} parent=1 // pred_fallthru
      _
    // Predicated region
    $region106: #{speech_recognition_forward.1} parent=1 // pred_check
      _
    $region107: #{speech_recognition_forward.1} parent=1 // pred_check_branch
      %3341 = sbr.rel (0) target = $region109
    $region108: #{speech_recognition_forward.1} parent=1 // pred_region
      %s3343 = ssub.s32 64, 64
      %3344 = vsyncadd [#allocation4], %s3343
      %s3345 = sshll.u32 [#allocation3], 4
      %s3346 = int_to_ptr.vmem [resolvable:$true] %s3345
      %3351 = dma.vmem_to_hbm [thread:$0]  %s3346, 64, %s26, [#allocation4], 32, 32, 2
    $region109: #{speech_recognition_forward.1} parent=1 // pred_fallthru
      _
    // Predicated region
    $region110: #{speech_recognition_forward.1} parent=1 // pred_check
      _
    $region111: #{speech_recognition_forward.1} parent=1 // pred_check_branch
      %3353 = sbr.rel (0) target = $region113
    $region112: #{speech_recognition_forward.1} parent=1 // pred_region
      %s3355 = ssub.s32 64, 64
      %3356 = vsyncadd [#allocation6], %s3355
      %s3357 = sshll.u32 [#allocation5], 4
      %s3358 = int_to_ptr.vmem [resolvable:$true] %s3357
      %3363 = dma.vmem_to_hbm [thread:$0]  %s3358, 64, %s27, [#allocation6], 32, 32, 2
    $region113: #{speech_recognition_forward.1} parent=1 // pred_fallthru
      _
    // Predicated region
    $region114: #{speech_recognition_forward.1} parent=1 // pred_check
      _
    $region115: #{speech_recognition_forward.1} parent=1 // pred_check_branch
      %3365 = sbr.rel (0) target = $region117
    $region116: #{speech_recognition_forward.1} parent=1 // pred_region
      _
    $region117: #{speech_recognition_forward.1} parent=1 // pred_fallthru
      _
    // Predicated region
    $region118: #{speech_recognition_forward.1} parent=1 // pred_check
      _
    $region119: #{speech_recognition_forward.1} parent=1 // pred_check_branch
      %3367 = sbr.rel (0) target = $region121
    $region120: #{speech_recognition_forward.1} parent=1 // pred_region
      %3368 = dma.done [#allocation4], 64
    $region121: #{speech_recognition_forward.1} parent=1 // pred_fallthru
      _
    // Predicated region
    $region122: #{speech_recognition_forward.1} parent=1 // pred_check
      _
    $region123: #{speech_recognition_forward.1} parent=1 // pred_check_branch
      %3370 = sbr.rel (0) target = $region125
    $region124: #{speech_recognition_forward.1} parent=1 // pred_region
      %3371 = dma.done [#allocation6], 64
    $region125: #{speech_recognition_forward.1} parent=1 // pred_fallthru
      _
    %3372 = vsyncpa [#allocation4], 1
    %3373 = vsyncpa [#allocation6], 1

</llo_original>
